<compile_context>
chip_gen: v5e
topology: v5e:2x2
jax: 0.10.0
libtpu: 0.0.40
codegen_flags: <defaults>
</compile_context>

<pallas_src>
import numpy as np
import jax
import jax.numpy as jnp
from jax.experimental import pallas as pl
from jax.experimental.pallas import tpu as pltpu


# ----------------------------- hardware heuristics --------------------------- #

def _hw_config():
    """Best-effort TPU-generation detection (safe fallbacks if the query fails)."""
    tn_max, num_tc = 256, 1
    try:
        kind = jax.devices()[0].device_kind.lower()
        if "v5e" in kind or "v5 lite" in kind or "v5lite" in kind:
            tn_max = 128            # v5e MXU is 128 wide -> native Cout tile
        if "v7" in kind or "tpu7" in kind:
            num_tc = 2              # keep >= 2 "parallel" grid steps for the dual TensorCore
    except Exception:
        pass
    return {"tn_max": tn_max, "num_tc": num_tc}


def _images_per_step(N, Ho, Wo, num_tc):
    """Images per grid step: fill the MXU M dimension; keep >= num_tc steps on v7x."""
    nb = N
    if num_tc > 1 and N >= num_tc:
        nb = max(1, N // num_tc)
    while nb > 1 and nb * Ho * Wo > 2048:    # VMEM headroom when scaling to real WRN widths
        nb -= 1
    while N % nb:
        nb -= 1
    return nb


# --------------------------- BN folding / phase split ------------------------ #

def _fold_bn(gamma, beta, mean, var, eps=1e-5):
    scale = gamma / jnp.sqrt(var + eps)
    return scale, beta - mean * scale


def _phase_split(x, stride):
    """(N,H,W,C) -> (N,P,Hs,Ws,C); P=1 for stride 1 (pure reshape), P=4 (2x2 phases) for stride 2."""
    N, H, W, C = x.shape
    if stride == 1:
        return x.reshape(N, 1, H, W, C)
    assert stride == 2 and H % 2 == 0 and W % 2 == 0, "stride-2 conv needs even spatial dims"
    xph = x.reshape(N, H // 2, 2, W // 2, 2, C).transpose(0, 2, 4, 1, 3, 5)
    return xph.reshape(N, 4, H // 2, W // 2, C)      # phase p = 2*(row parity) + (col parity)


def _tap_axis(d, stride, n_out):
    """Static copy geometry along one spatial axis for 3x3 tap offset d in {0,1,2}.

    Returns (src_parity, out_lo, out_hi, src_lo, src_hi): output positions [out_lo, out_hi)
    read source phase-`parity` positions [src_lo, src_hi); everything else stays zero (pad).
    """
    if stride == 1:                             # input position = out + d - 1
        o0 = 1 if d == 0 else 0
        o1 = n_out - 1 if d == 2 else n_out
        s0 = o0 + d - 1
        return 0, o0, o1, s0, s0 + (o1 - o0)
    # stride == 2 (phase-decomposed input): input position = 2*out + d - 1
    if d == 0:
        return 1, 1, n_out, 0, n_out - 1
    if d == 1:
        return 0, 0, n_out, 0, n_out
    return 1, 0, n_out, 0, n_out


# ------------------- fused 3x3 conv (single K = 9*Cin MXU matmul) ------------ #

def _make_conv_kernel(*, stride, NB, P, Hs, Ws, Cin, bn_prologue, epilogue, sc_bn, Csc):
    Ho, Wo = Hs, Ws
    M = NB * Ho * Wo
    K = 9 * Cin

    def fill_cols(cols_ref, phases):
        # Zero fill == the conv's zero-padding contribution; interior taps overwrite it.
        cols_ref[...] = jnp.zeros((NB, Ho, Wo, K), cols_ref.dtype)
        t = 0
        for dh in range(3):
            pa, oh0, oh1, sh0, sh1 = _tap_axis(dh, stride, Ho)
            for dw in range(3):
                pb, ow0, ow1, sw0, sw1 = _tap_axis(dw, stride, Wo)
                sp = pa * 2 + pb if stride == 2 else 0
                cols_ref[:, oh0:oh1, ow0:ow1, t * Cin:(t + 1) * Cin] = \
                    phases[sp][:, sh0:sh1, sw0:sw1, :]
                t += 1

    def kernel(*refs):
        refs = list(refs)
        cols_ref = refs.pop()                    # scratch: (NB, Ho, Wo, 9*Cin) bf16 im2col
        o_ref = refs.pop()                       # output : (NB, Ho, Wo, TN)
        it = iter(refs)
        x_ref = next(it)                         # (NB, P, Hs, Ws, Cin)
        w_ref = next(it)                         # (9*Cin, TN) bf16
        s1_ref = b1_ref = None
        if bn_prologue:
            s1_ref, b1_ref = next(it), next(it)  # (1, Cin) f32

        xv = x_ref[...]
        phases = []
        for p in range(P):
            v = xv[:, p]                                                   # (NB, Hs, Ws, Cin)
            if bn_prologue:
                v = jnp.maximum(v.astype(jnp.float32) * s1_ref[...] + b1_ref[...], 0.0)
            phases.append(v.astype(cols_ref.dtype))
        fill_cols(cols_ref, phases)

        # Whole 3x3 conv for this (image-group, Cout-tile): ONE MXU matmul, K = 9*Cin.
        acc = jnp.dot(cols_ref[...].reshape(M, K), w_ref[...],
                      preferred_element_type=jnp.float32)                  # (M, TN) f32

        if epilogue == "bn_relu":
            s2_ref, b2_ref = next(it), next(it)                            # (1, TN) f32
            y = jnp.maximum(acc * s2_ref[...] + b2_ref[...], 0.0)
        elif epilogue == "add_res":
            res_ref = next(it)                                             # (NB, Ho, Wo, TN)
            y = acc + res_ref[...].reshape(acc.shape).astype(jnp.float32)
        elif epilogue == "add_conv":
            sc_ref = next(it)                                              # (NB, 1, Ho, Wo, Csc)
            sc = sc_ref[...].reshape(M, Csc)
            if sc_bn:
                ss_ref, sb_ref = next(it), next(it)                        # (1, Csc) f32
                sc = jnp.maximum(sc.astype(jnp.float32) * ss_ref[...] + sb_ref[...], 0.0)
            scw_ref = next(it)                                             # (Csc, TN) bf16
            y = acc + jnp.dot(sc.astype(jnp.bfloat16), scw_ref[...],
                              preferred_element_type=jnp.float32)
        else:
            raise ValueError(epilogue)

        o_ref[...] = y.reshape(o_ref.shape).astype(o_ref.dtype)

    return kernel


def conv3x3_fused(x5, w_hwio, stride, *, prologue=None, epilogue, epilogue_args=(),
                  out_dtype=jnp.bfloat16, hw=None):
    """3x3 conv (padding=1, bias-free) with fused prologue/epilogue.

    x5        : (N, P, Hs, Ws, Cin); P=1 for stride 1, P=4 for stride 2 (phase-decomposed).
    prologue  : optional (scale, bias)  ->  x <- relu(x*scale + bias)   [bn1 + relu]
    epilogue  :
      'bn_relu'  (scale2, bias2)            out = relu(conv*scale2 + bias2)
      'add_res'  (residual,)                out = conv + residual
      'add_conv' (sc5, sc_bn, shortcut_w)   out = conv + [bn_relu?](sc5 phase 0) @ shortcut_w
    """
    hw = hw or _hw_config()
    N, P, Hs, Ws, Cin = (int(d) for d in x5.shape)
    Cout = int(w_hwio.shape[-1])
    Ho, Wo = Hs, Ws
    assert (stride == 1 and P == 1) or (stride == 2 and P == 4)

    NB = _images_per_step(N, Ho, Wo, hw["num_tc"])
    TN = min(Cout, hw["tn_max"])
    grid = (N // NB, pl.cdiv(Cout, TN))

    w_k = jnp.asarray(w_hwio).reshape(9 * Cin, Cout).astype(jnp.bfloat16)
    operands = [x5, w_k]
    in_specs = [pl.BlockSpec((NB, P, Hs, Ws, Cin), lambda n, j: (n, 0, 0, 0, 0)),
                pl.BlockSpec((9 * Cin, TN), lambda n, j: (0, j))]

    if prologue is not None:
        s1, b1 = prologue
        operands += [jnp.asarray(s1, jnp.float32).reshape(1, Cin),
                     jnp.asarray(b1, jnp.float32).reshape(1, Cin)]
        in_specs += [pl.BlockSpec((1, Cin), lambda n, j: (0, 0)),
                     pl.BlockSpec((1, Cin), lambda n, j: (0, 0))]

    sc_bn_flag, Csc, extra_flops = False, None, 0
    if epilogue == "bn_relu":
        s2, b2 = epilogue_args
        operands += [jnp.asarray(s2, jnp.float32).reshape(1, Cout),
                     jnp.asarray(b2, jnp.float32).reshape(1, Cout)]
        in_specs += [pl.BlockSpec((1, TN), lambda n, j: (0, j)),
                     pl.BlockSpec((1, TN), lambda n, j: (0, j))]
    elif epilogue == "add_res":
        (res,) = epilogue_args
        operands += [res]
        in_specs += [pl.BlockSpec((NB, Ho, Wo, TN), lambda n, j: (n, 0, 0, j))]
        extra_flops = N * Ho * Wo * Cout
    elif epilogue == "add_conv":
        sc5, sc_bn, scw = epilogue_args
        Csc = int(sc5.shape[-1])
        operands += [sc5]
        # Phase (0,0) of the phase-decomposed input == x[:, ::stride, ::stride, :]; selected
        # purely by the BlockSpec, no XLA-side gather / strided slice materialization.
        in_specs += [pl.BlockSpec((NB, 1, Ho, Wo, Csc), lambda n, j: (n, 0, 0, 0, 0))]
        if sc_bn is not None:
            sc_bn_flag = True
            ss, sb = sc_bn
            operands += [jnp.asarray(ss, jnp.float32).reshape(1, Csc),
                         jnp.asarray(sb, jnp.float32).reshape(1, Csc)]
            in_specs += [pl.BlockSpec((1, Csc), lambda n, j: (0, 0)),
                         pl.BlockSpec((1, Csc), lambda n, j: (0, 0))]
        operands += [jnp.asarray(scw).reshape(Csc, Cout).astype(jnp.bfloat16)]
        in_specs += [pl.BlockSpec((Csc, TN), lambda n, j: (0, j))]
        extra_flops = N * Ho * Wo * (2 * Csc + 1) * Cout
    else:
        raise ValueError(epilogue)

    kernel = _make_conv_kernel(stride=stride, NB=NB, P=P, Hs=Hs, Ws=Ws, Cin=Cin,
                               bn_prologue=prologue is not None, epilogue=epilogue,
                               sc_bn=sc_bn_flag, Csc=Csc)

    n_ct = pl.cdiv(Cout, TN)
    flops = 2 * N * Ho * Wo * 9 * Cin * Cout + extra_flops
    bytes_accessed = int(np.prod(x5.shape)) * np.dtype(x5.dtype).itemsize * n_ct
    for o in operands[1:]:
        bytes_accessed += int(np.prod(o.shape)) * np.dtype(o.dtype).itemsize
    bytes_accessed += N * Ho * Wo * Cout * np.dtype(out_dtype).itemsize

    # NOTE: at real WRN widths (Cin/Cout up to 640) also pass vmem_limit_bytes via
    # pltpu.CompilerParams and re-derive NB/TN for v7x's smaller (64 MiB) VMEM.
    return pl.pallas_call(
        kernel,
        out_shape=jax.ShapeDtypeStruct((N, Ho, Wo, Cout), out_dtype),
        grid=grid,
        in_specs=in_specs,
        out_specs=pl.BlockSpec((NB, Ho, Wo, TN), lambda n, j: (n, 0, 0, j)),
        scratch_shapes=[pltpu.VMEM((NB, Ho, Wo, 9 * Cin), jnp.bfloat16)],
        compiler_params=pltpu.CompilerParams(
            dimension_semantics=("parallel", "parallel")),
        cost_estimate=pl.CostEstimate(flops=int(flops), transcendentals=0,
                                      bytes_accessed=int(bytes_accessed)),
    )(*operands)


# ------------------------------ BasicBlock / NetworkBlock -------------------- #

def basic_block_forward(x, p, stride, equal_in_out, *, out_dtype, hw):
    """One WideResNet BasicBlock == two fused Pallas kernels."""
    Cout = int(p['conv1_w'].shape[-1])
    s1, b1 = _fold_bn(p['bn1_gamma'], p['bn1_beta'], p['bn1_mean'], p['bn1_var'])
    s2, b2 = _fold_bn(p['bn2_gamma'], p['bn2_beta'], p['bn2_mean'], p['bn2_var'])

    x5 = _phase_split(x, stride)
    # kernel A: bn1+relu (prologue) -> conv1 (stride) -> bn2+relu (epilogue); bf16 out.
    out1 = conv3x3_fused(x5, p['conv1_w'], stride,
                         prologue=(s1, b1),
                         epilogue="bn_relu", epilogue_args=(s2, b2),
                         out_dtype=jnp.bfloat16, hw=hw)
    # TODO(synk): F.dropout skipped — drop_rate=0.0 / eval-mode semantics make it identity.

    N2, Ho, Wo, _ = out1.shape
    out1_5 = out1.reshape(N2, 1, Ho, Wo, Cout)

    # kernel B: conv2 (stride 1) -> + shortcut.
    if p['shortcut_w'] is None:
        out = conv3x3_fused(out1_5, p['conv2_w'], 1,
                            epilogue="add_res", epilogue_args=(x,),
                            out_dtype=out_dtype, hw=hw)
    else:
        # Shortcut source: original x (equalInOut) or relu(bn1(x)) (not equalInOut); for
        # stride 2 the kernel reads phase (0,0) of the already phase-decomposed x5.
        sc_bn = None if equal_in_out else (s1, b1)
        out = conv3x3_fused(out1_5, p['conv2_w'], 1,
                            epilogue="add_conv",
                            epilogue_args=(x5, sc_bn, p['shortcut_w']),
                            out_dtype=out_dtype, hw=hw)
    return out


def network_block_forward(x_nchw, layers):
    """NetworkBlock forward. Public layout: NCHW (PyTorch); internal: NHWC."""
    hw = _hw_config()
    x = jnp.transpose(x_nchw, (0, 2, 3, 1)).astype(jnp.float32)
    last = len(layers) - 1
    for i, (p, ip, op, s) in enumerate(layers):
        # bf16 residual stream between blocks (halves HBM traffic); last block stores f32.
        out_dtype = jnp.float32 if i == last else jnp.bfloat16
        x = basic_block_forward(x, p, s, equal_in_out=(ip == op),
                                out_dtype=out_dtype, hw=hw)
    return jnp.transpose(x, (0, 3, 1, 2))


# ---------------------------- Parameter init -------------------------------- #

def init_basic_block(key, in_planes, out_planes, stride):
    keys = jax.random.split(key, 11)
    equal_in_out = (in_planes == out_planes)
    has_shortcut = (not equal_in_out) or (stride == 2)
    p = {
        'bn1_gamma': jax.random.uniform(keys[0], (in_planes,), minval=0.5, maxval=1.5),
        'bn1_beta':  jax.random.normal(keys[1], (in_planes,)) * 0.1,
        'bn1_mean':  jax.random.normal(keys[2], (in_planes,)) * 0.1,
        'bn1_var':   jax.random.uniform(keys[3], (in_planes,), minval=0.5, maxval=1.5),
        'conv1_w':   jax.random.normal(keys[4], (3, 3, in_planes, out_planes))
                     * jnp.sqrt(2.0 / (9.0 * out_planes)),
        'bn2_gamma': jax.random.uniform(keys[5], (out_planes,), minval=0.5, maxval=1.5),
        'bn2_beta':  jax.random.normal(keys[6], (out_planes,)) * 0.1,
        'bn2_mean':  jax.random.normal(keys[7], (out_planes,)) * 0.1,
        'bn2_var':   jax.random.uniform(keys[8], (out_planes,), minval=0.5, maxval=1.5),
        'conv2_w':   jax.random.normal(keys[9], (3, 3, out_planes, out_planes))
                     * jnp.sqrt(2.0 / (9.0 * out_planes)),
        'shortcut_w': (jax.random.normal(keys[10], (in_planes, out_planes))
                       * jnp.sqrt(2.0 / out_planes)) if has_shortcut else None,
    }
    return {k: (v.astype(jnp.float32) if v is not None else None) for k, v in p.items()}


def init_network_block(key, nb_layers, in_planes, out_planes, stride):
    layers = []
    keys = jax.random.split(key, nb_layers)
    for i in range(nb_layers):
        ip = in_planes if i == 0 else out_planes
        s = stride if i == 0 else 1
        layers.append((init_basic_block(keys[i], ip, out_planes, s), ip, out_planes, s))
    return layers


# --------------------------- Pure-JAX reference ------------------------------ #
# Mirrors the kernel path's bf16-operand / f32-accumulate / bf16-residual-store points so
# the comparison validates kernel structure tightly.

def _ref_conv(x, w, stride, pad):
    return jax.lax.conv_general_dilated(
        x, w, (stride, stride), [(pad, pad), (pad, pad)],
        dimension_numbers=('NHWC', 'HWIO', 'NHWC'),
        preferred_element_type=jnp.float32)


def ref_network_block(x_nchw, layers):
    x = jnp.transpose(x_nchw, (0, 2, 3, 1)).astype(jnp.float32)
    last = len(layers) - 1
    for i, (p, ip, op, s) in enumerate(layers):
        equal = ip == op
        s1, b1 = _fold_bn(p['bn1_gamma'], p['bn1_beta'], p['bn1_mean'], p['bn1_var'])
        s2, b2 = _fold_bn(p['bn2_gamma'], p['bn2_beta'], p['bn2_mean'], p['bn2_var'])
        act = jnp.maximum(x.astype(jnp.float32) * s1 + b1, 0.0)
        h = _ref_conv(act.astype(jnp.bfloat16), p['conv1_w'].astype(jnp.bfloat16), s, 1)
        h = jnp.maximum(h * s2 + b2, 0.0).astype(jnp.bfloat16)            # == out1 store
        h = _ref_conv(h, p['conv2_w'].astype(jnp.bfloat16), 1, 1)
        if p['shortcut_w'] is None:
            res = x.astype(jnp.float32)
        else:
            ci, co = p['shortcut_w'].shape
            sc_in = (x if equal else act).astype(jnp.bfloat16)
            res = _ref_conv(sc_in, p['shortcut_w'].reshape(1, 1, ci, co).astype(jnp.bfloat16),
                            s, 0)
        y = h + res
        x = y.astype(jnp.float32) if i == last else y.astype(jnp.bfloat16)
    return jnp.transpose(x, (0, 3, 1, 2))


# ---------------------------------- Main ------------------------------------- #

if __name__ == "__main__":
    key = jax.random.PRNGKey(0)
    kx, kp = jax.random.split(key)

    # NetworkBlock(nb_layers=2, in_planes=4, out_planes=8, stride=2)
    x = jax.random.normal(kx, (2, 4, 16, 16), jnp.float32)   # NCHW, like PyTorch
    layers = init_network_block(kp, nb_layers=2, in_planes=4, out_planes=8, stride=2)

    fwd = jax.jit(lambda inp: network_block_forward(inp, layers))
    out = jax.block_until_ready(fwd(x))
    assert out.shape == (2, 8, 8, 8), out.shape

    ref = jax.block_until_ready(ref_network_block(x, layers))
    # Tolerance covers the bf16 residual / out1 storage points (1 bf16 ulp ~ 0.8% relative)
    # combined with slightly different f32 accumulation order vs lax.conv.
    np.testing.assert_allclose(np.asarray(out), np.asarray(ref), rtol=1e-2, atol=1e-2)

    print("KERNEL_OK")
</pallas_src>

<mosaic_0001>
module attributes {stable_mosaic.version = 11 : i64} {
  func.func @kernel(%arg0: i32, %arg1: i32, %arg2: memref<2x1x8x8x8xbf16, #tpu.memory_space<vmem>>, %arg3: memref<72x8xbf16, #tpu.memory_space<vmem>>, %arg4: memref<2x1x8x8x4xf32, #tpu.memory_space<vmem>>, %arg5: memref<1x4xf32, #tpu.memory_space<vmem>>, %arg6: memref<1x4xf32, #tpu.memory_space<vmem>>, %arg7: memref<4x8xbf16, #tpu.memory_space<vmem>>, %arg8: memref<2x8x8x8xbf16, #tpu.memory_space<vmem>>, %arg9: memref<2x8x8x72xbf16, #tpu.memory_space<vmem>>) attributes {dimension_semantics = [#tpu.dimension_semantics<parallel>, #tpu.dimension_semantics<parallel>], iteration_bounds = array<i64: 1, 1>, scalar_prefetch = 0 : i64, scratch_operands = 1 : i64, tpu.core_type = #tpu.core_type<tc>, window_params = [{transform_indices = @transform_0, window_bounds = array<i64: 2, 1, 8, 8, 8>}, {transform_indices = @transform_1, window_bounds = array<i64: 72, 8>}, {transform_indices = @transform_2, window_bounds = array<i64: 2, 1, 8, 8, 4>}, {pipeline_mode = #tpu.pipeline_mode<synchronous>, transform_indices = @transform_3, window_bounds = array<i64: 1, 4>}, {pipeline_mode = #tpu.pipeline_mode<synchronous>, transform_indices = @transform_4, window_bounds = array<i64: 1, 4>}, {transform_indices = @transform_5, window_bounds = array<i64: 4, 8>}, {transform_indices = @transform_6, window_bounds = array<i64: 2, 8, 8, 8>}]} {
    %c0 = arith.constant 0 : index
    %c0_0 = arith.constant 0 : index
    %c0_1 = arith.constant 0 : index
    %c0_2 = arith.constant 0 : index
    %c0_3 = arith.constant 0 : index
    %0 = vector.load %arg2[%c0, %c0_0, %c0_1, %c0_2, %c0_3] : memref<2x1x8x8x8xbf16, #tpu.memory_space<vmem>>, vector<2x1x8x8x8xbf16>
    %1 = vector.shape_cast %0 : vector<2x1x8x8x8xbf16> to vector<2x8x8x8xbf16>
    %cst = arith.constant 0.000000e+00 : bf16
    %2 = vector.broadcast %cst : bf16 to vector<2x8x8x72xbf16>
    %c0_4 = arith.constant 0 : index
    %c0_5 = arith.constant 0 : index
    %c0_6 = arith.constant 0 : index
    %c0_7 = arith.constant 0 : index
    %3 = vector.load %arg9[%c0_4, %c0_5, %c0_6, %c0_7] : memref<2x8x8x72xbf16, #tpu.memory_space<vmem>>, vector<2x8x8x72xbf16>
    tpu.vector_store %arg9[%c0_4, %c0_5, %c0_6, %c0_7], %2 {strides = array<i32>} : memref<2x8x8x72xbf16, #tpu.memory_space<vmem>>, vector<2x8x8x72xbf16>,
    %4 = vector.extract_strided_slice %1 {offsets = [0, 0, 0, 0], sizes = [2, 7, 7, 8], strides = [1, 1, 1, 1]} : vector<2x8x8x8xbf16> to vector<2x7x7x8xbf16>
    %c0_8 = arith.constant 0 : index
    %c1 = arith.constant 1 : index
    %c1_9 = arith.constant 1 : index
    %c0_10 = arith.constant 0 : index
    %5 = vector.load %arg9[%c0_8, %c1, %c1_9, %c0_10] : memref<2x8x8x72xbf16, #tpu.memory_space<vmem>>, vector<2x7x7x8xbf16>
    tpu.vector_store %arg9[%c0_8, %c1, %c1_9, %c0_10], %4 {strides = array<i32>} : memref<2x8x8x72xbf16, #tpu.memory_space<vmem>>, vector<2x7x7x8xbf16>,
    %6 = vector.extract_strided_slice %1 {offsets = [0, 0, 0, 0], sizes = [2, 7, 8, 8], strides = [1, 1, 1, 1]} : vector<2x8x8x8xbf16> to vector<2x7x8x8xbf16>
    %c0_11 = arith.constant 0 : index
    %c1_12 = arith.constant 1 : index
    %c0_13 = arith.constant 0 : index
    %c8 = arith.constant 8 : index
    %7 = vector.load %arg9[%c0_11, %c1_12, %c0_13, %c8] : memref<2x8x8x72xbf16, #tpu.memory_space<vmem>>, vector<2x7x8x8xbf16>
    tpu.vector_store %arg9[%c0_11, %c1_12, %c0_13, %c8], %6 {strides = array<i32>} : memref<2x8x8x72xbf16, #tpu.memory_space<vmem>>, vector<2x7x8x8xbf16>,
    %8 = vector.extract_strided_slice %1 {offsets = [0, 0, 1, 0], sizes = [2, 7, 7, 8], strides = [1, 1, 1, 1]} : vector<2x8x8x8xbf16> to vector<2x7x7x8xbf16>
    %c0_14 = arith.constant 0 : index
    %c1_15 = arith.constant 1 : index
    %c0_16 = arith.constant 0 : index
    %c16 = arith.constant 16 : index
    %9 = vector.load %arg9[%c0_14, %c1_15, %c0_16, %c16] : memref<2x8x8x72xbf16, #tpu.memory_space<vmem>>, vector<2x7x7x8xbf16>
    tpu.vector_store %arg9[%c0_14, %c1_15, %c0_16, %c16], %8 {strides = array<i32>} : memref<2x8x8x72xbf16, #tpu.memory_space<vmem>>, vector<2x7x7x8xbf16>,
    %10 = vector.extract_strided_slice %1 {offsets = [0, 0, 0, 0], sizes = [2, 8, 7, 8], strides = [1, 1, 1, 1]} : vector<2x8x8x8xbf16> to vector<2x8x7x8xbf16>
    %c0_17 = arith.constant 0 : index
    %c0_18 = arith.constant 0 : index
    %c1_19 = arith.constant 1 : index
    %c24 = arith.constant 24 : index
    %11 = vector.load %arg9[%c0_17, %c0_18, %c1_19, %c24] : memref<2x8x8x72xbf16, #tpu.memory_space<vmem>>, vector<2x8x7x8xbf16>
    tpu.vector_store %arg9[%c0_17, %c0_18, %c1_19, %c24], %10 {strides = array<i32>} : memref<2x8x8x72xbf16, #tpu.memory_space<vmem>>, vector<2x8x7x8xbf16>,
    %c0_20 = arith.constant 0 : index
    %c0_21 = arith.constant 0 : index
    %c0_22 = arith.constant 0 : index
    %c32 = arith.constant 32 : index
    %12 = vector.load %arg9[%c0_20, %c0_21, %c0_22, %c32] : memref<2x8x8x72xbf16, #tpu.memory_space<vmem>>, vector<2x8x8x8xbf16>
    tpu.vector_store %arg9[%c0_20, %c0_21, %c0_22, %c32], %1 {strides = array<i32>} : memref<2x8x8x72xbf16, #tpu.memory_space<vmem>>, vector<2x8x8x8xbf16>,
    %13 = vector.extract_strided_slice %1 {offsets = [0, 0, 1, 0], sizes = [2, 8, 7, 8], strides = [1, 1, 1, 1]} : vector<2x8x8x8xbf16> to vector<2x8x7x8xbf16>
    %c0_23 = arith.constant 0 : index
    %c0_24 = arith.constant 0 : index
    %c0_25 = arith.constant 0 : index
    %c40 = arith.constant 40 : index
    %14 = vector.load %arg9[%c0_23, %c0_24, %c0_25, %c40] : memref<2x8x8x72xbf16, #tpu.memory_space<vmem>>, vector<2x8x7x8xbf16>
    tpu.vector_store %arg9[%c0_23, %c0_24, %c0_25, %c40], %13 {strides = array<i32>} : memref<2x8x8x72xbf16, #tpu.memory_space<vmem>>, vector<2x8x7x8xbf16>,
    %15 = vector.extract_strided_slice %1 {offsets = [0, 1, 0, 0], sizes = [2, 7, 7, 8], strides = [1, 1, 1, 1]} : vector<2x8x8x8xbf16> to vector<2x7x7x8xbf16>
    %c0_26 = arith.constant 0 : index
    %c0_27 = arith.constant 0 : index
    %c1_28 = arith.constant 1 : index
    %c48 = arith.constant 48 : index
    %16 = vector.load %arg9[%c0_26, %c0_27, %c1_28, %c48] : memref<2x8x8x72xbf16, #tpu.memory_space<vmem>>, vector<2x7x7x8xbf16>
    tpu.vector_store %arg9[%c0_26, %c0_27, %c1_28, %c48], %15 {strides = array<i32>} : memref<2x8x8x72xbf16, #tpu.memory_space<vmem>>, vector<2x7x7x8xbf16>,
    %17 = vector.extract_strided_slice %1 {offsets = [0, 1, 0, 0], sizes = [2, 7, 8, 8], strides = [1, 1, 1, 1]} : vector<2x8x8x8xbf16> to vector<2x7x8x8xbf16>
    %c0_29 = arith.constant 0 : index
    %c0_30 = arith.constant 0 : index
    %c0_31 = arith.constant 0 : index
    %c56 = arith.constant 56 : index
    %18 = vector.load %arg9[%c0_29, %c0_30, %c0_31, %c56] : memref<2x8x8x72xbf16, #tpu.memory_space<vmem>>, vector<2x7x8x8xbf16>
    tpu.vector_store %arg9[%c0_29, %c0_30, %c0_31, %c56], %17 {strides = array<i32>} : memref<2x8x8x72xbf16, #tpu.memory_space<vmem>>, vector<2x7x8x8xbf16>,
    %19 = vector.extract_strided_slice %1 {offsets = [0, 1, 1, 0], sizes = [2, 7, 7, 8], strides = [1, 1, 1, 1]} : vector<2x8x8x8xbf16> to vector<2x7x7x8xbf16>
    %c0_32 = arith.constant 0 : index
    %c0_33 = arith.constant 0 : index
    %c0_34 = arith.constant 0 : index
    %c64 = arith.constant 64 : index
    %20 = vector.load %arg9[%c0_32, %c0_33, %c0_34, %c64] : memref<2x8x8x72xbf16, #tpu.memory_space<vmem>>, vector<2x7x7x8xbf16>
    tpu.vector_store %arg9[%c0_32, %c0_33, %c0_34, %c64], %19 {strides = array<i32>} : memref<2x8x8x72xbf16, #tpu.memory_space<vmem>>, vector<2x7x7x8xbf16>,
    %c0_35 = arith.constant 0 : index
    %c0_36 = arith.constant 0 : index
    %c0_37 = arith.constant 0 : index
    %c0_38 = arith.constant 0 : index
    %21 = vector.load %arg9[%c0_35, %c0_36, %c0_37, %c0_38] : memref<2x8x8x72xbf16, #tpu.memory_space<vmem>>, vector<2x8x8x72xbf16>
    %22 = vector.shape_cast %21 : vector<2x8x8x72xbf16> to vector<128x72xbf16>
    %c0_39 = arith.constant 0 : index
    %c0_40 = arith.constant 0 : index
    %23 = vector.load %arg3[%c0_39, %c0_40] : memref<72x8xbf16, #tpu.memory_space<vmem>>, vector<72x8xbf16>
    %cst_41 = arith.constant dense<0.000000e+00> : vector<128x8xf32>
    %24 = tpu.matmul %22, %23, %cst_41 {dimension_numbers = #tpu.dot_dimension_numbers<[1], [0], [0], [1], [0, 0, 1, 1], [], []>} : vector<128x72xbf16>, vector<72x8xbf16>, vector<128x8xf32> -> vector<128x8xf32>
    %c0_42 = arith.constant 0 : index
    %c0_43 = arith.constant 0 : index
    %c0_44 = arith.constant 0 : index
    %c0_45 = arith.constant 0 : index
    %c0_46 = arith.constant 0 : index
    %25 = vector.load %arg4[%c0_42, %c0_43, %c0_44, %c0_45, %c0_46] : memref<2x1x8x8x4xf32, #tpu.memory_space<vmem>>, vector<2x1x8x8x4xf32>
    %26 = vector.shape_cast %25 : vector<2x1x8x8x4xf32> to vector<128x4xf32>
    %c0_47 = arith.constant 0 : index
    %c0_48 = arith.constant 0 : index
    %27 = vector.load %arg5[%c0_47, %c0_48] : memref<1x4xf32, #tpu.memory_space<vmem>>, vector<1x4xf32>
    %28 = vector.broadcast %27 : vector<1x4xf32> to vector<128x4xf32>
    %29 = arith.mulf %26, %28 : vector<128x4xf32>
    %c0_49 = arith.constant 0 : index
    %c0_50 = arith.constant 0 : index
    %30 = vector.load %arg6[%c0_49, %c0_50] : memref<1x4xf32, #tpu.memory_space<vmem>>, vector<1x4xf32>
    %31 = vector.broadcast %30 : vector<1x4xf32> to vector<128x4xf32>
    %32 = arith.addf %29, %31 : vector<128x4xf32>
    %cst_51 = arith.constant 0.000000e+00 : f32
    %33 = vector.broadcast %cst_51 : f32 to vector<128x4xf32>
    %34 = arith.maximumf %32, %33 : vector<128x4xf32>
    %35 = arith.truncf %34 : vector<128x4xf32> to vector<128x4xbf16>
    %c0_52 = arith.constant 0 : index
    %c0_53 = arith.constant 0 : index
    %36 = vector.load %arg7[%c0_52, %c0_53] : memref<4x8xbf16, #tpu.memory_space<vmem>>, vector<4x8xbf16>
    %cst_54 = arith.constant dense<0.000000e+00> : vector<128x8xf32>
    %37 = tpu.matmul %35, %36, %cst_54 {dimension_numbers = #tpu.dot_dimension_numbers<[1], [0], [0], [1], [0, 0, 1, 1], [], []>} : vector<128x4xbf16>, vector<4x8xbf16>, vector<128x8xf32> -> vector<128x8xf32>
    %38 = arith.addf %24, %37 : vector<128x8xf32>
    %39 = vector.shape_cast %38 : vector<128x8xf32> to vector<2x8x8x8xf32>
    %40 = arith.truncf %39 : vector<2x8x8x8xf32> to vector<2x8x8x8xbf16>
    %c0_55 = arith.constant 0 : index
    %c0_56 = arith.constant 0 : index
    %c0_57 = arith.constant 0 : index
    %c0_58 = arith.constant 0 : index
    %41 = vector.load %arg8[%c0_55, %c0_56, %c0_57, %c0_58] : memref<2x8x8x8xbf16, #tpu.memory_space<vmem>>, vector<2x8x8x8xbf16>
    tpu.vector_store %arg8[%c0_55, %c0_56, %c0_57, %c0_58], %40 {strides = array<i32>} : memref<2x8x8x8xbf16, #tpu.memory_space<vmem>>, vector<2x8x8x8xbf16>,
    return
  }
  func.func @transform_0(%arg0: i32, %arg1: i32) -> (i32, i32, i32, i32, i32) {
    %c0_i32 = arith.constant 0 : i32
    %c0_i32_0 = arith.constant 0 : i32
    %c0_i32_1 = arith.constant 0 : i32
    %c0_i32_2 = arith.constant 0 : i32
    %c0_i32_3 = arith.constant 0 : i32
    return %arg0, %c0_i32, %c0_i32_0, %c0_i32_1, %c0_i32_2 : i32, i32, i32, i32, i32
  }
  func.func @transform_1(%arg0: i32, %arg1: i32) -> (i32, i32) {
    %c0_i32 = arith.constant 0 : i32
    %c0_i32_0 = arith.constant 0 : i32
    return %c0_i32, %arg1 : i32, i32
  }
  func.func @transform_2(%arg0: i32, %arg1: i32) -> (i32, i32, i32, i32, i32) {
    %c0_i32 = arith.constant 0 : i32
    %c0_i32_0 = arith.constant 0 : i32
    %c0_i32_1 = arith.constant 0 : i32
    %c0_i32_2 = arith.constant 0 : i32
    %c0_i32_3 = arith.constant 0 : i32
    return %arg0, %c0_i32, %c0_i32_0, %c0_i32_1, %c0_i32_2 : i32, i32, i32, i32, i32
  }
  func.func @transform_3(%arg0: i32, %arg1: i32) -> (i32, i32) {
    %c0_i32 = arith.constant 0 : i32
    %c0_i32_0 = arith.constant 0 : i32
    %c0_i32_1 = arith.constant 0 : i32
    return %c0_i32, %c0_i32_0 : i32, i32
  }
  func.func @transform_4(%arg0: i32, %arg1: i32) -> (i32, i32) {
    %c0_i32 = arith.constant 0 : i32
    %c0_i32_0 = arith.constant 0 : i32
    %c0_i32_1 = arith.constant 0 : i32
    return %c0_i32, %c0_i32_0 : i32, i32
  }
  func.func @transform_5(%arg0: i32, %arg1: i32) -> (i32, i32) {
    %c0_i32 = arith.constant 0 : i32
    %c0_i32_0 = arith.constant 0 : i32
    return %c0_i32, %arg1 : i32, i32
  }
  func.func @transform_6(%arg0: i32, %arg1: i32) -> (i32, i32, i32, i32) {
    %c0_i32 = arith.constant 0 : i32
    %c0_i32_0 = arith.constant 0 : i32
    %c0_i32_1 = arith.constant 0 : i32
    return %arg0, %c0_i32, %c0_i32_0, %arg1 : i32, i32, i32, i32
  }
}

module attributes {stable_mosaic.version = 11 : i64} {
  func.func @kernel(%arg0: i32, %arg1: i32, %arg2: memref<2x1x8x8x8xbf16, #tpu.memory_space<vmem>>, %arg3: memref<72x8xbf16, #tpu.memory_space<vmem>>, %arg4: memref<1x8xf32, #tpu.memory_space<vmem>>, %arg5: memref<1x8xf32, #tpu.memory_space<vmem>>, %arg6: memref<1x8xf32, #tpu.memory_space<vmem>>, %arg7: memref<1x8xf32, #tpu.memory_space<vmem>>, %arg8: memref<2x8x8x8xbf16, #tpu.memory_space<vmem>>, %arg9: memref<2x8x8x72xbf16, #tpu.memory_space<vmem>>) attributes {dimension_semantics = [#tpu.dimension_semantics<parallel>, #tpu.dimension_semantics<parallel>], iteration_bounds = array<i64: 1, 1>, scalar_prefetch = 0 : i64, scratch_operands = 1 : i64, tpu.core_type = #tpu.core_type<tc>, window_params = [{transform_indices = @transform_0, window_bounds = array<i64: 2, 1, 8, 8, 8>}, {transform_indices = @transform_1, window_bounds = array<i64: 72, 8>}, {pipeline_mode = #tpu.pipeline_mode<synchronous>, transform_indices = @transform_2, window_bounds = array<i64: 1, 8>}, {pipeline_mode = #tpu.pipeline_mode<synchronous>, transform_indices = @transform_3, window_bounds = array<i64: 1, 8>}, {transform_indices = @transform_4, window_bounds = array<i64: 1, 8>}, {transform_indices = @transform_5, window_bounds = array<i64: 1, 8>}, {transform_indices = @transform_6, window_bounds = array<i64: 2, 8, 8, 8>}]} {
    %c0 = arith.constant 0 : index
    %c0_0 = arith.constant 0 : index
    %c0_1 = arith.constant 0 : index
    %c0_2 = arith.constant 0 : index
    %c0_3 = arith.constant 0 : index
    %0 = vector.load %arg2[%c0, %c0_0, %c0_1, %c0_2, %c0_3] : memref<2x1x8x8x8xbf16, #tpu.memory_space<vmem>>, vector<2x1x8x8x8xbf16>
    %1 = vector.shape_cast %0 : vector<2x1x8x8x8xbf16> to vector<2x8x8x8xbf16>
    %2 = arith.extf %1 : vector<2x8x8x8xbf16> to vector<2x8x8x8xf32>
    %c0_4 = arith.constant 0 : index
    %c0_5 = arith.constant 0 : index
    %3 = vector.load %arg4[%c0_4, %c0_5] : memref<1x8xf32, #tpu.memory_space<vmem>>, vector<1x8xf32>
    %4 = vector.shape_cast %3 : vector<1x8xf32> to vector<1x1x1x8xf32>
    %5 = vector.broadcast %4 : vector<1x1x1x8xf32> to vector<2x8x8x8xf32>
    %6 = arith.mulf %2, %5 : vector<2x8x8x8xf32>
    %c0_6 = arith.constant 0 : index
    %c0_7 = arith.constant 0 : index
    %7 = vector.load %arg5[%c0_6, %c0_7] : memref<1x8xf32, #tpu.memory_space<vmem>>, vector<1x8xf32>
    %8 = vector.shape_cast %7 : vector<1x8xf32> to vector<1x1x1x8xf32>
    %9 = vector.broadcast %8 : vector<1x1x1x8xf32> to vector<2x8x8x8xf32>
    %10 = arith.addf %6, %9 : vector<2x8x8x8xf32>
    %cst = arith.constant 0.000000e+00 : f32
    %11 = vector.broadcast %cst : f32 to vector<2x8x8x8xf32>
    %12 = arith.maximumf %10, %11 : vector<2x8x8x8xf32>
    %13 = arith.truncf %12 : vector<2x8x8x8xf32> to vector<2x8x8x8xbf16>
    %cst_8 = arith.constant 0.000000e+00 : bf16
    %14 = vector.broadcast %cst_8 : bf16 to vector<2x8x8x72xbf16>
    %c0_9 = arith.constant 0 : index
    %c0_10 = arith.constant 0 : index
    %c0_11 = arith.constant 0 : index
    %c0_12 = arith.constant 0 : index
    %15 = vector.load %arg9[%c0_9, %c0_10, %c0_11, %c0_12] : memref<2x8x8x72xbf16, #tpu.memory_space<vmem>>, vector<2x8x8x72xbf16>
    tpu.vector_store %arg9[%c0_9, %c0_10, %c0_11, %c0_12], %14 {strides = array<i32>} : memref<2x8x8x72xbf16, #tpu.memory_space<vmem>>, vector<2x8x8x72xbf16>,
    %16 = vector.extract_strided_slice %13 {offsets = [0, 0, 0, 0], sizes = [2, 7, 7, 8], strides = [1, 1, 1, 1]} : vector<2x8x8x8xbf16> to vector<2x7x7x8xbf16>
    %c0_13 = arith.constant 0 : index
    %c1 = arith.constant 1 : index
    %c1_14 = arith.constant 1 : index
    %c0_15 = arith.constant 0 : index
    %17 = vector.load %arg9[%c0_13, %c1, %c1_14, %c0_15] : memref<2x8x8x72xbf16, #tpu.memory_space<vmem>>, vector<2x7x7x8xbf16>
    tpu.vector_store %arg9[%c0_13, %c1, %c1_14, %c0_15], %16 {strides = array<i32>} : memref<2x8x8x72xbf16, #tpu.memory_space<vmem>>, vector<2x7x7x8xbf16>,
    %18 = vector.extract_strided_slice %13 {offsets = [0, 0, 0, 0], sizes = [2, 7, 8, 8], strides = [1, 1, 1, 1]} : vector<2x8x8x8xbf16> to vector<2x7x8x8xbf16>
    %c0_16 = arith.constant 0 : index
    %c1_17 = arith.constant 1 : index
    %c0_18 = arith.constant 0 : index
    %c8 = arith.constant 8 : index
    %19 = vector.load %arg9[%c0_16, %c1_17, %c0_18, %c8] : memref<2x8x8x72xbf16, #tpu.memory_space<vmem>>, vector<2x7x8x8xbf16>
    tpu.vector_store %arg9[%c0_16, %c1_17, %c0_18, %c8], %18 {strides = array<i32>} : memref<2x8x8x72xbf16, #tpu.memory_space<vmem>>, vector<2x7x8x8xbf16>,
    %20 = vector.extract_strided_slice %13 {offsets = [0, 0, 1, 0], sizes = [2, 7, 7, 8], strides = [1, 1, 1, 1]} : vector<2x8x8x8xbf16> to vector<2x7x7x8xbf16>
    %c0_19 = arith.constant 0 : index
    %c1_20 = arith.constant 1 : index
    %c0_21 = arith.constant 0 : index
    %c16 = arith.constant 16 : index
    %21 = vector.load %arg9[%c0_19, %c1_20, %c0_21, %c16] : memref<2x8x8x72xbf16, #tpu.memory_space<vmem>>, vector<2x7x7x8xbf16>
    tpu.vector_store %arg9[%c0_19, %c1_20, %c0_21, %c16], %20 {strides = array<i32>} : memref<2x8x8x72xbf16, #tpu.memory_space<vmem>>, vector<2x7x7x8xbf16>,
    %22 = vector.extract_strided_slice %13 {offsets = [0, 0, 0, 0], sizes = [2, 8, 7, 8], strides = [1, 1, 1, 1]} : vector<2x8x8x8xbf16> to vector<2x8x7x8xbf16>
    %c0_22 = arith.constant 0 : index
    %c0_23 = arith.constant 0 : index
    %c1_24 = arith.constant 1 : index
    %c24 = arith.constant 24 : index
    %23 = vector.load %arg9[%c0_22, %c0_23, %c1_24, %c24] : memref<2x8x8x72xbf16, #tpu.memory_space<vmem>>, vector<2x8x7x8xbf16>
    tpu.vector_store %arg9[%c0_22, %c0_23, %c1_24, %c24], %22 {strides = array<i32>} : memref<2x8x8x72xbf16, #tpu.memory_space<vmem>>, vector<2x8x7x8xbf16>,
    %c0_25 = arith.constant 0 : index
    %c0_26 = arith.constant 0 : index
    %c0_27 = arith.constant 0 : index
    %c32 = arith.constant 32 : index
    %24 = vector.load %arg9[%c0_25, %c0_26, %c0_27, %c32] : memref<2x8x8x72xbf16, #tpu.memory_space<vmem>>, vector<2x8x8x8xbf16>
    tpu.vector_store %arg9[%c0_25, %c0_26, %c0_27, %c32], %13 {strides = array<i32>} : memref<2x8x8x72xbf16, #tpu.memory_space<vmem>>, vector<2x8x8x8xbf16>,
    %25 = vector.extract_strided_slice %13 {offsets = [0, 0, 1, 0], sizes = [2, 8, 7, 8], strides = [1, 1, 1, 1]} : vector<2x8x8x8xbf16> to vector<2x8x7x8xbf16>
    %c0_28 = arith.constant 0 : index
    %c0_29 = arith.constant 0 : index
    %c0_30 = arith.constant 0 : index
    %c40 = arith.constant 40 : index
    %26 = vector.load %arg9[%c0_28, %c0_29, %c0_30, %c40] : memref<2x8x8x72xbf16, #tpu.memory_space<vmem>>, vector<2x8x7x8xbf16>
    tpu.vector_store %arg9[%c0_28, %c0_29, %c0_30, %c40], %25 {strides = array<i32>} : memref<2x8x8x72xbf16, #tpu.memory_space<vmem>>, vector<2x8x7x8xbf16>,
    %27 = vector.extract_strided_slice %13 {offsets = [0, 1, 0, 0], sizes = [2, 7, 7, 8], strides = [1, 1, 1, 1]} : vector<2x8x8x8xbf16> to vector<2x7x7x8xbf16>
    %c0_31 = arith.constant 0 : index
    %c0_32 = arith.constant 0 : index
    %c1_33 = arith.constant 1 : index
    %c48 = arith.constant 48 : index
    %28 = vector.load %arg9[%c0_31, %c0_32, %c1_33, %c48] : memref<2x8x8x72xbf16, #tpu.memory_space<vmem>>, vector<2x7x7x8xbf16>
    tpu.vector_store %arg9[%c0_31, %c0_32, %c1_33, %c48], %27 {strides = array<i32>} : memref<2x8x8x72xbf16, #tpu.memory_space<vmem>>, vector<2x7x7x8xbf16>,
    %29 = vector.extract_strided_slice %13 {offsets = [0, 1, 0, 0], sizes = [2, 7, 8, 8], strides = [1, 1, 1, 1]} : vector<2x8x8x8xbf16> to vector<2x7x8x8xbf16>
    %c0_34 = arith.constant 0 : index
    %c0_35 = arith.constant 0 : index
    %c0_36 = arith.constant 0 : index
    %c56 = arith.constant 56 : index
    %30 = vector.load %arg9[%c0_34, %c0_35, %c0_36, %c56] : memref<2x8x8x72xbf16, #tpu.memory_space<vmem>>, vector<2x7x8x8xbf16>
    tpu.vector_store %arg9[%c0_34, %c0_35, %c0_36, %c56], %29 {strides = array<i32>} : memref<2x8x8x72xbf16, #tpu.memory_space<vmem>>, vector<2x7x8x8xbf16>,
    %31 = vector.extract_strided_slice %13 {offsets = [0, 1, 1, 0], sizes = [2, 7, 7, 8], strides = [1, 1, 1, 1]} : vector<2x8x8x8xbf16> to vector<2x7x7x8xbf16>
    %c0_37 = arith.constant 0 : index
    %c0_38 = arith.constant 0 : index
    %c0_39 = arith.constant 0 : index
    %c64 = arith.constant 64 : index
    %32 = vector.load %arg9[%c0_37, %c0_38, %c0_39, %c64] : memref<2x8x8x72xbf16, #tpu.memory_space<vmem>>, vector<2x7x7x8xbf16>
    tpu.vector_store %arg9[%c0_37, %c0_38, %c0_39, %c64], %31 {strides = array<i32>} : memref<2x8x8x72xbf16, #tpu.memory_space<vmem>>, vector<2x7x7x8xbf16>,
    %c0_40 = arith.constant 0 : index
    %c0_41 = arith.constant 0 : index
    %c0_42 = arith.constant 0 : index
    %c0_43 = arith.constant 0 : index
    %33 = vector.load %arg9[%c0_40, %c0_41, %c0_42, %c0_43] : memref<2x8x8x72xbf16, #tpu.memory_space<vmem>>, vector<2x8x8x72xbf16>
    %34 = vector.shape_cast %33 : vector<2x8x8x72xbf16> to vector<128x72xbf16>
    %c0_44 = arith.constant 0 : index
    %c0_45 = arith.constant 0 : index
    %35 = vector.load %arg3[%c0_44, %c0_45] : memref<72x8xbf16, #tpu.memory_space<vmem>>, vector<72x8xbf16>
    %cst_46 = arith.constant dense<0.000000e+00> : vector<128x8xf32>
    %36 = tpu.matmul %34, %35, %cst_46 {dimension_numbers = #tpu.dot_dimension_numbers<[1], [0], [0], [1], [0, 0, 1, 1], [], []>} : vector<128x72xbf16>, vector<72x8xbf16>, vector<128x8xf32> -> vector<128x8xf32>
    %c0_47 = arith.constant 0 : index
    %c0_48 = arith.constant 0 : index
    %37 = vector.load %arg6[%c0_47, %c0_48] : memref<1x8xf32, #tpu.memory_space<vmem>>, vector<1x8xf32>
    %38 = vector.broadcast %37 : vector<1x8xf32> to vector<128x8xf32>
    %39 = arith.mulf %36, %38 : vector<128x8xf32>
    %c0_49 = arith.constant 0 : index
    %c0_50 = arith.constant 0 : index
    %40 = vector.load %arg7[%c0_49, %c0_50] : memref<1x8xf32, #tpu.memory_space<vmem>>, vector<1x8xf32>
    %41 = vector.broadcast %40 : vector<1x8xf32> to vector<128x8xf32>
    %42 = arith.addf %39, %41 : vector<128x8xf32>
    %cst_51 = arith.constant 0.000000e+00 : f32
    %43 = vector.broadcast %cst_51 : f32 to vector<128x8xf32>
    %44 = arith.maximumf %42, %43 : vector<128x8xf32>
    %45 = vector.shape_cast %44 : vector<128x8xf32> to vector<2x8x8x8xf32>
    %46 = arith.truncf %45 : vector<2x8x8x8xf32> to vector<2x8x8x8xbf16>
    %c0_52 = arith.constant 0 : index
    %c0_53 = arith.constant 0 : index
    %c0_54 = arith.constant 0 : index
    %c0_55 = arith.constant 0 : index
    %47 = vector.load %arg8[%c0_52, %c0_53, %c0_54, %c0_55] : memref<2x8x8x8xbf16, #tpu.memory_space<vmem>>, vector<2x8x8x8xbf16>
    tpu.vector_store %arg8[%c0_52, %c0_53, %c0_54, %c0_55], %46 {strides = array<i32>} : memref<2x8x8x8xbf16, #tpu.memory_space<vmem>>, vector<2x8x8x8xbf16>,
    return
  }
  func.func @transform_0(%arg0: i32, %arg1: i32) -> (i32, i32, i32, i32, i32) {
    %c0_i32 = arith.constant 0 : i32
    %c0_i32_0 = arith.constant 0 : i32
    %c0_i32_1 = arith.constant 0 : i32
    %c0_i32_2 = arith.constant 0 : i32
    %c0_i32_3 = arith.constant 0 : i32
    return %arg0, %c0_i32, %c0_i32_0, %c0_i32_1, %c0_i32_2 : i32, i32, i32, i32, i32
  }
  func.func @transform_1(%arg0: i32, %arg1: i32) -> (i32, i32) {
    %c0_i32 = arith.constant 0 : i32
    %c0_i32_0 = arith.constant 0 : i32
    return %c0_i32, %arg1 : i32, i32
  }
  func.func @transform_2(%arg0: i32, %arg1: i32) -> (i32, i32) {
    %c0_i32 = arith.constant 0 : i32
    %c0_i32_0 = arith.constant 0 : i32
    %c0_i32_1 = arith.constant 0 : i32
    return %c0_i32, %c0_i32_0 : i32, i32
  }
  func.func @transform_3(%arg0: i32, %arg1: i32) -> (i32, i32) {
    %c0_i32 = arith.constant 0 : i32
    %c0_i32_0 = arith.constant 0 : i32
    %c0_i32_1 = arith.constant 0 : i32
    return %c0_i32, %c0_i32_0 : i32, i32
  }
  func.func @transform_4(%arg0: i32, %arg1: i32) -> (i32, i32) {
    %c0_i32 = arith.constant 0 : i32
    %c0_i32_0 = arith.constant 0 : i32
    return %c0_i32, %arg1 : i32, i32
  }
  func.func @transform_5(%arg0: i32, %arg1: i32) -> (i32, i32) {
    %c0_i32 = arith.constant 0 : i32
    %c0_i32_0 = arith.constant 0 : i32
    return %c0_i32, %arg1 : i32, i32
  }
  func.func @transform_6(%arg0: i32, %arg1: i32) -> (i32, i32, i32, i32) {
    %c0_i32 = arith.constant 0 : i32
    %c0_i32_0 = arith.constant 0 : i32
    %c0_i32_1 = arith.constant 0 : i32
    return %arg0, %c0_i32, %c0_i32_0, %arg1 : i32, i32, i32, i32
  }
}

module attributes {stable_mosaic.version = 11 : i64} {
  func.func @kernel(%arg0: i32, %arg1: i32, %arg2: memref<2x4x8x8x4xf32, #tpu.memory_space<vmem>>, %arg3: memref<36x8xbf16, #tpu.memory_space<vmem>>, %arg4: memref<1x4xf32, #tpu.memory_space<vmem>>, %arg5: memref<1x4xf32, #tpu.memory_space<vmem>>, %arg6: memref<1x8xf32, #tpu.memory_space<vmem>>, %arg7: memref<1x8xf32, #tpu.memory_space<vmem>>, %arg8: memref<2x8x8x8xbf16, #tpu.memory_space<vmem>>, %arg9: memref<2x8x8x36xbf16, #tpu.memory_space<vmem>>) attributes {dimension_semantics = [#tpu.dimension_semantics<parallel>, #tpu.dimension_semantics<parallel>], iteration_bounds = array<i64: 1, 1>, scalar_prefetch = 0 : i64, scratch_operands = 1 : i64, tpu.core_type = #tpu.core_type<tc>, window_params = [{transform_indices = @transform_0, window_bounds = array<i64: 2, 4, 8, 8, 4>}, {transform_indices = @transform_1, window_bounds = array<i64: 36, 8>}, {pipeline_mode = #tpu.pipeline_mode<synchronous>, transform_indices = @transform_2, window_bounds = array<i64: 1, 4>}, {pipeline_mode = #tpu.pipeline_mode<synchronous>, transform_indices = @transform_3, window_bounds = array<i64: 1, 4>}, {transform_indices = @transform_4, window_bounds = array<i64: 1, 8>}, {transform_indices = @transform_5, window_bounds = array<i64: 1, 8>}, {transform_indices = @transform_6, window_bounds = array<i64: 2, 8, 8, 8>}]} {
    %c0 = arith.constant 0 : index
    %c0_0 = arith.constant 0 : index
    %c0_1 = arith.constant 0 : index
    %c0_2 = arith.constant 0 : index
    %c0_3 = arith.constant 0 : index
    %0 = vector.load %arg2[%c0, %c0_0, %c0_1, %c0_2, %c0_3] : memref<2x4x8x8x4xf32, #tpu.memory_space<vmem>>, vector<2x4x8x8x4xf32>
    %1 = vector.extract_strided_slice %0 {offsets = [0, 0, 0, 0, 0], sizes = [2, 1, 8, 8, 4], strides = [1, 1, 1, 1, 1]} : vector<2x4x8x8x4xf32> to vector<2x1x8x8x4xf32>
    %2 = vector.shape_cast %1 : vector<2x1x8x8x4xf32> to vector<2x8x8x4xf32>
    %c0_4 = arith.constant 0 : index
    %c0_5 = arith.constant 0 : index
    %3 = vector.load %arg4[%c0_4, %c0_5] : memref<1x4xf32, #tpu.memory_space<vmem>>, vector<1x4xf32>
    %4 = vector.shape_cast %3 : vector<1x4xf32> to vector<1x1x1x4xf32>
    %5 = vector.broadcast %4 : vector<1x1x1x4xf32> to vector<2x8x8x4xf32>
    %6 = arith.mulf %2, %5 : vector<2x8x8x4xf32>
    %c0_6 = arith.constant 0 : index
    %c0_7 = arith.constant 0 : index
    %7 = vector.load %arg5[%c0_6, %c0_7] : memref<1x4xf32, #tpu.memory_space<vmem>>, vector<1x4xf32>
    %8 = vector.shape_cast %7 : vector<1x4xf32> to vector<1x1x1x4xf32>
    %9 = vector.broadcast %8 : vector<1x1x1x4xf32> to vector<2x8x8x4xf32>
    %10 = arith.addf %6, %9 : vector<2x8x8x4xf32>
    %cst = arith.constant 0.000000e+00 : f32
    %11 = vector.broadcast %cst : f32 to vector<2x8x8x4xf32>
    %12 = arith.maximumf %10, %11 : vector<2x8x8x4xf32>
    %13 = arith.truncf %12 : vector<2x8x8x4xf32> to vector<2x8x8x4xbf16>
    %14 = vector.extract_strided_slice %0 {offsets = [0, 1, 0, 0, 0], sizes = [2, 1, 8, 8, 4], strides = [1, 1, 1, 1, 1]} : vector<2x4x8x8x4xf32> to vector<2x1x8x8x4xf32>
    %15 = vector.shape_cast %14 : vector<2x1x8x8x4xf32> to vector<2x8x8x4xf32>
    %c0_8 = arith.constant 0 : index
    %c0_9 = arith.constant 0 : index
    %16 = vector.load %arg4[%c0_8, %c0_9] : memref<1x4xf32, #tpu.memory_space<vmem>>, vector<1x4xf32>
    %17 = vector.shape_cast %16 : vector<1x4xf32> to vector<1x1x1x4xf32>
    %18 = vector.broadcast %17 : vector<1x1x1x4xf32> to vector<2x8x8x4xf32>
    %19 = arith.mulf %15, %18 : vector<2x8x8x4xf32>
    %c0_10 = arith.constant 0 : index
    %c0_11 = arith.constant 0 : index
    %20 = vector.load %arg5[%c0_10, %c0_11] : memref<1x4xf32, #tpu.memory_space<vmem>>, vector<1x4xf32>
    %21 = vector.shape_cast %20 : vector<1x4xf32> to vector<1x1x1x4xf32>
    %22 = vector.broadcast %21 : vector<1x1x1x4xf32> to vector<2x8x8x4xf32>
    %23 = arith.addf %19, %22 : vector<2x8x8x4xf32>
    %cst_12 = arith.constant 0.000000e+00 : f32
    %24 = vector.broadcast %cst_12 : f32 to vector<2x8x8x4xf32>
    %25 = arith.maximumf %23, %24 : vector<2x8x8x4xf32>
    %26 = arith.truncf %25 : vector<2x8x8x4xf32> to vector<2x8x8x4xbf16>
    %27 = vector.extract_strided_slice %0 {offsets = [0, 2, 0, 0, 0], sizes = [2, 1, 8, 8, 4], strides = [1, 1, 1, 1, 1]} : vector<2x4x8x8x4xf32> to vector<2x1x8x8x4xf32>
    %28 = vector.shape_cast %27 : vector<2x1x8x8x4xf32> to vector<2x8x8x4xf32>
    %c0_13 = arith.constant 0 : index
    %c0_14 = arith.constant 0 : index
    %29 = vector.load %arg4[%c0_13, %c0_14] : memref<1x4xf32, #tpu.memory_space<vmem>>, vector<1x4xf32>
    %30 = vector.shape_cast %29 : vector<1x4xf32> to vector<1x1x1x4xf32>
    %31 = vector.broadcast %30 : vector<1x1x1x4xf32> to vector<2x8x8x4xf32>
    %32 = arith.mulf %28, %31 : vector<2x8x8x4xf32>
    %c0_15 = arith.constant 0 : index
    %c0_16 = arith.constant 0 : index
    %33 = vector.load %arg5[%c0_15, %c0_16] : memref<1x4xf32, #tpu.memory_space<vmem>>, vector<1x4xf32>
    %34 = vector.shape_cast %33 : vector<1x4xf32> to vector<1x1x1x4xf32>
    %35 = vector.broadcast %34 : vector<1x1x1x4xf32> to vector<2x8x8x4xf32>
    %36 = arith.addf %32, %35 : vector<2x8x8x4xf32>
    %cst_17 = arith.constant 0.000000e+00 : f32
    %37 = vector.broadcast %cst_17 : f32 to vector<2x8x8x4xf32>
    %38 = arith.maximumf %36, %37 : vector<2x8x8x4xf32>
    %39 = arith.truncf %38 : vector<2x8x8x4xf32> to vector<2x8x8x4xbf16>
    %40 = vector.extract_strided_slice %0 {offsets = [0, 3, 0, 0, 0], sizes = [2, 1, 8, 8, 4], strides = [1, 1, 1, 1, 1]} : vector<2x4x8x8x4xf32> to vector<2x1x8x8x4xf32>
    %41 = vector.shape_cast %40 : vector<2x1x8x8x4xf32> to vector<2x8x8x4xf32>
    %c0_18 = arith.constant 0 : index
    %c0_19 = arith.constant 0 : index
    %42 = vector.load %arg4[%c0_18, %c0_19] : memref<1x4xf32, #tpu.memory_space<vmem>>, vector<1x4xf32>
    %43 = vector.shape_cast %42 : vector<1x4xf32> to vector<1x1x1x4xf32>
    %44 = vector.broadcast %43 : vector<1x1x1x4xf32> to vector<2x8x8x4xf32>
    %45 = arith.mulf %41, %44 : vector<2x8x8x4xf32>
    %c0_20 = arith.constant 0 : index
    %c0_21 = arith.constant 0 : index
    %46 = vector.load %arg5[%c0_20, %c0_21] : memref<1x4xf32, #tpu.memory_space<vmem>>, vector<1x4xf32>
    %47 = vector.shape_cast %46 : vector<1x4xf32> to vector<1x1x1x4xf32>
    %48 = vector.broadcast %47 : vector<1x1x1x4xf32> to vector<2x8x8x4xf32>
    %49 = arith.addf %45, %48 : vector<2x8x8x4xf32>
    %cst_22 = arith.constant 0.000000e+00 : f32
    %50 = vector.broadcast %cst_22 : f32 to vector<2x8x8x4xf32>
    %51 = arith.maximumf %49, %50 : vector<2x8x8x4xf32>
    %52 = arith.truncf %51 : vector<2x8x8x4xf32> to vector<2x8x8x4xbf16>
    %cst_23 = arith.constant 0.000000e+00 : bf16
    %53 = vector.broadcast %cst_23 : bf16 to vector<2x8x8x36xbf16>
    %c0_24 = arith.constant 0 : index
    %c0_25 = arith.constant 0 : index
    %c0_26 = arith.constant 0 : index
    %c0_27 = arith.constant 0 : index
    %54 = vector.load %arg9[%c0_24, %c0_25, %c0_26, %c0_27] : memref<2x8x8x36xbf16, #tpu.memory_space<vmem>>, vector<2x8x8x36xbf16>
    tpu.vector_store %arg9[%c0_24, %c0_25, %c0_26, %c0_27], %53 {strides = array<i32>} : memref<2x8x8x36xbf16, #tpu.memory_space<vmem>>, vector<2x8x8x36xbf16>,
    %55 = vector.extract_strided_slice %52 {offsets = [0, 0, 0, 0], sizes = [2, 7, 7, 4], strides = [1, 1, 1, 1]} : vector<2x8x8x4xbf16> to vector<2x7x7x4xbf16>
    %c0_28 = arith.constant 0 : index
    %c1 = arith.constant 1 : index
    %c1_29 = arith.constant 1 : index
    %c0_30 = arith.constant 0 : index
    %56 = vector.load %arg9[%c0_28, %c1, %c1_29, %c0_30] : memref<2x8x8x36xbf16, #tpu.memory_space<vmem>>, vector<2x7x7x4xbf16>
    tpu.vector_store %arg9[%c0_28, %c1, %c1_29, %c0_30], %55 {strides = array<i32>} : memref<2x8x8x36xbf16, #tpu.memory_space<vmem>>, vector<2x7x7x4xbf16>,
    %57 = vector.extract_strided_slice %39 {offsets = [0, 0, 0, 0], sizes = [2, 7, 8, 4], strides = [1, 1, 1, 1]} : vector<2x8x8x4xbf16> to vector<2x7x8x4xbf16>
    %c0_31 = arith.constant 0 : index
    %c1_32 = arith.constant 1 : index
    %c0_33 = arith.constant 0 : index
    %c4 = arith.constant 4 : index
    %58 = vector.load %arg9[%c0_31, %c1_32, %c0_33, %c4] : memref<2x8x8x36xbf16, #tpu.memory_space<vmem>>, vector<2x7x8x4xbf16>
    tpu.vector_store %arg9[%c0_31, %c1_32, %c0_33, %c4], %57 {strides = array<i32>} : memref<2x8x8x36xbf16, #tpu.memory_space<vmem>>, vector<2x7x8x4xbf16>,
    %59 = vector.extract_strided_slice %52 {offsets = [0, 0, 0, 0], sizes = [2, 7, 8, 4], strides = [1, 1, 1, 1]} : vector<2x8x8x4xbf16> to vector<2x7x8x4xbf16>
    %c0_34 = arith.constant 0 : index
    %c1_35 = arith.constant 1 : index
    %c0_36 = arith.constant 0 : index
    %c8 = arith.constant 8 : index
    %60 = vector.load %arg9[%c0_34, %c1_35, %c0_36, %c8] : memref<2x8x8x36xbf16, #tpu.memory_space<vmem>>, vector<2x7x8x4xbf16>
    tpu.vector_store %arg9[%c0_34, %c1_35, %c0_36, %c8], %59 {strides = array<i32>} : memref<2x8x8x36xbf16, #tpu.memory_space<vmem>>, vector<2x7x8x4xbf16>,
    %61 = vector.extract_strided_slice %26 {offsets = [0, 0, 0, 0], sizes = [2, 8, 7, 4], strides = [1, 1, 1, 1]} : vector<2x8x8x4xbf16> to vector<2x8x7x4xbf16>
    %c0_37 = arith.constant 0 : index
    %c0_38 = arith.constant 0 : index
    %c1_39 = arith.constant 1 : index
    %c12 = arith.constant 12 : index
    %62 = vector.load %arg9[%c0_37, %c0_38, %c1_39, %c12] : memref<2x8x8x36xbf16, #tpu.memory_space<vmem>>, vector<2x8x7x4xbf16>
    tpu.vector_store %arg9[%c0_37, %c0_38, %c1_39, %c12], %61 {strides = array<i32>} : memref<2x8x8x36xbf16, #tpu.memory_space<vmem>>, vector<2x8x7x4xbf16>,
    %c0_40 = arith.constant 0 : index
    %c0_41 = arith.constant 0 : index
    %c0_42 = arith.constant 0 : index
    %c16 = arith.constant 16 : index
    %63 = vector.load %arg9[%c0_40, %c0_41, %c0_42, %c16] : memref<2x8x8x36xbf16, #tpu.memory_space<vmem>>, vector<2x8x8x4xbf16>
    tpu.vector_store %arg9[%c0_40, %c0_41, %c0_42, %c16], %13 {strides = array<i32>} : memref<2x8x8x36xbf16, #tpu.memory_space<vmem>>, vector<2x8x8x4xbf16>,
    %c0_43 = arith.constant 0 : index
    %c0_44 = arith.constant 0 : index
    %c0_45 = arith.constant 0 : index
    %c20 = arith.constant 20 : index
    %64 = vector.load %arg9[%c0_43, %c0_44, %c0_45, %c20] : memref<2x8x8x36xbf16, #tpu.memory_space<vmem>>, vector<2x8x8x4xbf16>
    tpu.vector_store %arg9[%c0_43, %c0_44, %c0_45, %c20], %26 {strides = array<i32>} : memref<2x8x8x36xbf16, #tpu.memory_space<vmem>>, vector<2x8x8x4xbf16>,
    %65 = vector.extract_strided_slice %52 {offsets = [0, 0, 0, 0], sizes = [2, 8, 7, 4], strides = [1, 1, 1, 1]} : vector<2x8x8x4xbf16> to vector<2x8x7x4xbf16>
    %c0_46 = arith.constant 0 : index
    %c0_47 = arith.constant 0 : index
    %c1_48 = arith.constant 1 : index
    %c24 = arith.constant 24 : index
    %66 = vector.load %arg9[%c0_46, %c0_47, %c1_48, %c24] : memref<2x8x8x36xbf16, #tpu.memory_space<vmem>>, vector<2x8x7x4xbf16>
    tpu.vector_store %arg9[%c0_46, %c0_47, %c1_48, %c24], %65 {strides = array<i32>} : memref<2x8x8x36xbf16, #tpu.memory_space<vmem>>, vector<2x8x7x4xbf16>,
    %c0_49 = arith.constant 0 : index
    %c0_50 = arith.constant 0 : index
    %c0_51 = arith.constant 0 : index
    %c28 = arith.constant 28 : index
    %67 = vector.load %arg9[%c0_49, %c0_50, %c0_51, %c28] : memref<2x8x8x36xbf16, #tpu.memory_space<vmem>>, vector<2x8x8x4xbf16>
    tpu.vector_store %arg9[%c0_49, %c0_50, %c0_51, %c28], %39 {strides = array<i32>} : memref<2x8x8x36xbf16, #tpu.memory_space<vmem>>, vector<2x8x8x4xbf16>,
    %c0_52 = arith.constant 0 : index
    %c0_53 = arith.constant 0 : index
    %c0_54 = arith.constant 0 : index
    %c32 = arith.constant 32 : index
    %68 = vector.load %arg9[%c0_52, %c0_53, %c0_54, %c32] : memref<2x8x8x36xbf16, #tpu.memory_space<vmem>>, vector<2x8x8x4xbf16>
    tpu.vector_store %arg9[%c0_52, %c0_53, %c0_54, %c32], %52 {strides = array<i32>} : memref<2x8x8x36xbf16, #tpu.memory_space<vmem>>, vector<2x8x8x4xbf16>,
    %c0_55 = arith.constant 0 : index
    %c0_56 = arith.constant 0 : index
    %c0_57 = arith.constant 0 : index
    %c0_58 = arith.constant 0 : index
    %69 = vector.load %arg9[%c0_55, %c0_56, %c0_57, %c0_58] : memref<2x8x8x36xbf16, #tpu.memory_space<vmem>>, vector<2x8x8x36xbf16>
    %70 = vector.shape_cast %69 : vector<2x8x8x36xbf16> to vector<128x36xbf16>
    %c0_59 = arith.constant 0 : index
    %c0_60 = arith.constant 0 : index
    %71 = vector.load %arg3[%c0_59, %c0_60] : memref<36x8xbf16, #tpu.memory_space<vmem>>, vector<36x8xbf16>
    %cst_61 = arith.constant dense<0.000000e+00> : vector<128x8xf32>
    %72 = tpu.matmul %70, %71, %cst_61 {dimension_numbers = #tpu.dot_dimension_numbers<[1], [0], [0], [1], [0, 0, 1, 1], [], []>} : vector<128x36xbf16>, vector<36x8xbf16>, vector<128x8xf32> -> vector<128x8xf32>
    %c0_62 = arith.constant 0 : index
    %c0_63 = arith.constant 0 : index
    %73 = vector.load %arg6[%c0_62, %c0_63] : memref<1x8xf32, #tpu.memory_space<vmem>>, vector<1x8xf32>
    %74 = vector.broadcast %73 : vector<1x8xf32> to vector<128x8xf32>
    %75 = arith.mulf %72, %74 : vector<128x8xf32>
    %c0_64 = arith.constant 0 : index
    %c0_65 = arith.constant 0 : index
    %76 = vector.load %arg7[%c0_64, %c0_65] : memref<1x8xf32, #tpu.memory_space<vmem>>, vector<1x8xf32>
    %77 = vector.broadcast %76 : vector<1x8xf32> to vector<128x8xf32>
    %78 = arith.addf %75, %77 : vector<128x8xf32>
    %cst_66 = arith.constant 0.000000e+00 : f32
    %79 = vector.broadcast %cst_66 : f32 to vector<128x8xf32>
    %80 = arith.maximumf %78, %79 : vector<128x8xf32>
    %81 = vector.shape_cast %80 : vector<128x8xf32> to vector<2x8x8x8xf32>
    %82 = arith.truncf %81 : vector<2x8x8x8xf32> to vector<2x8x8x8xbf16>
    %c0_67 = arith.constant 0 : index
    %c0_68 = arith.constant 0 : index
    %c0_69 = arith.constant 0 : index
    %c0_70 = arith.constant 0 : index
    %83 = vector.load %arg8[%c0_67, %c0_68, %c0_69, %c0_70] : memref<2x8x8x8xbf16, #tpu.memory_space<vmem>>, vector<2x8x8x8xbf16>
    tpu.vector_store %arg8[%c0_67, %c0_68, %c0_69, %c0_70], %82 {strides = array<i32>} : memref<2x8x8x8xbf16, #tpu.memory_space<vmem>>, vector<2x8x8x8xbf16>,
    return
  }
  func.func @transform_0(%arg0: i32, %arg1: i32) -> (i32, i32, i32, i32, i32) {
    %c0_i32 = arith.constant 0 : i32
    %c0_i32_0 = arith.constant 0 : i32
    %c0_i32_1 = arith.constant 0 : i32
    %c0_i32_2 = arith.constant 0 : i32
    %c0_i32_3 = arith.constant 0 : i32
    return %arg0, %c0_i32, %c0_i32_0, %c0_i32_1, %c0_i32_2 : i32, i32, i32, i32, i32
  }
  func.func @transform_1(%arg0: i32, %arg1: i32) -> (i32, i32) {
    %c0_i32 = arith.constant 0 : i32
    %c0_i32_0 = arith.constant 0 : i32
    return %c0_i32, %arg1 : i32, i32
  }
  func.func @transform_2(%arg0: i32, %arg1: i32) -> (i32, i32) {
    %c0_i32 = arith.constant 0 : i32
    %c0_i32_0 = arith.constant 0 : i32
    %c0_i32_1 = arith.constant 0 : i32
    return %c0_i32, %c0_i32_0 : i32, i32
  }
  func.func @transform_3(%arg0: i32, %arg1: i32) -> (i32, i32) {
    %c0_i32 = arith.constant 0 : i32
    %c0_i32_0 = arith.constant 0 : i32
    %c0_i32_1 = arith.constant 0 : i32
    return %c0_i32, %c0_i32_0 : i32, i32
  }
  func.func @transform_4(%arg0: i32, %arg1: i32) -> (i32, i32) {
    %c0_i32 = arith.constant 0 : i32
    %c0_i32_0 = arith.constant 0 : i32
    return %c0_i32, %arg1 : i32, i32
  }
  func.func @transform_5(%arg0: i32, %arg1: i32) -> (i32, i32) {
    %c0_i32 = arith.constant 0 : i32
    %c0_i32_0 = arith.constant 0 : i32
    return %c0_i32, %arg1 : i32, i32
  }
  func.func @transform_6(%arg0: i32, %arg1: i32) -> (i32, i32, i32, i32) {
    %c0_i32 = arith.constant 0 : i32
    %c0_i32_0 = arith.constant 0 : i32
    %c0_i32_1 = arith.constant 0 : i32
    return %arg0, %c0_i32, %c0_i32_0, %arg1 : i32, i32, i32, i32
  }
}

module attributes {stable_mosaic.version = 11 : i64} {
  func.func @kernel(%arg0: i32, %arg1: i32, %arg2: memref<2x1x8x8x8xbf16, #tpu.memory_space<vmem>>, %arg3: memref<72x8xbf16, #tpu.memory_space<vmem>>, %arg4: memref<2x8x8x8xbf16, #tpu.memory_space<vmem>>, %arg5: memref<2x8x8x8xf32, #tpu.memory_space<vmem>>, %arg6: memref<2x8x8x72xbf16, #tpu.memory_space<vmem>>) attributes {dimension_semantics = [#tpu.dimension_semantics<parallel>, #tpu.dimension_semantics<parallel>], iteration_bounds = array<i64: 1, 1>, scalar_prefetch = 0 : i64, scratch_operands = 1 : i64, tpu.core_type = #tpu.core_type<tc>, window_params = [{transform_indices = @transform_0, window_bounds = array<i64: 2, 1, 8, 8, 8>}, {transform_indices = @transform_1, window_bounds = array<i64: 72, 8>}, {transform_indices = @transform_2, window_bounds = array<i64: 2, 8, 8, 8>}, {transform_indices = @transform_3, window_bounds = array<i64: 2, 8, 8, 8>}]} {
    %c0 = arith.constant 0 : index
    %c0_0 = arith.constant 0 : index
    %c0_1 = arith.constant 0 : index
    %c0_2 = arith.constant 0 : index
    %c0_3 = arith.constant 0 : index
    %0 = vector.load %arg2[%c0, %c0_0, %c0_1, %c0_2, %c0_3] : memref<2x1x8x8x8xbf16, #tpu.memory_space<vmem>>, vector<2x1x8x8x8xbf16>
    %1 = vector.shape_cast %0 : vector<2x1x8x8x8xbf16> to vector<2x8x8x8xbf16>
    %cst = arith.constant 0.000000e+00 : bf16
    %2 = vector.broadcast %cst : bf16 to vector<2x8x8x72xbf16>
    %c0_4 = arith.constant 0 : index
    %c0_5 = arith.constant 0 : index
    %c0_6 = arith.constant 0 : index
    %c0_7 = arith.constant 0 : index
    %3 = vector.load %arg6[%c0_4, %c0_5, %c0_6, %c0_7] : memref<2x8x8x72xbf16, #tpu.memory_space<vmem>>, vector<2x8x8x72xbf16>
    tpu.vector_store %arg6[%c0_4, %c0_5, %c0_6, %c0_7], %2 {strides = array<i32>} : memref<2x8x8x72xbf16, #tpu.memory_space<vmem>>, vector<2x8x8x72xbf16>,
    %4 = vector.extract_strided_slice %1 {offsets = [0, 0, 0, 0], sizes = [2, 7, 7, 8], strides = [1, 1, 1, 1]} : vector<2x8x8x8xbf16> to vector<2x7x7x8xbf16>
    %c0_8 = arith.constant 0 : index
    %c1 = arith.constant 1 : index
    %c1_9 = arith.constant 1 : index
    %c0_10 = arith.constant 0 : index
    %5 = vector.load %arg6[%c0_8, %c1, %c1_9, %c0_10] : memref<2x8x8x72xbf16, #tpu.memory_space<vmem>>, vector<2x7x7x8xbf16>
    tpu.vector_store %arg6[%c0_8, %c1, %c1_9, %c0_10], %4 {strides = array<i32>} : memref<2x8x8x72xbf16, #tpu.memory_space<vmem>>, vector<2x7x7x8xbf16>,
    %6 = vector.extract_strided_slice %1 {offsets = [0, 0, 0, 0], sizes = [2, 7, 8, 8], strides = [1, 1, 1, 1]} : vector<2x8x8x8xbf16> to vector<2x7x8x8xbf16>
    %c0_11 = arith.constant 0 : index
    %c1_12 = arith.constant 1 : index
    %c0_13 = arith.constant 0 : index
    %c8 = arith.constant 8 : index
    %7 = vector.load %arg6[%c0_11, %c1_12, %c0_13, %c8] : memref<2x8x8x72xbf16, #tpu.memory_space<vmem>>, vector<2x7x8x8xbf16>
    tpu.vector_store %arg6[%c0_11, %c1_12, %c0_13, %c8], %6 {strides = array<i32>} : memref<2x8x8x72xbf16, #tpu.memory_space<vmem>>, vector<2x7x8x8xbf16>,
    %8 = vector.extract_strided_slice %1 {offsets = [0, 0, 1, 0], sizes = [2, 7, 7, 8], strides = [1, 1, 1, 1]} : vector<2x8x8x8xbf16> to vector<2x7x7x8xbf16>
    %c0_14 = arith.constant 0 : index
    %c1_15 = arith.constant 1 : index
    %c0_16 = arith.constant 0 : index
    %c16 = arith.constant 16 : index
    %9 = vector.load %arg6[%c0_14, %c1_15, %c0_16, %c16] : memref<2x8x8x72xbf16, #tpu.memory_space<vmem>>, vector<2x7x7x8xbf16>
    tpu.vector_store %arg6[%c0_14, %c1_15, %c0_16, %c16], %8 {strides = array<i32>} : memref<2x8x8x72xbf16, #tpu.memory_space<vmem>>, vector<2x7x7x8xbf16>,
    %10 = vector.extract_strided_slice %1 {offsets = [0, 0, 0, 0], sizes = [2, 8, 7, 8], strides = [1, 1, 1, 1]} : vector<2x8x8x8xbf16> to vector<2x8x7x8xbf16>
    %c0_17 = arith.constant 0 : index
    %c0_18 = arith.constant 0 : index
    %c1_19 = arith.constant 1 : index
    %c24 = arith.constant 24 : index
    %11 = vector.load %arg6[%c0_17, %c0_18, %c1_19, %c24] : memref<2x8x8x72xbf16, #tpu.memory_space<vmem>>, vector<2x8x7x8xbf16>
    tpu.vector_store %arg6[%c0_17, %c0_18, %c1_19, %c24], %10 {strides = array<i32>} : memref<2x8x8x72xbf16, #tpu.memory_space<vmem>>, vector<2x8x7x8xbf16>,
    %c0_20 = arith.constant 0 : index
    %c0_21 = arith.constant 0 : index
    %c0_22 = arith.constant 0 : index
    %c32 = arith.constant 32 : index
    %12 = vector.load %arg6[%c0_20, %c0_21, %c0_22, %c32] : memref<2x8x8x72xbf16, #tpu.memory_space<vmem>>, vector<2x8x8x8xbf16>
    tpu.vector_store %arg6[%c0_20, %c0_21, %c0_22, %c32], %1 {strides = array<i32>} : memref<2x8x8x72xbf16, #tpu.memory_space<vmem>>, vector<2x8x8x8xbf16>,
    %13 = vector.extract_strided_slice %1 {offsets = [0, 0, 1, 0], sizes = [2, 8, 7, 8], strides = [1, 1, 1, 1]} : vector<2x8x8x8xbf16> to vector<2x8x7x8xbf16>
    %c0_23 = arith.constant 0 : index
    %c0_24 = arith.constant 0 : index
    %c0_25 = arith.constant 0 : index
    %c40 = arith.constant 40 : index
    %14 = vector.load %arg6[%c0_23, %c0_24, %c0_25, %c40] : memref<2x8x8x72xbf16, #tpu.memory_space<vmem>>, vector<2x8x7x8xbf16>
    tpu.vector_store %arg6[%c0_23, %c0_24, %c0_25, %c40], %13 {strides = array<i32>} : memref<2x8x8x72xbf16, #tpu.memory_space<vmem>>, vector<2x8x7x8xbf16>,
    %15 = vector.extract_strided_slice %1 {offsets = [0, 1, 0, 0], sizes = [2, 7, 7, 8], strides = [1, 1, 1, 1]} : vector<2x8x8x8xbf16> to vector<2x7x7x8xbf16>
    %c0_26 = arith.constant 0 : index
    %c0_27 = arith.constant 0 : index
    %c1_28 = arith.constant 1 : index
    %c48 = arith.constant 48 : index
    %16 = vector.load %arg6[%c0_26, %c0_27, %c1_28, %c48] : memref<2x8x8x72xbf16, #tpu.memory_space<vmem>>, vector<2x7x7x8xbf16>
    tpu.vector_store %arg6[%c0_26, %c0_27, %c1_28, %c48], %15 {strides = array<i32>} : memref<2x8x8x72xbf16, #tpu.memory_space<vmem>>, vector<2x7x7x8xbf16>,
    %17 = vector.extract_strided_slice %1 {offsets = [0, 1, 0, 0], sizes = [2, 7, 8, 8], strides = [1, 1, 1, 1]} : vector<2x8x8x8xbf16> to vector<2x7x8x8xbf16>
    %c0_29 = arith.constant 0 : index
    %c0_30 = arith.constant 0 : index
    %c0_31 = arith.constant 0 : index
    %c56 = arith.constant 56 : index
    %18 = vector.load %arg6[%c0_29, %c0_30, %c0_31, %c56] : memref<2x8x8x72xbf16, #tpu.memory_space<vmem>>, vector<2x7x8x8xbf16>
    tpu.vector_store %arg6[%c0_29, %c0_30, %c0_31, %c56], %17 {strides = array<i32>} : memref<2x8x8x72xbf16, #tpu.memory_space<vmem>>, vector<2x7x8x8xbf16>,
    %19 = vector.extract_strided_slice %1 {offsets = [0, 1, 1, 0], sizes = [2, 7, 7, 8], strides = [1, 1, 1, 1]} : vector<2x8x8x8xbf16> to vector<2x7x7x8xbf16>
    %c0_32 = arith.constant 0 : index
    %c0_33 = arith.constant 0 : index
    %c0_34 = arith.constant 0 : index
    %c64 = arith.constant 64 : index
    %20 = vector.load %arg6[%c0_32, %c0_33, %c0_34, %c64] : memref<2x8x8x72xbf16, #tpu.memory_space<vmem>>, vector<2x7x7x8xbf16>
    tpu.vector_store %arg6[%c0_32, %c0_33, %c0_34, %c64], %19 {strides = array<i32>} : memref<2x8x8x72xbf16, #tpu.memory_space<vmem>>, vector<2x7x7x8xbf16>,
    %c0_35 = arith.constant 0 : index
    %c0_36 = arith.constant 0 : index
    %c0_37 = arith.constant 0 : index
    %c0_38 = arith.constant 0 : index
    %21 = vector.load %arg6[%c0_35, %c0_36, %c0_37, %c0_38] : memref<2x8x8x72xbf16, #tpu.memory_space<vmem>>, vector<2x8x8x72xbf16>
    %22 = vector.shape_cast %21 : vector<2x8x8x72xbf16> to vector<128x72xbf16>
    %c0_39 = arith.constant 0 : index
    %c0_40 = arith.constant 0 : index
    %23 = vector.load %arg3[%c0_39, %c0_40] : memref<72x8xbf16, #tpu.memory_space<vmem>>, vector<72x8xbf16>
    %cst_41 = arith.constant dense<0.000000e+00> : vector<128x8xf32>
    %24 = tpu.matmul %22, %23, %cst_41 {dimension_numbers = #tpu.dot_dimension_numbers<[1], [0], [0], [1], [0, 0, 1, 1], [], []>} : vector<128x72xbf16>, vector<72x8xbf16>, vector<128x8xf32> -> vector<128x8xf32>
    %c0_42 = arith.constant 0 : index
    %c0_43 = arith.constant 0 : index
    %c0_44 = arith.constant 0 : index
    %c0_45 = arith.constant 0 : index
    %25 = vector.load %arg4[%c0_42, %c0_43, %c0_44, %c0_45] : memref<2x8x8x8xbf16, #tpu.memory_space<vmem>>, vector<2x8x8x8xbf16>
    %26 = vector.shape_cast %25 : vector<2x8x8x8xbf16> to vector<128x8xbf16>
    %27 = arith.extf %26 : vector<128x8xbf16> to vector<128x8xf32>
    %28 = arith.addf %24, %27 : vector<128x8xf32>
    %29 = vector.shape_cast %28 : vector<128x8xf32> to vector<2x8x8x8xf32>
    %c0_46 = arith.constant 0 : index
    %c0_47 = arith.constant 0 : index
    %c0_48 = arith.constant 0 : index
    %c0_49 = arith.constant 0 : index
    %30 = vector.load %arg5[%c0_46, %c0_47, %c0_48, %c0_49] : memref<2x8x8x8xf32, #tpu.memory_space<vmem>>, vector<2x8x8x8xf32>
    tpu.vector_store %arg5[%c0_46, %c0_47, %c0_48, %c0_49], %29 {strides = array<i32>} : memref<2x8x8x8xf32, #tpu.memory_space<vmem>>, vector<2x8x8x8xf32>,
    return
  }
  func.func @transform_0(%arg0: i32, %arg1: i32) -> (i32, i32, i32, i32, i32) {
    %c0_i32 = arith.constant 0 : i32
    %c0_i32_0 = arith.constant 0 : i32
    %c0_i32_1 = arith.constant 0 : i32
    %c0_i32_2 = arith.constant 0 : i32
    %c0_i32_3 = arith.constant 0 : i32
    return %arg0, %c0_i32, %c0_i32_0, %c0_i32_1, %c0_i32_2 : i32, i32, i32, i32, i32
  }
  func.func @transform_1(%arg0: i32, %arg1: i32) -> (i32, i32) {
    %c0_i32 = arith.constant 0 : i32
    %c0_i32_0 = arith.constant 0 : i32
    return %c0_i32, %arg1 : i32, i32
  }
  func.func @transform_2(%arg0: i32, %arg1: i32) -> (i32, i32, i32, i32) {
    %c0_i32 = arith.constant 0 : i32
    %c0_i32_0 = arith.constant 0 : i32
    %c0_i32_1 = arith.constant 0 : i32
    return %arg0, %c0_i32, %c0_i32_0, %arg1 : i32, i32, i32, i32
  }
  func.func @transform_3(%arg0: i32, %arg1: i32) -> (i32, i32, i32, i32) {
    %c0_i32 = arith.constant 0 : i32
    %c0_i32_0 = arith.constant 0 : i32
    %c0_i32_1 = arith.constant 0 : i32
    return %arg0, %c0_i32, %c0_i32_0, %arg1 : i32, i32, i32, i32
  }
}

</mosaic_0001>

<llo_original>
// kernel: _lambda_.5
$region0: #{_lambda_.5}
  #allocation0 [shape = 'u32[]', space=smem, size = 0x4, offset = 0x4, fixed_abs, tag = 'smem constant byte address 0x4 - core index']
  #allocation1 [shape = 'u32[72,128]{1,0:T(1,128)}', space=vmem, size = 0x9000, scoped, tag = 'internal scratch']
  #allocation2 [shape = 'bf16[2,8,8,72]{3,2,1,0:T(8,128)(2,1)}', space=vmem, size = 0x8000, scoped, tag = 'scratch operand']
  %s0 = inlined_call_operand.vmem [shape: bf16[2,1,8,8,8], index: 0, kind: input, shape index: {}]
  %s1 = inlined_call_operand.vmem [shape: bf16[72,8], index: 1, kind: input, shape index: {}]
  %s2 = inlined_call_operand.vmem [shape: f32[2,4,8,8,4], index: 2, kind: input, shape index: {}]
  %s3 = inlined_call_operand.vmem [shape: f32[1,4], index: 3, kind: input, shape index: {}]
  %s4 = inlined_call_operand.vmem [shape: f32[1,4], index: 4, kind: input, shape index: {}]
  %s5 = inlined_call_operand.vmem [shape: bf16[4,8], index: 5, kind: input, shape index: {}]
  %s6 = inlined_call_operand.vmem [shape: bf16[2,8,8,8], index: 6, kind: output, shape index: {}]
  %s7 = sld [smem:[#allocation0]]
  $region72: #{_lambda_.5} parent=0
    _
  %s9 = ssub.s32 1, %s7
  %s10 = scalar_select 0, %s9, %s7
  $region1: #{_lambda_.5} parent=0
    #allocation3 [shape = 'u8[65536]{0}', space=vmem, size = 0x10000, scoped, tag = 'input window, operand 2, single buffered']
    // Predicated region
    $region2: #{_lambda_.5} parent=1 // pred_check
      _
    $region3: #{_lambda_.5} parent=1 // pred_check_branch
      %12 = sbr.rel (0) target = $region5
    $region4: #{_lambda_.5} parent=1 // pred_region
      _
    $region5: #{_lambda_.5} parent=1 // pred_fallthru
      _
    // Predicated region
    $region6: #{_lambda_.5} parent=1 // pred_check
      _
    $region7: #{_lambda_.5} parent=1 // pred_check_branch
      %14 = sbr.rel (0) target = $region9
    $region8: #{_lambda_.5} parent=1 // pred_region
      _
    $region9: #{_lambda_.5} parent=1 // pred_fallthru
      _
    // Predicated region
    $region10: #{_lambda_.5} parent=1 // pred_check
      _
    $region11: #{_lambda_.5} parent=1 // pred_check_branch
      %16 = sbr.rel (0) target = $region13
    $region12: #{_lambda_.5} parent=1 // pred_region
      // Predicated region
      $region14: #{_lambda_.5} parent=12 // pred_check
        _
      $region15: #{_lambda_.5} parent=12 // pred_check_branch
        %18 = sbr.rel (0) target = $region17
      $region16: #{_lambda_.5} parent=12 // pred_region
        // Predicated region
        $region18: #{_lambda_.5} parent=16 // pred_check
          _
        $region19: #{_lambda_.5} parent=16 // pred_check_branch
          %20 = sbr.rel (0) target = $region21
        $region20: #{_lambda_.5} parent=16 // pred_region
          // Predicated region
          $region33: #{_lambda_.5} parent=20 // pred_check
            _
          $region34: #{_lambda_.5} parent=20 // pred_check_branch
            %66 = sbr.rel (0) target = $region36
          $region35: #{_lambda_.5} parent=20 // pred_region
            loop: start=0, step=1, limit=1
            $region37: #{_lambda_.5} parent=35 // loop_pre_header
              _
            $region38: #{_lambda_.5} parent=35 // loop_header
              %s68 = sphi 0, %s72
              %p69 = scmp.ge.s32.totalorder %s68, 1
              %s73 = sphi %s2, %s2
              %s74 = sphi [#allocation3], [#allocation3]
            $region39: #{_lambda_.5} parent=35 // loop_header_branch
              %71 = sbr.rel (%p69) target = $region43
            $region40: #{_lambda_.5} parent=35 // loop_body
              %v75 = vld [vmem:[%s73] sm:$0xff]
              %76 = vst [vmem:[%s74] sm:$0xff] %v75
              %v77 = vld [vmem:[%s73 + $0x8] sm:$0xff]
              %78 = vst [vmem:[%s74 + $0x8] sm:$0xff] %v77
              %v79 = vld [vmem:[%s73 + $0x10] sm:$0xff]
              %80 = vst [vmem:[%s74 + $0x10] sm:$0xff] %v79
              %v81 = vld [vmem:[%s73 + $0x18] sm:$0xff]
              %82 = vst [vmem:[%s74 + $0x18] sm:$0xff] %v81
              %v83 = vld [vmem:[%s73 + $0x20] sm:$0xff]
              %84 = vst [vmem:[%s74 + $0x20] sm:$0xff] %v83
              %v85 = vld [vmem:[%s73 + $0x28] sm:$0xff]
              %86 = vst [vmem:[%s74 + $0x28] sm:$0xff] %v85
              %v87 = vld [vmem:[%s73 + $0x30] sm:$0xff]
              %88 = vst [vmem:[%s74 + $0x30] sm:$0xff] %v87
              %v89 = vld [vmem:[%s73 + $0x38] sm:$0xff]
              %90 = vst [vmem:[%s74 + $0x38] sm:$0xff] %v89
              %v91 = vld [vmem:[%s73 + $0x100] sm:$0xff]
              %92 = vst [vmem:[%s74 + $0x40] sm:$0xff] %v91
              %v93 = vld [vmem:[%s73 + $0x108] sm:$0xff]
              %94 = vst [vmem:[%s74 + $0x48] sm:$0xff] %v93
              %v95 = vld [vmem:[%s73 + $0x110] sm:$0xff]
              %96 = vst [vmem:[%s74 + $0x50] sm:$0xff] %v95
              %v97 = vld [vmem:[%s73 + $0x118] sm:$0xff]
              %98 = vst [vmem:[%s74 + $0x58] sm:$0xff] %v97
              %v99 = vld [vmem:[%s73 + $0x120] sm:$0xff]
              %100 = vst [vmem:[%s74 + $0x60] sm:$0xff] %v99
              %v101 = vld [vmem:[%s73 + $0x128] sm:$0xff]
              %102 = vst [vmem:[%s74 + $0x68] sm:$0xff] %v101
              %v103 = vld [vmem:[%s73 + $0x130] sm:$0xff]
              %104 = vst [vmem:[%s74 + $0x70] sm:$0xff] %v103
              %v105 = vld [vmem:[%s73 + $0x138] sm:$0xff]
              %106 = vst [vmem:[%s74 + $0x78] sm:$0xff] %v105
            $region41: #{_lambda_.5} parent=35 // loop_footer
              %s72 = sadd.s32 1, %s68
            $region42: #{_lambda_.5} parent=35 // loop_footer_branch
              %67 = sbr.rel target = $region38
            $region43: #{_lambda_.5} parent=35 // loop_exit
              _
          $region36: #{_lambda_.5} parent=20 // pred_fallthru
            _
          // Predicated region
          $region44: #{_lambda_.5} parent=20 // pred_check
            _
          $region45: #{_lambda_.5} parent=20 // pred_check_branch
            %108 = sbr.rel target = $region47
          $region46: #{_lambda_.5} parent=20 // pred_region
            _
          $region47: #{_lambda_.5} parent=20 // pred_fallthru
            _
        $region21: #{_lambda_.5} parent=16 // pred_fallthru
          _
        // Predicated region
        $region22: #{_lambda_.5} parent=16 // pred_check
          _
        $region23: #{_lambda_.5} parent=16 // pred_check_branch
          %22 = sbr.rel target = $region25
        $region24: #{_lambda_.5} parent=16 // pred_region
          %s24 = ssub.s32 256, 1
          loop: start=0, step=1, limit=1
          $region26: #{_lambda_.5} parent=24 // loop_pre_header
            _
          $region27: #{_lambda_.5} parent=24 // loop_header
            %s26 = sphi 0, %s30
            %p27 = scmp.ge.s32.totalorder %s26, 1
            %s31 = sphi %s2, %s2
            %s32 = sphi [#allocation3], [#allocation3]
          $region28: #{_lambda_.5} parent=24 // loop_header_branch
            %29 = sbr.rel (%p27) target = $region32
          $region29: #{_lambda_.5} parent=24 // loop_body
            %v33 = vld [vmem:[%s31] sm:%s24]
            %34 = vst [vmem:[%s32] sm:%s24] %v33
            %v35 = vld [vmem:[%s31 + $0x8] sm:%s24]
            %36 = vst [vmem:[%s32 + $0x8] sm:%s24] %v35
            %v37 = vld [vmem:[%s31 + $0x10] sm:%s24]
            %38 = vst [vmem:[%s32 + $0x10] sm:%s24] %v37
            %v39 = vld [vmem:[%s31 + $0x18] sm:%s24]
            %40 = vst [vmem:[%s32 + $0x18] sm:%s24] %v39
            %v41 = vld [vmem:[%s31 + $0x20] sm:%s24]
            %42 = vst [vmem:[%s32 + $0x20] sm:%s24] %v41
            %v43 = vld [vmem:[%s31 + $0x28] sm:%s24]
            %44 = vst [vmem:[%s32 + $0x28] sm:%s24] %v43
            %v45 = vld [vmem:[%s31 + $0x30] sm:%s24]
            %46 = vst [vmem:[%s32 + $0x30] sm:%s24] %v45
            %v47 = vld [vmem:[%s31 + $0x38] sm:%s24]
            %48 = vst [vmem:[%s32 + $0x38] sm:%s24] %v47
            %v49 = vld [vmem:[%s31 + $0x100] sm:%s24]
            %50 = vst [vmem:[%s32 + $0x40] sm:%s24] %v49
            %v51 = vld [vmem:[%s31 + $0x108] sm:%s24]
            %52 = vst [vmem:[%s32 + $0x48] sm:%s24] %v51
            %v53 = vld [vmem:[%s31 + $0x110] sm:%s24]
            %54 = vst [vmem:[%s32 + $0x50] sm:%s24] %v53
            %v55 = vld [vmem:[%s31 + $0x118] sm:%s24]
            %56 = vst [vmem:[%s32 + $0x58] sm:%s24] %v55
            %v57 = vld [vmem:[%s31 + $0x120] sm:%s24]
            %58 = vst [vmem:[%s32 + $0x60] sm:%s24] %v57
            %v59 = vld [vmem:[%s31 + $0x128] sm:%s24]
            %60 = vst [vmem:[%s32 + $0x68] sm:%s24] %v59
            %v61 = vld [vmem:[%s31 + $0x130] sm:%s24]
            %62 = vst [vmem:[%s32 + $0x70] sm:%s24] %v61
            %v63 = vld [vmem:[%s31 + $0x138] sm:%s24]
            %64 = vst [vmem:[%s32 + $0x78] sm:%s24] %v63
          $region30: #{_lambda_.5} parent=24 // loop_footer
            %s30 = sadd.s32 1, %s26
          $region31: #{_lambda_.5} parent=24 // loop_footer_branch
            %25 = sbr.rel target = $region27
          $region32: #{_lambda_.5} parent=24 // loop_exit
            _
        $region25: #{_lambda_.5} parent=16 // pred_fallthru
          _
      $region17: #{_lambda_.5} parent=12 // pred_fallthru
        _
      %109 = vnop
    $region13: #{_lambda_.5} parent=1 // pred_fallthru
      _
    // Predicated region
    $region48: #{_lambda_.5} parent=1 // pred_check
      _
    $region49: #{_lambda_.5} parent=1 // pred_check_branch
      %111 = sbr.rel (0) target = $region51
    $region50: #{_lambda_.5} parent=1 // pred_region
      _
    $region51: #{_lambda_.5} parent=1 // pred_fallthru
      _
    // Predicated region
    $region52: #{_lambda_.5} parent=1 // pred_check
      _
    $region53: #{_lambda_.5} parent=1 // pred_check_branch
      %113 = sbr.rel (0) target = $region55
    $region54: #{_lambda_.5} parent=1 // pred_region
      _
    $region55: #{_lambda_.5} parent=1 // pred_fallthru
      _
    // Predicated region
    $region56: #{_lambda_.5} parent=1 // pred_check
      _
    $region57: #{_lambda_.5} parent=1 // pred_check_branch
      %115 = sbr.rel (0) target = $region59
    $region58: #{_lambda_.5} parent=1 // pred_region
      _
    $region59: #{_lambda_.5} parent=1 // pred_fallthru
      _
    // Predicated region
    $region60: #{_lambda_.5} parent=1 // pred_check
      _
    $region61: #{_lambda_.5} parent=1 // pred_check_branch
      %117 = sbr.rel (0) target = $region63
    $region62: #{_lambda_.5} parent=1 // pred_region
      _
    $region63: #{_lambda_.5} parent=1 // pred_fallthru
      _
    %v119 = vld [vmem:[%s0] sm:$0xf]
    %v120 = vld [vmem:[%s0 + $0x4] sm:$0xf]
    %v121 = vld [vmem:[%s0 + $0x8] sm:$0xf]
    %v122 = vld [vmem:[%s0 + $0xc] sm:$0xf]
    %v123 = vld [vmem:[%s0 + $0x10] sm:$0xf]
    %v124 = vld [vmem:[%s0 + $0x14] sm:$0xf]
    %v125 = vld [vmem:[%s0 + $0x18] sm:$0xf]
    %v126 = vld [vmem:[%s0 + $0x1c] sm:$0xf]
    %v127 = vld [vmem:[%s0 + $0x20] sm:$0xf]
    %v128 = vld [vmem:[%s0 + $0x24] sm:$0xf]
    %v129 = vld [vmem:[%s0 + $0x28] sm:$0xf]
    %v130 = vld [vmem:[%s0 + $0x2c] sm:$0xf]
    %v131 = vld [vmem:[%s0 + $0x30] sm:$0xf]
    %v132 = vld [vmem:[%s0 + $0x34] sm:$0xf]
    %v133 = vld [vmem:[%s0 + $0x38] sm:$0xf]
    %v134 = vld [vmem:[%s0 + $0x3c] sm:$0xf]
    %vm135 = vcmask 584704
    %136 = vst.msk [vmem:[#allocation2] sm:$0xf] %vm135, 0
    %137 = vst.msk [vmem:[#allocation2 + $0x4] sm:$0xf] %vm135, 0
    %138 = vst.msk [vmem:[#allocation2 + $0x8] sm:$0xf] %vm135, 0
    %139 = vst.msk [vmem:[#allocation2 + $0xc] sm:$0xf] %vm135, 0
    %140 = vst.msk [vmem:[#allocation2 + $0x10] sm:$0xf] %vm135, 0
    %141 = vst.msk [vmem:[#allocation2 + $0x14] sm:$0xf] %vm135, 0
    %142 = vst.msk [vmem:[#allocation2 + $0x18] sm:$0xf] %vm135, 0
    %143 = vst.msk [vmem:[#allocation2 + $0x1c] sm:$0xf] %vm135, 0
    %144 = vst.msk [vmem:[#allocation2 + $0x20] sm:$0xf] %vm135, 0
    %145 = vst.msk [vmem:[#allocation2 + $0x24] sm:$0xf] %vm135, 0
    %146 = vst.msk [vmem:[#allocation2 + $0x28] sm:$0xf] %vm135, 0
    %147 = vst.msk [vmem:[#allocation2 + $0x2c] sm:$0xf] %vm135, 0
    %148 = vst.msk [vmem:[#allocation2 + $0x30] sm:$0xf] %vm135, 0
    %149 = vst.msk [vmem:[#allocation2 + $0x34] sm:$0xf] %vm135, 0
    %150 = vst.msk [vmem:[#allocation2 + $0x38] sm:$0xf] %vm135, 0
    %151 = vst.msk [vmem:[#allocation2 + $0x3c] sm:$0xf] %vm135, 0
    %v153 = vshrl.u32 %v119, 16
    %v155 = vrot.slane %v153, 7
    %v156 = vshll.u32 %v119, 16
    %v158 = vor.u32 %v155, %v156
    %v160 = vshrl.u32 %v120, 16
    %v162 = vrot.slane %v160, 7
    %v163 = vshll.u32 %v120, 16
    %v165 = vor.u32 %v162, %v163
    %v167 = vshrl.u32 %v121, 16
    %v169 = vrot.slane %v167, 7
    %v170 = vshll.u32 %v121, 16
    %v172 = vor.u32 %v169, %v170
    %v174 = vshrl.u32 %v122, 16
    %v176 = vrot.slane %v174, 7
    %v177 = vshll.u32 %v122, 16
    %v179 = vor.u32 %v176, %v177
    %v181 = vshrl.u32 %v123, 16
    %v183 = vrot.slane %v181, 7
    %v184 = vshll.u32 %v123, 16
    %v186 = vor.u32 %v183, %v184
    %v188 = vshrl.u32 %v124, 16
    %v190 = vrot.slane %v188, 7
    %v191 = vshll.u32 %v124, 16
    %v193 = vor.u32 %v190, %v191
    %v195 = vshrl.u32 %v125, 16
    %v197 = vrot.slane %v195, 7
    %v198 = vshll.u32 %v125, 16
    %v200 = vor.u32 %v197, %v198
    %v202 = vshrl.u32 %v127, 16
    %v204 = vrot.slane %v202, 7
    %v205 = vshll.u32 %v127, 16
    %v207 = vor.u32 %v204, %v205
    %v209 = vshrl.u32 %v128, 16
    %v211 = vrot.slane %v209, 7
    %v212 = vshll.u32 %v128, 16
    %v214 = vor.u32 %v211, %v212
    %v216 = vshrl.u32 %v129, 16
    %v218 = vrot.slane %v216, 7
    %v219 = vshll.u32 %v129, 16
    %v221 = vor.u32 %v218, %v219
    %v223 = vshrl.u32 %v130, 16
    %v225 = vrot.slane %v223, 7
    %v226 = vshll.u32 %v130, 16
    %v228 = vor.u32 %v225, %v226
    %v230 = vshrl.u32 %v131, 16
    %v232 = vrot.slane %v230, 7
    %v233 = vshll.u32 %v131, 16
    %v235 = vor.u32 %v232, %v233
    %v237 = vshrl.u32 %v132, 16
    %v239 = vrot.slane %v237, 7
    %v240 = vshll.u32 %v132, 16
    %v242 = vor.u32 %v239, %v240
    %v244 = vshrl.u32 %v133, 16
    %v246 = vrot.slane %v244, 7
    %v247 = vshll.u32 %v133, 16
    %v249 = vor.u32 %v246, %v247
    %s264 = scalar_lea.vmem [#allocation2], 4
    %vm265 = vcmask 60416
    %vm266 = vsmask.f32 7938
    %vm267 = vmand %vm265, %vm266
    %v268 = vld [vmem:[%s264] sm:$0xf]
    %v269 = vsel %vm267, %v158, %v268
    %270 = vst [vmem:[%s264] sm:$0xf] %v269
    %v271 = vld [vmem:[%s264 + $0x4] sm:$0xf]
    %v272 = vsel %vm267, %v165, %v271
    %273 = vst [vmem:[%s264 + $0x4] sm:$0xf] %v272
    %v274 = vld [vmem:[%s264 + $0x8] sm:$0xf]
    %v275 = vsel %vm267, %v172, %v274
    %276 = vst [vmem:[%s264 + $0x8] sm:$0xf] %v275
    %v277 = vld [vmem:[%s264 + $0xc] sm:$0xf]
    %v278 = vsel %vm267, %v179, %v277
    %279 = vst [vmem:[%s264 + $0xc] sm:$0xf] %v278
    %v280 = vld [vmem:[%s264 + $0x10] sm:$0xf]
    %v281 = vsel %vm267, %v186, %v280
    %282 = vst [vmem:[%s264 + $0x10] sm:$0xf] %v281
    %v283 = vld [vmem:[%s264 + $0x14] sm:$0xf]
    %v284 = vsel %vm267, %v193, %v283
    %285 = vst [vmem:[%s264 + $0x14] sm:$0xf] %v284
    %v286 = vld [vmem:[%s264 + $0x18] sm:$0xf]
    %v287 = vsel %vm267, %v200, %v286
    %288 = vst [vmem:[%s264 + $0x18] sm:$0xf] %v287
    %v289 = vld [vmem:[%s264 + $0x20] sm:$0xf]
    %v290 = vsel %vm267, %v207, %v289
    %291 = vst [vmem:[%s264 + $0x20] sm:$0xf] %v290
    %v292 = vld [vmem:[%s264 + $0x24] sm:$0xf]
    %v293 = vsel %vm267, %v214, %v292
    %294 = vst [vmem:[%s264 + $0x24] sm:$0xf] %v293
    %v295 = vld [vmem:[%s264 + $0x28] sm:$0xf]
    %v296 = vsel %vm267, %v221, %v295
    %297 = vst [vmem:[%s264 + $0x28] sm:$0xf] %v296
    %v298 = vld [vmem:[%s264 + $0x2c] sm:$0xf]
    %v299 = vsel %vm267, %v228, %v298
    %300 = vst [vmem:[%s264 + $0x2c] sm:$0xf] %v299
    %v301 = vld [vmem:[%s264 + $0x30] sm:$0xf]
    %v302 = vsel %vm267, %v235, %v301
    %303 = vst [vmem:[%s264 + $0x30] sm:$0xf] %v302
    %v304 = vld [vmem:[%s264 + $0x34] sm:$0xf]
    %v305 = vsel %vm267, %v242, %v304
    %306 = vst [vmem:[%s264 + $0x34] sm:$0xf] %v305
    %v307 = vld [vmem:[%s264 + $0x38] sm:$0xf]
    %v308 = vsel %vm267, %v249, %v307
    %309 = vst [vmem:[%s264 + $0x38] sm:$0xf] %v308
    %324 = vrot.lane.b32.xlu0 %v119, 8
    %v325 = vpop.permute.xlu0 %324
    %326 = vrot.lane.b32.xlu0 %v120, 8
    %v327 = vpop.permute.xlu0 %326
    %328 = vrot.lane.b32.xlu0 %v121, 8
    %v329 = vpop.permute.xlu0 %328
    %330 = vrot.lane.b32.xlu0 %v122, 8
    %v331 = vpop.permute.xlu0 %330
    %332 = vrot.lane.b32.xlu0 %v123, 8
    %v333 = vpop.permute.xlu0 %332
    %334 = vrot.lane.b32.xlu0 %v124, 8
    %v335 = vpop.permute.xlu0 %334
    %336 = vrot.lane.b32.xlu0 %v125, 8
    %v337 = vpop.permute.xlu0 %336
    %338 = vrot.lane.b32.xlu0 %v127, 8
    %v339 = vpop.permute.xlu0 %338
    %340 = vrot.lane.b32.xlu0 %v128, 8
    %v341 = vpop.permute.xlu0 %340
    %342 = vrot.lane.b32.xlu0 %v129, 8
    %v343 = vpop.permute.xlu0 %342
    %344 = vrot.lane.b32.xlu0 %v130, 8
    %v345 = vpop.permute.xlu0 %344
    %346 = vrot.lane.b32.xlu0 %v131, 8
    %v347 = vpop.permute.xlu0 %346
    %348 = vrot.lane.b32.xlu0 %v132, 8
    %v349 = vpop.permute.xlu0 %348
    %350 = vrot.lane.b32.xlu0 %v133, 8
    %v351 = vpop.permute.xlu0 %350
    %vm366 = vcmask 126016
    %367 = vst.msk [vmem:[%s264] sm:$0xf] %vm366, %v325
    %368 = vst.msk [vmem:[%s264 + $0x4] sm:$0xf] %vm366, %v327
    %369 = vst.msk [vmem:[%s264 + $0x8] sm:$0xf] %vm366, %v329
    %370 = vst.msk [vmem:[%s264 + $0xc] sm:$0xf] %vm366, %v331
    %371 = vst.msk [vmem:[%s264 + $0x10] sm:$0xf] %vm366, %v333
    %372 = vst.msk [vmem:[%s264 + $0x14] sm:$0xf] %vm366, %v335
    %373 = vst.msk [vmem:[%s264 + $0x18] sm:$0xf] %vm366, %v337
    %374 = vst.msk [vmem:[%s264 + $0x20] sm:$0xf] %vm366, %v339
    %375 = vst.msk [vmem:[%s264 + $0x24] sm:$0xf] %vm366, %v341
    %376 = vst.msk [vmem:[%s264 + $0x28] sm:$0xf] %vm366, %v343
    %377 = vst.msk [vmem:[%s264 + $0x2c] sm:$0xf] %vm366, %v345
    %378 = vst.msk [vmem:[%s264 + $0x30] sm:$0xf] %vm366, %v347
    %379 = vst.msk [vmem:[%s264 + $0x34] sm:$0xf] %vm366, %v349
    %380 = vst.msk [vmem:[%s264 + $0x38] sm:$0xf] %vm366, %v351
    %v381 = vrot.slane %v153, 4
    %v382 = vrot.slane %v156, 5
    %v383 = vor.u32 %v381, %v382
    %v384 = vrot.slane %v383, 4
    %v385 = vrot.slane %v160, 4
    %v386 = vrot.slane %v163, 5
    %v387 = vor.u32 %v385, %v386
    %v388 = vrot.slane %v387, 4
    %v389 = vrot.slane %v167, 4
    %v390 = vrot.slane %v170, 5
    %v391 = vor.u32 %v389, %v390
    %v392 = vrot.slane %v391, 4
    %v393 = vrot.slane %v174, 4
    %v394 = vrot.slane %v177, 5
    %v395 = vor.u32 %v393, %v394
    %v396 = vrot.slane %v395, 4
    %v397 = vrot.slane %v181, 4
    %v398 = vrot.slane %v184, 5
    %v399 = vor.u32 %v397, %v398
    %v400 = vrot.slane %v399, 4
    %v401 = vrot.slane %v188, 4
    %v402 = vrot.slane %v191, 5
    %v403 = vor.u32 %v401, %v402
    %v404 = vrot.slane %v403, 4
    %v405 = vrot.slane %v195, 4
    %v406 = vrot.slane %v198, 5
    %v407 = vor.u32 %v405, %v406
    %v408 = vrot.slane %v407, 4
    %v409 = vrot.slane %v202, 4
    %v410 = vrot.slane %v205, 5
    %v411 = vor.u32 %v409, %v410
    %v412 = vrot.slane %v411, 4
    %v413 = vrot.slane %v209, 4
    %v414 = vrot.slane %v212, 5
    %v415 = vor.u32 %v413, %v414
    %v416 = vrot.slane %v415, 4
    %v417 = vrot.slane %v216, 4
    %v418 = vrot.slane %v219, 5
    %v419 = vor.u32 %v417, %v418
    %v420 = vrot.slane %v419, 4
    %v421 = vrot.slane %v223, 4
    %v422 = vrot.slane %v226, 5
    %v423 = vor.u32 %v421, %v422
    %v424 = vrot.slane %v423, 4
    %v425 = vrot.slane %v230, 4
    %v426 = vrot.slane %v233, 5
    %v427 = vor.u32 %v425, %v426
    %v428 = vrot.slane %v427, 4
    %v429 = vrot.slane %v237, 4
    %v430 = vrot.slane %v240, 5
    %v431 = vor.u32 %v429, %v430
    %v432 = vrot.slane %v431, 4
    %v433 = vrot.slane %v244, 4
    %v434 = vrot.slane %v247, 5
    %v435 = vor.u32 %v433, %v434
    %v436 = vrot.slane %v435, 4
    %437 = vrot.lane.b32.xlu0 %v384, 16
    %v438 = vpop.permute.xlu0 %437
    %439 = vrot.lane.b32.xlu0 %v388, 16
    %v440 = vpop.permute.xlu0 %439
    %441 = vrot.lane.b32.xlu0 %v392, 16
    %v442 = vpop.permute.xlu0 %441
    %443 = vrot.lane.b32.xlu0 %v396, 16
    %v444 = vpop.permute.xlu0 %443
    %445 = vrot.lane.b32.xlu0 %v400, 16
    %v446 = vpop.permute.xlu0 %445
    %447 = vrot.lane.b32.xlu0 %v404, 16
    %v448 = vpop.permute.xlu0 %447
    %449 = vrot.lane.b32.xlu0 %v408, 16
    %v450 = vpop.permute.xlu0 %449
    %451 = vrot.lane.b32.xlu0 %v412, 16
    %v452 = vpop.permute.xlu0 %451
    %453 = vrot.lane.b32.xlu0 %v416, 16
    %v454 = vpop.permute.xlu0 %453
    %455 = vrot.lane.b32.xlu0 %v420, 16
    %v456 = vpop.permute.xlu0 %455
    %457 = vrot.lane.b32.xlu0 %v424, 16
    %v458 = vpop.permute.xlu0 %457
    %459 = vrot.lane.b32.xlu0 %v428, 16
    %v460 = vpop.permute.xlu0 %459
    %461 = vrot.lane.b32.xlu0 %v432, 16
    %v462 = vpop.permute.xlu0 %461
    %463 = vrot.lane.b32.xlu0 %v436, 16
    %v464 = vpop.permute.xlu0 %463
    %vm479 = vcmask 191616
    %vm480 = vsmask.f32 3328
    %vm481 = vmand %vm479, %vm480
    %v482 = vld [vmem:[%s264] sm:$0xf]
    %v483 = vsel %vm481, %v438, %v482
    %484 = vst [vmem:[%s264] sm:$0xf] %v483
    %v485 = vld [vmem:[%s264 + $0x4] sm:$0xf]
    %v486 = vsel %vm481, %v440, %v485
    %487 = vst [vmem:[%s264 + $0x4] sm:$0xf] %v486
    %v488 = vld [vmem:[%s264 + $0x8] sm:$0xf]
    %v489 = vsel %vm481, %v442, %v488
    %490 = vst [vmem:[%s264 + $0x8] sm:$0xf] %v489
    %v491 = vld [vmem:[%s264 + $0xc] sm:$0xf]
    %v492 = vsel %vm481, %v444, %v491
    %493 = vst [vmem:[%s264 + $0xc] sm:$0xf] %v492
    %v494 = vld [vmem:[%s264 + $0x10] sm:$0xf]
    %v495 = vsel %vm481, %v446, %v494
    %496 = vst [vmem:[%s264 + $0x10] sm:$0xf] %v495
    %v497 = vld [vmem:[%s264 + $0x14] sm:$0xf]
    %v498 = vsel %vm481, %v448, %v497
    %499 = vst [vmem:[%s264 + $0x14] sm:$0xf] %v498
    %v500 = vld [vmem:[%s264 + $0x18] sm:$0xf]
    %v501 = vsel %vm481, %v450, %v500
    %502 = vst [vmem:[%s264 + $0x18] sm:$0xf] %v501
    %v503 = vld [vmem:[%s264 + $0x20] sm:$0xf]
    %v504 = vsel %vm481, %v452, %v503
    %505 = vst [vmem:[%s264 + $0x20] sm:$0xf] %v504
    %v506 = vld [vmem:[%s264 + $0x24] sm:$0xf]
    %v507 = vsel %vm481, %v454, %v506
    %508 = vst [vmem:[%s264 + $0x24] sm:$0xf] %v507
    %v509 = vld [vmem:[%s264 + $0x28] sm:$0xf]
    %v510 = vsel %vm481, %v456, %v509
    %511 = vst [vmem:[%s264 + $0x28] sm:$0xf] %v510
    %v512 = vld [vmem:[%s264 + $0x2c] sm:$0xf]
    %v513 = vsel %vm481, %v458, %v512
    %514 = vst [vmem:[%s264 + $0x2c] sm:$0xf] %v513
    %v515 = vld [vmem:[%s264 + $0x30] sm:$0xf]
    %v516 = vsel %vm481, %v460, %v515
    %517 = vst [vmem:[%s264 + $0x30] sm:$0xf] %v516
    %v518 = vld [vmem:[%s264 + $0x34] sm:$0xf]
    %v519 = vsel %vm481, %v462, %v518
    %520 = vst [vmem:[%s264 + $0x34] sm:$0xf] %v519
    %v521 = vld [vmem:[%s264 + $0x38] sm:$0xf]
    %v522 = vsel %vm481, %v464, %v521
    %523 = vst [vmem:[%s264 + $0x38] sm:$0xf] %v522
    %v525 = vshrl.u32 %v126, 16
    %v527 = vrot.slane %v525, 7
    %v528 = vshll.u32 %v126, 16
    %v530 = vor.u32 %v527, %v528
    %v532 = vshrl.u32 %v134, 16
    %v534 = vrot.slane %v532, 7
    %v535 = vshll.u32 %v134, 16
    %v537 = vor.u32 %v534, %v535
    %538 = vrot.lane.b32.xlu0 %v158, 24
    %v539 = vpop.permute.xlu0 %538
    %540 = vrot.lane.b32.xlu0 %v165, 24
    %v541 = vpop.permute.xlu0 %540
    %542 = vrot.lane.b32.xlu0 %v172, 24
    %v543 = vpop.permute.xlu0 %542
    %544 = vrot.lane.b32.xlu0 %v179, 24
    %v545 = vpop.permute.xlu0 %544
    %546 = vrot.lane.b32.xlu0 %v186, 24
    %v547 = vpop.permute.xlu0 %546
    %548 = vrot.lane.b32.xlu0 %v193, 24
    %v549 = vpop.permute.xlu0 %548
    %550 = vrot.lane.b32.xlu0 %v200, 24
    %v551 = vpop.permute.xlu0 %550
    %552 = vrot.lane.b32.xlu0 %v530, 24
    %v553 = vpop.permute.xlu0 %552
    %554 = vrot.lane.b32.xlu0 %v207, 24
    %v555 = vpop.permute.xlu0 %554
    %556 = vrot.lane.b32.xlu0 %v214, 24
    %v557 = vpop.permute.xlu0 %556
    %558 = vrot.lane.b32.xlu0 %v221, 24
    %v559 = vpop.permute.xlu0 %558
    %560 = vrot.lane.b32.xlu0 %v228, 24
    %v561 = vpop.permute.xlu0 %560
    %562 = vrot.lane.b32.xlu0 %v235, 24
    %v563 = vpop.permute.xlu0 %562
    %564 = vrot.lane.b32.xlu0 %v242, 24
    %v565 = vpop.permute.xlu0 %564
    %566 = vrot.lane.b32.xlu0 %v249, 24
    %v567 = vpop.permute.xlu0 %566
    %568 = vrot.lane.b32.xlu0 %v537, 24
    %v569 = vpop.permute.xlu0 %568
    %vm586 = vcmask 257216
    %vm587 = vmand %vm586, %vm266
    %v588 = vld [vmem:[#allocation2] sm:$0xf]
    %v589 = vsel %vm587, %v539, %v588
    %590 = vst [vmem:[#allocation2] sm:$0xf] %v589
    %v591 = vld [vmem:[#allocation2 + $0x4] sm:$0xf]
    %v592 = vsel %vm587, %v541, %v591
    %593 = vst [vmem:[#allocation2 + $0x4] sm:$0xf] %v592
    %v594 = vld [vmem:[#allocation2 + $0x8] sm:$0xf]
    %v595 = vsel %vm587, %v543, %v594
    %596 = vst [vmem:[#allocation2 + $0x8] sm:$0xf] %v595
    %v597 = vld [vmem:[#allocation2 + $0xc] sm:$0xf]
    %v598 = vsel %vm587, %v545, %v597
    %599 = vst [vmem:[#allocation2 + $0xc] sm:$0xf] %v598
    %v600 = vld [vmem:[#allocation2 + $0x10] sm:$0xf]
    %v601 = vsel %vm587, %v547, %v600
    %602 = vst [vmem:[#allocation2 + $0x10] sm:$0xf] %v601
    %v603 = vld [vmem:[#allocation2 + $0x14] sm:$0xf]
    %v604 = vsel %vm587, %v549, %v603
    %605 = vst [vmem:[#allocation2 + $0x14] sm:$0xf] %v604
    %v606 = vld [vmem:[#allocation2 + $0x18] sm:$0xf]
    %v607 = vsel %vm587, %v551, %v606
    %608 = vst [vmem:[#allocation2 + $0x18] sm:$0xf] %v607
    %v609 = vld [vmem:[#allocation2 + $0x1c] sm:$0xf]
    %v610 = vsel %vm587, %v553, %v609
    %611 = vst [vmem:[#allocation2 + $0x1c] sm:$0xf] %v610
    %v612 = vld [vmem:[#allocation2 + $0x20] sm:$0xf]
    %v613 = vsel %vm587, %v555, %v612
    %614 = vst [vmem:[#allocation2 + $0x20] sm:$0xf] %v613
    %v615 = vld [vmem:[#allocation2 + $0x24] sm:$0xf]
    %v616 = vsel %vm587, %v557, %v615
    %617 = vst [vmem:[#allocation2 + $0x24] sm:$0xf] %v616
    %v618 = vld [vmem:[#allocation2 + $0x28] sm:$0xf]
    %v619 = vsel %vm587, %v559, %v618
    %620 = vst [vmem:[#allocation2 + $0x28] sm:$0xf] %v619
    %v621 = vld [vmem:[#allocation2 + $0x2c] sm:$0xf]
    %v622 = vsel %vm587, %v561, %v621
    %623 = vst [vmem:[#allocation2 + $0x2c] sm:$0xf] %v622
    %v624 = vld [vmem:[#allocation2 + $0x30] sm:$0xf]
    %v625 = vsel %vm587, %v563, %v624
    %626 = vst [vmem:[#allocation2 + $0x30] sm:$0xf] %v625
    %v627 = vld [vmem:[#allocation2 + $0x34] sm:$0xf]
    %v628 = vsel %vm587, %v565, %v627
    %629 = vst [vmem:[#allocation2 + $0x34] sm:$0xf] %v628
    %v630 = vld [vmem:[#allocation2 + $0x38] sm:$0xf]
    %v631 = vsel %vm587, %v567, %v630
    %632 = vst [vmem:[#allocation2 + $0x38] sm:$0xf] %v631
    %v633 = vld [vmem:[#allocation2 + $0x3c] sm:$0xf]
    %v634 = vsel %vm587, %v569, %v633
    %635 = vst [vmem:[#allocation2 + $0x3c] sm:$0xf] %v634
    %638 = vrot.lane.b32.xlu0 %v119, 32
    %v639 = vpop.permute.xlu0 %638
    %640 = vrot.lane.b32.xlu0 %v120, 32
    %v641 = vpop.permute.xlu0 %640
    %642 = vrot.lane.b32.xlu0 %v121, 32
    %v643 = vpop.permute.xlu0 %642
    %644 = vrot.lane.b32.xlu0 %v122, 32
    %v645 = vpop.permute.xlu0 %644
    %646 = vrot.lane.b32.xlu0 %v123, 32
    %v647 = vpop.permute.xlu0 %646
    %648 = vrot.lane.b32.xlu0 %v124, 32
    %v649 = vpop.permute.xlu0 %648
    %650 = vrot.lane.b32.xlu0 %v125, 32
    %v651 = vpop.permute.xlu0 %650
    %652 = vrot.lane.b32.xlu0 %v126, 32
    %v653 = vpop.permute.xlu0 %652
    %654 = vrot.lane.b32.xlu0 %v127, 32
    %v655 = vpop.permute.xlu0 %654
    %656 = vrot.lane.b32.xlu0 %v128, 32
    %v657 = vpop.permute.xlu0 %656
    %658 = vrot.lane.b32.xlu0 %v129, 32
    %v659 = vpop.permute.xlu0 %658
    %660 = vrot.lane.b32.xlu0 %v130, 32
    %v661 = vpop.permute.xlu0 %660
    %662 = vrot.lane.b32.xlu0 %v131, 32
    %v663 = vpop.permute.xlu0 %662
    %664 = vrot.lane.b32.xlu0 %v132, 32
    %v665 = vpop.permute.xlu0 %664
    %666 = vrot.lane.b32.xlu0 %v133, 32
    %v667 = vpop.permute.xlu0 %666
    %668 = vrot.lane.b32.xlu0 %v134, 32
    %v669 = vpop.permute.xlu0 %668
    %vm686 = vcmask 322816
    %687 = vst.msk [vmem:[#allocation2] sm:$0xf] %vm686, %v639
    %688 = vst.msk [vmem:[#allocation2 + $0x4] sm:$0xf] %vm686, %v641
    %689 = vst.msk [vmem:[#allocation2 + $0x8] sm:$0xf] %vm686, %v643
    %690 = vst.msk [vmem:[#allocation2 + $0xc] sm:$0xf] %vm686, %v645
    %691 = vst.msk [vmem:[#allocation2 + $0x10] sm:$0xf] %vm686, %v647
    %692 = vst.msk [vmem:[#allocation2 + $0x14] sm:$0xf] %vm686, %v649
    %693 = vst.msk [vmem:[#allocation2 + $0x18] sm:$0xf] %vm686, %v651
    %694 = vst.msk [vmem:[#allocation2 + $0x1c] sm:$0xf] %vm686, %v653
    %695 = vst.msk [vmem:[#allocation2 + $0x20] sm:$0xf] %vm686, %v655
    %696 = vst.msk [vmem:[#allocation2 + $0x24] sm:$0xf] %vm686, %v657
    %697 = vst.msk [vmem:[#allocation2 + $0x28] sm:$0xf] %vm686, %v659
    %698 = vst.msk [vmem:[#allocation2 + $0x2c] sm:$0xf] %vm686, %v661
    %699 = vst.msk [vmem:[#allocation2 + $0x30] sm:$0xf] %vm686, %v663
    %700 = vst.msk [vmem:[#allocation2 + $0x34] sm:$0xf] %vm686, %v665
    %701 = vst.msk [vmem:[#allocation2 + $0x38] sm:$0xf] %vm686, %v667
    %702 = vst.msk [vmem:[#allocation2 + $0x3c] sm:$0xf] %vm686, %v669
    %v703 = vrot.slane %v525, 4
    %v704 = vrot.slane %v528, 5
    %v705 = vor.u32 %v703, %v704
    %v706 = vrot.slane %v705, 4
    %v707 = vrot.slane %v532, 4
    %v708 = vrot.slane %v535, 5
    %v709 = vor.u32 %v707, %v708
    %v710 = vrot.slane %v709, 4
    %711 = vrot.lane.b32.xlu0 %v384, 40
    %v712 = vpop.permute.xlu0 %711
    %713 = vrot.lane.b32.xlu0 %v388, 40
    %v714 = vpop.permute.xlu0 %713
    %715 = vrot.lane.b32.xlu0 %v392, 40
    %v716 = vpop.permute.xlu0 %715
    %717 = vrot.lane.b32.xlu0 %v396, 40
    %v718 = vpop.permute.xlu0 %717
    %719 = vrot.lane.b32.xlu0 %v400, 40
    %v720 = vpop.permute.xlu0 %719
    %721 = vrot.lane.b32.xlu0 %v404, 40
    %v722 = vpop.permute.xlu0 %721
    %723 = vrot.lane.b32.xlu0 %v408, 40
    %v724 = vpop.permute.xlu0 %723
    %725 = vrot.lane.b32.xlu0 %v706, 40
    %v726 = vpop.permute.xlu0 %725
    %727 = vrot.lane.b32.xlu0 %v412, 40
    %v728 = vpop.permute.xlu0 %727
    %729 = vrot.lane.b32.xlu0 %v416, 40
    %v730 = vpop.permute.xlu0 %729
    %731 = vrot.lane.b32.xlu0 %v420, 40
    %v732 = vpop.permute.xlu0 %731
    %733 = vrot.lane.b32.xlu0 %v424, 40
    %v734 = vpop.permute.xlu0 %733
    %735 = vrot.lane.b32.xlu0 %v428, 40
    %v736 = vpop.permute.xlu0 %735
    %737 = vrot.lane.b32.xlu0 %v432, 40
    %v738 = vpop.permute.xlu0 %737
    %739 = vrot.lane.b32.xlu0 %v436, 40
    %v740 = vpop.permute.xlu0 %739
    %741 = vrot.lane.b32.xlu0 %v710, 40
    %v742 = vpop.permute.xlu0 %741
    %vm759 = vcmask 388416
    %vm760 = vmand %vm759, %vm480
    %v761 = vld [vmem:[#allocation2] sm:$0xf]
    %v762 = vsel %vm760, %v712, %v761
    %763 = vst [vmem:[#allocation2] sm:$0xf] %v762
    %v764 = vld [vmem:[#allocation2 + $0x4] sm:$0xf]
    %v765 = vsel %vm760, %v714, %v764
    %766 = vst [vmem:[#allocation2 + $0x4] sm:$0xf] %v765
    %v767 = vld [vmem:[#allocation2 + $0x8] sm:$0xf]
    %v768 = vsel %vm760, %v716, %v767
    %769 = vst [vmem:[#allocation2 + $0x8] sm:$0xf] %v768
    %v770 = vld [vmem:[#allocation2 + $0xc] sm:$0xf]
    %v771 = vsel %vm760, %v718, %v770
    %772 = vst [vmem:[#allocation2 + $0xc] sm:$0xf] %v771
    %v773 = vld [vmem:[#allocation2 + $0x10] sm:$0xf]
    %v774 = vsel %vm760, %v720, %v773
    %775 = vst [vmem:[#allocation2 + $0x10] sm:$0xf] %v774
    %v776 = vld [vmem:[#allocation2 + $0x14] sm:$0xf]
    %v777 = vsel %vm760, %v722, %v776
    %778 = vst [vmem:[#allocation2 + $0x14] sm:$0xf] %v777
    %v779 = vld [vmem:[#allocation2 + $0x18] sm:$0xf]
    %v780 = vsel %vm760, %v724, %v779
    %781 = vst [vmem:[#allocation2 + $0x18] sm:$0xf] %v780
    %v782 = vld [vmem:[#allocation2 + $0x1c] sm:$0xf]
    %v783 = vsel %vm760, %v726, %v782
    %784 = vst [vmem:[#allocation2 + $0x1c] sm:$0xf] %v783
    %v785 = vld [vmem:[#allocation2 + $0x20] sm:$0xf]
    %v786 = vsel %vm760, %v728, %v785
    %787 = vst [vmem:[#allocation2 + $0x20] sm:$0xf] %v786
    %v788 = vld [vmem:[#allocation2 + $0x24] sm:$0xf]
    %v789 = vsel %vm760, %v730, %v788
    %790 = vst [vmem:[#allocation2 + $0x24] sm:$0xf] %v789
    %v791 = vld [vmem:[#allocation2 + $0x28] sm:$0xf]
    %v792 = vsel %vm760, %v732, %v791
    %793 = vst [vmem:[#allocation2 + $0x28] sm:$0xf] %v792
    %v794 = vld [vmem:[#allocation2 + $0x2c] sm:$0xf]
    %v795 = vsel %vm760, %v734, %v794
    %796 = vst [vmem:[#allocation2 + $0x2c] sm:$0xf] %v795
    %v797 = vld [vmem:[#allocation2 + $0x30] sm:$0xf]
    %v798 = vsel %vm760, %v736, %v797
    %799 = vst [vmem:[#allocation2 + $0x30] sm:$0xf] %v798
    %v800 = vld [vmem:[#allocation2 + $0x34] sm:$0xf]
    %v801 = vsel %vm760, %v738, %v800
    %802 = vst [vmem:[#allocation2 + $0x34] sm:$0xf] %v801
    %v803 = vld [vmem:[#allocation2 + $0x38] sm:$0xf]
    %v804 = vsel %vm760, %v740, %v803
    %805 = vst [vmem:[#allocation2 + $0x38] sm:$0xf] %v804
    %v806 = vld [vmem:[#allocation2 + $0x3c] sm:$0xf]
    %v807 = vsel %vm760, %v742, %v806
    %808 = vst [vmem:[#allocation2 + $0x3c] sm:$0xf] %v807
    %809 = vrot.lane.b32.xlu0 %v165, 48
    %v810 = vpop.permute.xlu0 %809
    %811 = vrot.lane.b32.xlu0 %v172, 48
    %v812 = vpop.permute.xlu0 %811
    %813 = vrot.lane.b32.xlu0 %v179, 48
    %v814 = vpop.permute.xlu0 %813
    %815 = vrot.lane.b32.xlu0 %v186, 48
    %v816 = vpop.permute.xlu0 %815
    %817 = vrot.lane.b32.xlu0 %v193, 48
    %v818 = vpop.permute.xlu0 %817
    %819 = vrot.lane.b32.xlu0 %v200, 48
    %v820 = vpop.permute.xlu0 %819
    %821 = vrot.lane.b32.xlu0 %v530, 48
    %v822 = vpop.permute.xlu0 %821
    %823 = vrot.lane.b32.xlu0 %v214, 48
    %v824 = vpop.permute.xlu0 %823
    %825 = vrot.lane.b32.xlu0 %v221, 48
    %v826 = vpop.permute.xlu0 %825
    %827 = vrot.lane.b32.xlu0 %v228, 48
    %v828 = vpop.permute.xlu0 %827
    %829 = vrot.lane.b32.xlu0 %v235, 48
    %v830 = vpop.permute.xlu0 %829
    %831 = vrot.lane.b32.xlu0 %v242, 48
    %v832 = vpop.permute.xlu0 %831
    %833 = vrot.lane.b32.xlu0 %v249, 48
    %v834 = vpop.permute.xlu0 %833
    %835 = vrot.lane.b32.xlu0 %v537, 48
    %v836 = vpop.permute.xlu0 %835
    %vm851 = vcmask 454016
    %vm852 = vmand %vm851, %vm266
    %v853 = vld [vmem:[#allocation2] sm:$0xf]
    %v854 = vsel %vm852, %v810, %v853
    %855 = vst [vmem:[#allocation2] sm:$0xf] %v854
    %v856 = vld [vmem:[#allocation2 + $0x4] sm:$0xf]
    %v857 = vsel %vm852, %v812, %v856
    %858 = vst [vmem:[#allocation2 + $0x4] sm:$0xf] %v857
    %v859 = vld [vmem:[#allocation2 + $0x8] sm:$0xf]
    %v860 = vsel %vm852, %v814, %v859
    %861 = vst [vmem:[#allocation2 + $0x8] sm:$0xf] %v860
    %v862 = vld [vmem:[#allocation2 + $0xc] sm:$0xf]
    %v863 = vsel %vm852, %v816, %v862
    %864 = vst [vmem:[#allocation2 + $0xc] sm:$0xf] %v863
    %v865 = vld [vmem:[#allocation2 + $0x10] sm:$0xf]
    %v866 = vsel %vm852, %v818, %v865
    %867 = vst [vmem:[#allocation2 + $0x10] sm:$0xf] %v866
    %v868 = vld [vmem:[#allocation2 + $0x14] sm:$0xf]
    %v869 = vsel %vm852, %v820, %v868
    %870 = vst [vmem:[#allocation2 + $0x14] sm:$0xf] %v869
    %v871 = vld [vmem:[#allocation2 + $0x18] sm:$0xf]
    %v872 = vsel %vm852, %v822, %v871
    %873 = vst [vmem:[#allocation2 + $0x18] sm:$0xf] %v872
    %v874 = vld [vmem:[#allocation2 + $0x20] sm:$0xf]
    %v875 = vsel %vm852, %v824, %v874
    %876 = vst [vmem:[#allocation2 + $0x20] sm:$0xf] %v875
    %v877 = vld [vmem:[#allocation2 + $0x24] sm:$0xf]
    %v878 = vsel %vm852, %v826, %v877
    %879 = vst [vmem:[#allocation2 + $0x24] sm:$0xf] %v878
    %v880 = vld [vmem:[#allocation2 + $0x28] sm:$0xf]
    %v881 = vsel %vm852, %v828, %v880
    %882 = vst [vmem:[#allocation2 + $0x28] sm:$0xf] %v881
    %v883 = vld [vmem:[#allocation2 + $0x2c] sm:$0xf]
    %v884 = vsel %vm852, %v830, %v883
    %885 = vst [vmem:[#allocation2 + $0x2c] sm:$0xf] %v884
    %v886 = vld [vmem:[#allocation2 + $0x30] sm:$0xf]
    %v887 = vsel %vm852, %v832, %v886
    %888 = vst [vmem:[#allocation2 + $0x30] sm:$0xf] %v887
    %v889 = vld [vmem:[#allocation2 + $0x34] sm:$0xf]
    %v890 = vsel %vm852, %v834, %v889
    %891 = vst [vmem:[#allocation2 + $0x34] sm:$0xf] %v890
    %v892 = vld [vmem:[#allocation2 + $0x38] sm:$0xf]
    %v893 = vsel %vm852, %v836, %v892
    %894 = vst [vmem:[#allocation2 + $0x38] sm:$0xf] %v893
    %895 = vrot.lane.b32.xlu0 %v120, 56
    %v896 = vpop.permute.xlu0 %895
    %897 = vrot.lane.b32.xlu0 %v121, 56
    %v898 = vpop.permute.xlu0 %897
    %899 = vrot.lane.b32.xlu0 %v122, 56
    %v900 = vpop.permute.xlu0 %899
    %901 = vrot.lane.b32.xlu0 %v123, 56
    %v902 = vpop.permute.xlu0 %901
    %903 = vrot.lane.b32.xlu0 %v124, 56
    %v904 = vpop.permute.xlu0 %903
    %905 = vrot.lane.b32.xlu0 %v125, 56
    %v906 = vpop.permute.xlu0 %905
    %907 = vrot.lane.b32.xlu0 %v126, 56
    %v908 = vpop.permute.xlu0 %907
    %909 = vrot.lane.b32.xlu0 %v128, 56
    %v910 = vpop.permute.xlu0 %909
    %911 = vrot.lane.b32.xlu0 %v129, 56
    %v912 = vpop.permute.xlu0 %911
    %913 = vrot.lane.b32.xlu0 %v130, 56
    %v914 = vpop.permute.xlu0 %913
    %915 = vrot.lane.b32.xlu0 %v131, 56
    %v916 = vpop.permute.xlu0 %915
    %917 = vrot.lane.b32.xlu0 %v132, 56
    %v918 = vpop.permute.xlu0 %917
    %919 = vrot.lane.b32.xlu0 %v133, 56
    %v920 = vpop.permute.xlu0 %919
    %921 = vrot.lane.b32.xlu0 %v134, 56
    %v922 = vpop.permute.xlu0 %921
    %vm937 = vcmask 519616
    %938 = vst.msk [vmem:[#allocation2] sm:$0xf] %vm937, %v896
    %939 = vst.msk [vmem:[#allocation2 + $0x4] sm:$0xf] %vm937, %v898
    %940 = vst.msk [vmem:[#allocation2 + $0x8] sm:$0xf] %vm937, %v900
    %941 = vst.msk [vmem:[#allocation2 + $0xc] sm:$0xf] %vm937, %v902
    %942 = vst.msk [vmem:[#allocation2 + $0x10] sm:$0xf] %vm937, %v904
    %943 = vst.msk [vmem:[#allocation2 + $0x14] sm:$0xf] %vm937, %v906
    %944 = vst.msk [vmem:[#allocation2 + $0x18] sm:$0xf] %vm937, %v908
    %945 = vst.msk [vmem:[#allocation2 + $0x20] sm:$0xf] %vm937, %v910
    %946 = vst.msk [vmem:[#allocation2 + $0x24] sm:$0xf] %vm937, %v912
    %947 = vst.msk [vmem:[#allocation2 + $0x28] sm:$0xf] %vm937, %v914
    %948 = vst.msk [vmem:[#allocation2 + $0x2c] sm:$0xf] %vm937, %v916
    %949 = vst.msk [vmem:[#allocation2 + $0x30] sm:$0xf] %vm937, %v918
    %950 = vst.msk [vmem:[#allocation2 + $0x34] sm:$0xf] %vm937, %v920
    %951 = vst.msk [vmem:[#allocation2 + $0x38] sm:$0xf] %vm937, %v922
    %952 = vrot.lane.b32.xlu0 %v388, 64
    %v953 = vpop.permute.xlu0 %952
    %954 = vrot.lane.b32.xlu0 %v392, 64
    %v955 = vpop.permute.xlu0 %954
    %956 = vrot.lane.b32.xlu0 %v396, 64
    %v957 = vpop.permute.xlu0 %956
    %958 = vrot.lane.b32.xlu0 %v400, 64
    %v959 = vpop.permute.xlu0 %958
    %960 = vrot.lane.b32.xlu0 %v404, 64
    %v961 = vpop.permute.xlu0 %960
    %962 = vrot.lane.b32.xlu0 %v408, 64
    %v963 = vpop.permute.xlu0 %962
    %964 = vrot.lane.b32.xlu0 %v706, 64
    %v965 = vpop.permute.xlu0 %964
    %966 = vrot.lane.b32.xlu0 %v416, 64
    %v967 = vpop.permute.xlu0 %966
    %968 = vrot.lane.b32.xlu0 %v420, 64
    %v969 = vpop.permute.xlu0 %968
    %970 = vrot.lane.b32.xlu0 %v424, 64
    %v971 = vpop.permute.xlu0 %970
    %972 = vrot.lane.b32.xlu0 %v428, 64
    %v973 = vpop.permute.xlu0 %972
    %974 = vrot.lane.b32.xlu0 %v432, 64
    %v975 = vpop.permute.xlu0 %974
    %976 = vrot.lane.b32.xlu0 %v436, 64
    %v977 = vpop.permute.xlu0 %976
    %978 = vrot.lane.b32.xlu0 %v710, 64
    %v979 = vpop.permute.xlu0 %978
    %vm994 = vcmask 585216
    %vm995 = vmand %vm994, %vm480
    %v996 = vld [vmem:[#allocation2] sm:$0xf]
    %v997 = vsel %vm995, %v953, %v996
    %998 = vst [vmem:[#allocation2] sm:$0xf] %v997
    %v999 = vld [vmem:[#allocation2 + $0x4] sm:$0xf]
    %v1000 = vsel %vm995, %v955, %v999
    %1001 = vst [vmem:[#allocation2 + $0x4] sm:$0xf] %v1000
    %v1002 = vld [vmem:[#allocation2 + $0x8] sm:$0xf]
    %v1003 = vsel %vm995, %v957, %v1002
    %1004 = vst [vmem:[#allocation2 + $0x8] sm:$0xf] %v1003
    %v1005 = vld [vmem:[#allocation2 + $0xc] sm:$0xf]
    %v1006 = vsel %vm995, %v959, %v1005
    %1007 = vst [vmem:[#allocation2 + $0xc] sm:$0xf] %v1006
    %v1008 = vld [vmem:[#allocation2 + $0x10] sm:$0xf]
    %v1009 = vsel %vm995, %v961, %v1008
    %1010 = vst [vmem:[#allocation2 + $0x10] sm:$0xf] %v1009
    %v1011 = vld [vmem:[#allocation2 + $0x14] sm:$0xf]
    %v1012 = vsel %vm995, %v963, %v1011
    %1013 = vst [vmem:[#allocation2 + $0x14] sm:$0xf] %v1012
    %v1014 = vld [vmem:[#allocation2 + $0x18] sm:$0xf]
    %v1015 = vsel %vm995, %v965, %v1014
    %1016 = vst [vmem:[#allocation2 + $0x18] sm:$0xf] %v1015
    %v1017 = vld [vmem:[#allocation2 + $0x20] sm:$0xf]
    %v1018 = vsel %vm995, %v967, %v1017
    %1019 = vst [vmem:[#allocation2 + $0x20] sm:$0xf] %v1018
    %v1020 = vld [vmem:[#allocation2 + $0x24] sm:$0xf]
    %v1021 = vsel %vm995, %v969, %v1020
    %1022 = vst [vmem:[#allocation2 + $0x24] sm:$0xf] %v1021
    %v1023 = vld [vmem:[#allocation2 + $0x28] sm:$0xf]
    %v1024 = vsel %vm995, %v971, %v1023
    %1025 = vst [vmem:[#allocation2 + $0x28] sm:$0xf] %v1024
    %v1026 = vld [vmem:[#allocation2 + $0x2c] sm:$0xf]
    %v1027 = vsel %vm995, %v973, %v1026
    %1028 = vst [vmem:[#allocation2 + $0x2c] sm:$0xf] %v1027
    %v1029 = vld [vmem:[#allocation2 + $0x30] sm:$0xf]
    %v1030 = vsel %vm995, %v975, %v1029
    %1031 = vst [vmem:[#allocation2 + $0x30] sm:$0xf] %v1030
    %v1032 = vld [vmem:[#allocation2 + $0x34] sm:$0xf]
    %v1033 = vsel %vm995, %v977, %v1032
    %1034 = vst [vmem:[#allocation2 + $0x34] sm:$0xf] %v1033
    %v1035 = vld [vmem:[#allocation2 + $0x38] sm:$0xf]
    %v1036 = vsel %vm995, %v979, %v1035
    %1037 = vst [vmem:[#allocation2 + $0x38] sm:$0xf] %v1036
    %v1038 = vld [vmem:[#allocation2] sm:$0xf]
    %v1039 = vld [vmem:[#allocation2 + $0x4] sm:$0xf]
    %v1040 = vld [vmem:[#allocation2 + $0x8] sm:$0xf]
    %v1041 = vld [vmem:[#allocation2 + $0xc] sm:$0xf]
    %v1042 = vld [vmem:[#allocation2 + $0x10] sm:$0xf]
    %v1043 = vld [vmem:[#allocation2 + $0x14] sm:$0xf]
    %v1044 = vld [vmem:[#allocation2 + $0x18] sm:$0xf]
    %v1045 = vld [vmem:[#allocation2 + $0x1c] sm:$0xf]
    %v1046 = vld [vmem:[#allocation2 + $0x20] sm:$0xf]
    %v1047 = vld [vmem:[#allocation2 + $0x24] sm:$0xf]
    %v1048 = vld [vmem:[#allocation2 + $0x28] sm:$0xf]
    %v1049 = vld [vmem:[#allocation2 + $0x2c] sm:$0xf]
    %v1050 = vld [vmem:[#allocation2 + $0x30] sm:$0xf]
    %v1051 = vld [vmem:[#allocation2 + $0x34] sm:$0xf]
    %v1052 = vld [vmem:[#allocation2 + $0x38] sm:$0xf]
    %v1053 = vld [vmem:[#allocation2 + $0x3c] sm:$0xf]
    %v1054 = vld [vmem:[%s1] sm:$0xf]
    %v1055 = vld [vmem:[%s1 + $0x4] sm:$0xf]
    %v1056 = vld [vmem:[%s1 + $0x8] sm:$0xf]
    %v1057 = vld [vmem:[%s1 + $0xc] sm:$0xf]
    %v1058 = vld [vmem:[%s1 + $0x10] sm:$0xf]
    %v1059 = vld [vmem:[%s1 + $0x14] sm:$0xf]
    %v1060 = vld [vmem:[%s1 + $0x18] sm:$0xf]
    %v1061 = vld [vmem:[%s1 + $0x1c] sm:$0xf]
    %v1062 = vld [vmem:[%s1 + $0x20] sm:$0xf]
    %v1063 = vld [vmem:[#allocation3] sm:$0xff]
    %v1064 = vld [vmem:[#allocation3 + $0x8] sm:$0xff]
    %v1065 = vld [vmem:[#allocation3 + $0x10] sm:$0xff]
    %v1066 = vld [vmem:[#allocation3 + $0x18] sm:$0xff]
    %v1067 = vld [vmem:[#allocation3 + $0x20] sm:$0xff]
    %v1068 = vld [vmem:[#allocation3 + $0x28] sm:$0xff]
    %v1069 = vld [vmem:[#allocation3 + $0x30] sm:$0xff]
    %v1070 = vld [vmem:[#allocation3 + $0x38] sm:$0xff]
    %v1071 = vld [vmem:[#allocation3 + $0x40] sm:$0xff]
    %v1072 = vld [vmem:[#allocation3 + $0x48] sm:$0xff]
    %v1073 = vld [vmem:[#allocation3 + $0x50] sm:$0xff]
    %v1074 = vld [vmem:[#allocation3 + $0x58] sm:$0xff]
    %v1075 = vld [vmem:[#allocation3 + $0x60] sm:$0xff]
    %v1076 = vld [vmem:[#allocation3 + $0x68] sm:$0xff]
    %v1077 = vld [vmem:[#allocation3 + $0x70] sm:$0xff]
    %v1078 = vld [vmem:[#allocation3 + $0x78] sm:$0xff]
    %v1079 = vld [vmem:[%s3] sm:$0x1]
    %v1081 = vperm.slane %v1079, 0
    %v1083 = vmul.f32 %v1063, %v1081
    %v1084 = vmul.f32 %v1064, %v1081
    %v1085 = vmul.f32 %v1065, %v1081
    %v1086 = vmul.f32 %v1066, %v1081
    %v1087 = vmul.f32 %v1067, %v1081
    %v1088 = vmul.f32 %v1068, %v1081
    %v1089 = vmul.f32 %v1069, %v1081
    %v1090 = vmul.f32 %v1070, %v1081
    %v1091 = vmul.f32 %v1071, %v1081
    %v1092 = vmul.f32 %v1072, %v1081
    %v1093 = vmul.f32 %v1073, %v1081
    %v1094 = vmul.f32 %v1074, %v1081
    %v1095 = vmul.f32 %v1075, %v1081
    %v1096 = vmul.f32 %v1076, %v1081
    %v1097 = vmul.f32 %v1077, %v1081
    %v1098 = vmul.f32 %v1078, %v1081
    %v1099 = vld [vmem:[%s4] sm:$0x1]
    %v1101 = vperm.slane %v1099, 0
    %v1103 = vadd.f32 %v1083, %v1101
    %v1104 = vadd.f32 %v1084, %v1101
    %v1105 = vadd.f32 %v1085, %v1101
    %v1106 = vadd.f32 %v1086, %v1101
    %v1107 = vadd.f32 %v1087, %v1101
    %v1108 = vadd.f32 %v1088, %v1101
    %v1109 = vadd.f32 %v1089, %v1101
    %v1110 = vadd.f32 %v1090, %v1101
    %v1111 = vadd.f32 %v1091, %v1101
    %v1112 = vadd.f32 %v1092, %v1101
    %v1113 = vadd.f32 %v1093, %v1101
    %v1114 = vadd.f32 %v1094, %v1101
    %v1115 = vadd.f32 %v1095, %v1101
    %v1116 = vadd.f32 %v1096, %v1101
    %v1117 = vadd.f32 %v1097, %v1101
    %v1118 = vadd.f32 %v1098, %v1101
    %v1119 = vmax.f32 %v1103, 0.0
    %v1120 = vmax.f32 %v1104, 0.0
    %v1121 = vmax.f32 %v1105, 0.0
    %v1122 = vmax.f32 %v1106, 0.0
    %v1123 = vmax.f32 %v1107, 0.0
    %v1124 = vmax.f32 %v1108, 0.0
    %v1125 = vmax.f32 %v1109, 0.0
    %v1126 = vmax.f32 %v1110, 0.0
    %v1127 = vmax.f32 %v1111, 0.0
    %v1128 = vmax.f32 %v1112, 0.0
    %v1129 = vmax.f32 %v1113, 0.0
    %v1130 = vmax.f32 %v1114, 0.0
    %v1131 = vmax.f32 %v1115, 0.0
    %v1132 = vmax.f32 %v1116, 0.0
    %v1133 = vmax.f32 %v1117, 0.0
    %v1134 = vmax.f32 %v1118, 0.0
    %v1135 = vpack.c.bf16 %v1120, %v1119
    %v1136 = vpack.c.bf16 %v1122, %v1121
    %v1137 = vpack.c.bf16 %v1124, %v1123
    %v1138 = vpack.c.bf16 %v1126, %v1125
    %v1139 = vpack.c.bf16 %v1128, %v1127
    %v1140 = vpack.c.bf16 %v1130, %v1129
    %v1141 = vpack.c.bf16 %v1132, %v1131
    %v1142 = vpack.c.bf16 %v1134, %v1133
    %v1143 = vld [vmem:[%s5] sm:$0x3]
    %vm1144 = vcmask 31744
    %v1146 = vsel %vm1144, %v1135, 0
    %v1149 = vsel %vm1144, %v1136, 0
    %v1152 = vsel %vm1144, %v1137, 0
    %v1155 = vsel %vm1144, %v1138, 0
    %v1158 = vsel %vm1144, %v1139, 0
    %v1161 = vsel %vm1144, %v1140, 0
    %v1164 = vsel %vm1144, %v1141, 0
    %v1167 = vsel %vm1144, %v1142, 0
    %vm1169 = vcmask 1041408
    %v1171 = vsel %vm1169, %v1143, 0
    %1173 = vmatpush.bf16.msra.mxu0 0
    %1174 = vmatpush.bf16.msra.mxu0 0
    %1175 = vmatpush.bf16.msra.mxu0 0
    %1176 = vmatpush.bf16.msra.mxu0 0
    %1177 = vmatpush.bf16.msra.mxu0 0
    %1178 = vmatpush.bf16.msra.mxu0 0
    %1179 = vmatpush.bf16.msra.mxu0 0
    %1180 = vmatpush.bf16.msra.mxu0 %v1171
    %1181 = vmatmul.bf16.gmra.mxu0 %v1146
    %v1182 = vpop.f32.mrf.mxu0
    %v1183 = vadd.f32 0.0, %v1182
    %v1184 = vpop.f32.mrf.mxu0
    %v1185 = vadd.f32 0.0, %v1184
    %1186 = vmatmul.bf16.gmra.mxu0 %v1149
    %v1187 = vpop.f32.mrf.mxu0
    %v1188 = vadd.f32 0.0, %v1187
    %v1189 = vpop.f32.mrf.mxu0
    %v1190 = vadd.f32 0.0, %v1189
    %1191 = vmatmul.bf16.gmra.mxu0 %v1152
    %v1192 = vpop.f32.mrf.mxu0
    %v1193 = vadd.f32 0.0, %v1192
    %v1194 = vpop.f32.mrf.mxu0
    %v1195 = vadd.f32 0.0, %v1194
    %1196 = vmatmul.bf16.gmra.mxu0 %v1155
    %v1197 = vpop.f32.mrf.mxu0
    %v1198 = vadd.f32 0.0, %v1197
    %v1199 = vpop.f32.mrf.mxu0
    %v1200 = vadd.f32 0.0, %v1199
    %1201 = vmatmul.bf16.gmra.mxu0 %v1158
    %v1202 = vpop.f32.mrf.mxu0
    %v1203 = vadd.f32 0.0, %v1202
    %v1204 = vpop.f32.mrf.mxu0
    %v1205 = vadd.f32 0.0, %v1204
    %1206 = vmatmul.bf16.gmra.mxu0 %v1161
    %v1207 = vpop.f32.mrf.mxu0
    %v1208 = vadd.f32 0.0, %v1207
    %v1209 = vpop.f32.mrf.mxu0
    %v1210 = vadd.f32 0.0, %v1209
    %1211 = vmatmul.bf16.gmra.mxu0 %v1164
    %v1212 = vpop.f32.mrf.mxu0
    %v1213 = vadd.f32 0.0, %v1212
    %v1214 = vpop.f32.mrf.mxu0
    %v1215 = vadd.f32 0.0, %v1214
    %1216 = vmatmul.bf16.gmra.mxu0 %v1167
    %v1217 = vpop.f32.mrf.mxu0
    %v1218 = vadd.f32 0.0, %v1217
    %v1219 = vpop.f32.mrf.mxu0
    %v1220 = vadd.f32 0.0, %v1219
    %1221 = vdwg.mxu0
    %v1238 = vunpack.c.l.b16 %v1038
    %v1239 = vunpack.c.l.b16 %v1039
    %v1240 = vunpack.c.l.b16 %v1040
    %v1241 = vunpack.c.l.b16 %v1041
    %v1242 = vunpack.c.l.b16 %v1042
    %v1243 = vunpack.c.l.b16 %v1043
    %v1244 = vunpack.c.l.b16 %v1044
    %v1245 = vunpack.c.l.b16 %v1045
    %v1246 = vunpack.c.l.b16 %v1046
    %v1247 = vunpack.c.l.b16 %v1047
    %v1248 = vunpack.c.l.b16 %v1048
    %v1249 = vunpack.c.l.b16 %v1049
    %v1250 = vunpack.c.l.b16 %v1050
    %v1251 = vunpack.c.l.b16 %v1051
    %v1252 = vunpack.c.l.b16 %v1052
    %v1253 = vunpack.c.l.b16 %v1053
    %v1254 = vpack.c.b16 %v1239, %v1238
    %v1255 = vpack.c.b16 %v1241, %v1240
    %v1256 = vpack.c.b16 %v1243, %v1242
    %v1257 = vpack.c.b16 %v1245, %v1244
    %v1258 = vpack.c.b16 %v1247, %v1246
    %v1259 = vpack.c.b16 %v1249, %v1248
    %v1260 = vpack.c.b16 %v1251, %v1250
    %v1261 = vpack.c.b16 %v1253, %v1252
    %v1271 = vunpack.c.l.b16 %v1054
    %v1272 = vunpack.c.l.b16 %v1055
    %v1273 = vunpack.c.l.b16 %v1056
    %v1274 = vunpack.c.l.b16 %v1057
    %v1275 = vunpack.c.l.b16 %v1058
    %v1276 = vunpack.c.l.b16 %v1059
    %v1277 = vunpack.c.l.b16 %v1060
    %v1278 = vunpack.c.l.b16 %v1061
    %v1279 = vunpack.c.l.b16 %v1062
    %v1280 = vpack.c.b16 %v1272, %v1271
    %v1281 = vpack.c.b16 %v1274, %v1273
    %v1282 = vpack.c.b16 %v1276, %v1275
    %v1283 = vpack.c.b16 %v1278, %v1277
    %v1284 = vpack.c.b16 %v1279, %v1279
    %vm1289 = vcmask 588800
    %v1291 = vsel %vm1289, %v1254, 0
    %v1294 = vsel %vm1289, %v1255, 0
    %v1297 = vsel %vm1289, %v1256, 0
    %v1300 = vsel %vm1289, %v1257, 0
    %v1303 = vsel %vm1289, %v1258, 0
    %v1306 = vsel %vm1289, %v1259, 0
    %v1309 = vsel %vm1289, %v1260, 0
    %v1312 = vsel %vm1289, %v1261, 0
    %vm1314 = vcmask 1043456
    %v1316 = vsel %vm1314, %v1284, 0
    %1318 = vmatpush.bf16.msra.mxu0 0
    %1319 = vmatpush.bf16.msra.mxu0 0
    %1320 = vmatpush.bf16.msra.mxu0 0
    %1321 = vmatpush.bf16.msra.mxu0 %v1316
    %1322 = vmatpush.bf16.msra.mxu0 %v1283
    %1323 = vmatpush.bf16.msra.mxu0 %v1282
    %1324 = vmatpush.bf16.msra.mxu0 %v1281
    %1325 = vmatpush.bf16.msra.mxu0 %v1280
    %1326 = vmatmul.bf16.gmra.mxu0 %v1291
    %v1327 = vpop.f32.mrf.mxu0
    %v1328 = vadd.f32 %v1183, %v1327
    %v1329 = vpop.f32.mrf.mxu0
    %v1330 = vadd.f32 %v1185, %v1329
    %1331 = vmatmul.bf16.gmra.mxu0 %v1294
    %v1332 = vpop.f32.mrf.mxu0
    %v1333 = vadd.f32 %v1188, %v1332
    %v1334 = vpop.f32.mrf.mxu0
    %v1335 = vadd.f32 %v1190, %v1334
    %1336 = vmatmul.bf16.gmra.mxu0 %v1297
    %v1337 = vpop.f32.mrf.mxu0
    %v1338 = vadd.f32 %v1193, %v1337
    %v1339 = vpop.f32.mrf.mxu0
    %v1340 = vadd.f32 %v1195, %v1339
    %1341 = vmatmul.bf16.gmra.mxu0 %v1300
    %v1342 = vpop.f32.mrf.mxu0
    %v1343 = vadd.f32 %v1198, %v1342
    %v1344 = vpop.f32.mrf.mxu0
    %v1345 = vadd.f32 %v1200, %v1344
    %1346 = vmatmul.bf16.gmra.mxu0 %v1303
    %v1347 = vpop.f32.mrf.mxu0
    %v1348 = vadd.f32 %v1203, %v1347
    %v1349 = vpop.f32.mrf.mxu0
    %v1350 = vadd.f32 %v1205, %v1349
    %1351 = vmatmul.bf16.gmra.mxu0 %v1306
    %v1352 = vpop.f32.mrf.mxu0
    %v1353 = vadd.f32 %v1208, %v1352
    %v1354 = vpop.f32.mrf.mxu0
    %v1355 = vadd.f32 %v1210, %v1354
    %1356 = vmatmul.bf16.gmra.mxu0 %v1309
    %v1357 = vpop.f32.mrf.mxu0
    %v1358 = vadd.f32 %v1213, %v1357
    %v1359 = vpop.f32.mrf.mxu0
    %v1360 = vadd.f32 %v1215, %v1359
    %1361 = vmatmul.bf16.gmra.mxu0 %v1312
    %v1362 = vpop.f32.mrf.mxu0
    %v1363 = vadd.f32 %v1218, %v1362
    %v1364 = vpop.f32.mrf.mxu0
    %v1365 = vadd.f32 %v1220, %v1364
    %1366 = vdwg.mxu0
    %v1367 = vpack.c.bf16 %v1328, %v1328
    %v1368 = vpack.c.bf16 %v1330, %v1330
    %v1369 = vpack.c.bf16 %v1333, %v1333
    %v1370 = vpack.c.bf16 %v1335, %v1335
    %v1371 = vpack.c.bf16 %v1338, %v1338
    %v1372 = vpack.c.bf16 %v1340, %v1340
    %v1373 = vpack.c.bf16 %v1343, %v1343
    %v1374 = vpack.c.bf16 %v1345, %v1345
    %v1375 = vpack.c.bf16 %v1348, %v1348
    %v1376 = vpack.c.bf16 %v1350, %v1350
    %v1377 = vpack.c.bf16 %v1353, %v1353
    %v1378 = vpack.c.bf16 %v1355, %v1355
    %v1379 = vpack.c.bf16 %v1358, %v1358
    %v1380 = vpack.c.bf16 %v1360, %v1360
    %v1381 = vpack.c.bf16 %v1363, %v1363
    %v1382 = vpack.c.bf16 %v1365, %v1365
    %vm1383 = vcmask 60416
    %1384 = vst.msk [vmem:[%s6] sm:$0xf] %vm1383, %v1367
    %1385 = vst.msk [vmem:[%s6 + $0x4] sm:$0xf] %vm1383, %v1368
    %1386 = vst.msk [vmem:[%s6 + $0x8] sm:$0xf] %vm1383, %v1369
    %1387 = vst.msk [vmem:[%s6 + $0xc] sm:$0xf] %vm1383, %v1370
    %1388 = vst.msk [vmem:[%s6 + $0x10] sm:$0xf] %vm1383, %v1371
    %1389 = vst.msk [vmem:[%s6 + $0x14] sm:$0xf] %vm1383, %v1372
    %1390 = vst.msk [vmem:[%s6 + $0x18] sm:$0xf] %vm1383, %v1373
    %1391 = vst.msk [vmem:[%s6 + $0x1c] sm:$0xf] %vm1383, %v1374
    %1392 = vst.msk [vmem:[%s6 + $0x20] sm:$0xf] %vm1383, %v1375
    %1393 = vst.msk [vmem:[%s6 + $0x24] sm:$0xf] %vm1383, %v1376
    %1394 = vst.msk [vmem:[%s6 + $0x28] sm:$0xf] %vm1383, %v1377
    %1395 = vst.msk [vmem:[%s6 + $0x2c] sm:$0xf] %vm1383, %v1378
    %1396 = vst.msk [vmem:[%s6 + $0x30] sm:$0xf] %vm1383, %v1379
    %1397 = vst.msk [vmem:[%s6 + $0x34] sm:$0xf] %vm1383, %v1380
    %1398 = vst.msk [vmem:[%s6 + $0x38] sm:$0xf] %vm1383, %v1381
    %1399 = vst.msk [vmem:[%s6 + $0x3c] sm:$0xf] %vm1383, %v1382
    // Predicated region
    $region64: #{_lambda_.5} parent=1 // pred_check
      _
    $region65: #{_lambda_.5} parent=1 // pred_check_branch
      %1401 = sbr.rel (0) target = $region67
    $region66: #{_lambda_.5} parent=1 // pred_region
      _
    $region67: #{_lambda_.5} parent=1 // pred_fallthru
      _
    // Predicated region
    $region68: #{_lambda_.5} parent=1 // pred_check
      _
    $region69: #{_lambda_.5} parent=1 // pred_check_branch
      %1403 = sbr.rel (0) target = $region71
    $region70: #{_lambda_.5} parent=1 // pred_region
      _
    $region71: #{_lambda_.5} parent=1 // pred_fallthru
      _

// kernel: _lambda_.6
$region0: #{_lambda_.6}
  #allocation0 [shape = 'u32[]', space=smem, size = 0x4, offset = 0x4, fixed_abs, tag = 'smem constant byte address 0x4 - core index']
  #allocation1 [shape = 'u32[72,128]{1,0:T(1,128)}', space=vmem, size = 0x9000, scoped, tag = 'internal scratch']
  #allocation2 [shape = 'bf16[2,8,8,72]{3,2,1,0:T(8,128)(2,1)}', space=vmem, size = 0x8000, scoped, tag = 'scratch operand']
  %s0 = inlined_call_operand.vmem [shape: bf16[2,1,8,8,8], index: 0, kind: input, shape index: {}]
  %s1 = inlined_call_operand.vmem [shape: bf16[72,8], index: 1, kind: input, shape index: {}]
  %s2 = inlined_call_operand.vmem [shape: f32[1,8], index: 2, kind: input, shape index: {}]
  %s3 = inlined_call_operand.vmem [shape: f32[1,8], index: 3, kind: input, shape index: {}]
  %s4 = inlined_call_operand.vmem [shape: f32[1,8], index: 4, kind: input, shape index: {}]
  %s5 = inlined_call_operand.vmem [shape: f32[1,8], index: 5, kind: input, shape index: {}]
  %s6 = inlined_call_operand.vmem [shape: bf16[2,8,8,8], index: 6, kind: output, shape index: {}]
  %s7 = sld [smem:[#allocation0]]
  $region34: #{_lambda_.6} parent=0
    _
  %s9 = ssub.s32 1, %s7
  %s10 = scalar_select 0, %s9, %s7
  // Predicated region
  $region2: #{_lambda_.6} parent=0 // pred_check
    _
  $region3: #{_lambda_.6} parent=0 // pred_check_branch
    %12 = sbr.rel (0) target = $region5
  $region4: #{_lambda_.6} parent=0 // pred_region
    _
  $region5: #{_lambda_.6} parent=0 // pred_fallthru
    _
  // Predicated region
  $region6: #{_lambda_.6} parent=0 // pred_check
    _
  $region7: #{_lambda_.6} parent=0 // pred_check_branch
    %14 = sbr.rel (0) target = $region9
  $region8: #{_lambda_.6} parent=0 // pred_region
    _
  $region9: #{_lambda_.6} parent=0 // pred_fallthru
    _
  // Predicated region
  $region10: #{_lambda_.6} parent=0 // pred_check
    _
  $region11: #{_lambda_.6} parent=0 // pred_check_branch
    %16 = sbr.rel (0) target = $region13
  $region12: #{_lambda_.6} parent=0 // pred_region
    _
  $region13: #{_lambda_.6} parent=0 // pred_fallthru
    _
  // Predicated region
  $region14: #{_lambda_.6} parent=0 // pred_check
    _
  $region15: #{_lambda_.6} parent=0 // pred_check_branch
    %18 = sbr.rel (0) target = $region17
  $region16: #{_lambda_.6} parent=0 // pred_region
    _
  $region17: #{_lambda_.6} parent=0 // pred_fallthru
    _
  // Predicated region
  $region18: #{_lambda_.6} parent=0 // pred_check
    _
  $region19: #{_lambda_.6} parent=0 // pred_check_branch
    %20 = sbr.rel (0) target = $region21
  $region20: #{_lambda_.6} parent=0 // pred_region
    _
  $region21: #{_lambda_.6} parent=0 // pred_fallthru
    _
  // Predicated region
  $region22: #{_lambda_.6} parent=0 // pred_check
    _
  $region23: #{_lambda_.6} parent=0 // pred_check_branch
    %22 = sbr.rel (0) target = $region25
  $region24: #{_lambda_.6} parent=0 // pred_region
    _
  $region25: #{_lambda_.6} parent=0 // pred_fallthru
    _
  %v24 = vld [vmem:[%s0] sm:$0xf]
  %v25 = vld [vmem:[%s0 + $0x4] sm:$0xf]
  %v26 = vld [vmem:[%s0 + $0x8] sm:$0xf]
  %v27 = vld [vmem:[%s0 + $0xc] sm:$0xf]
  %v28 = vld [vmem:[%s0 + $0x10] sm:$0xf]
  %v29 = vld [vmem:[%s0 + $0x14] sm:$0xf]
  %v30 = vld [vmem:[%s0 + $0x18] sm:$0xf]
  %v31 = vld [vmem:[%s0 + $0x1c] sm:$0xf]
  %v32 = vld [vmem:[%s0 + $0x20] sm:$0xf]
  %v33 = vld [vmem:[%s0 + $0x24] sm:$0xf]
  %v34 = vld [vmem:[%s0 + $0x28] sm:$0xf]
  %v35 = vld [vmem:[%s0 + $0x2c] sm:$0xf]
  %v36 = vld [vmem:[%s0 + $0x30] sm:$0xf]
  %v37 = vld [vmem:[%s0 + $0x34] sm:$0xf]
  %v38 = vld [vmem:[%s0 + $0x38] sm:$0xf]
  %v39 = vld [vmem:[%s0 + $0x3c] sm:$0xf]
  %v40 = vunpack.c.l.bf16 %v24
  %v41 = vunpack.c.l.bf16 %v25
  %v42 = vunpack.c.l.bf16 %v26
  %v43 = vunpack.c.l.bf16 %v27
  %v44 = vunpack.c.l.bf16 %v28
  %v45 = vunpack.c.l.bf16 %v29
  %v46 = vunpack.c.l.bf16 %v30
  %v47 = vunpack.c.l.bf16 %v31
  %v48 = vunpack.c.l.bf16 %v32
  %v49 = vunpack.c.l.bf16 %v33
  %v50 = vunpack.c.l.bf16 %v34
  %v51 = vunpack.c.l.bf16 %v35
  %v52 = vunpack.c.l.bf16 %v36
  %v53 = vunpack.c.l.bf16 %v37
  %v54 = vunpack.c.l.bf16 %v38
  %v55 = vunpack.c.l.bf16 %v39
  %v56 = vld [vmem:[%s2] sm:$0x1]
  %v58 = vperm.slane %v56, 0
  %v60 = vmul.f32 %v40, %v58
  %v61 = vmul.f32 %v41, %v58
  %v62 = vmul.f32 %v42, %v58
  %v63 = vmul.f32 %v43, %v58
  %v64 = vmul.f32 %v44, %v58
  %v65 = vmul.f32 %v45, %v58
  %v66 = vmul.f32 %v46, %v58
  %v67 = vmul.f32 %v47, %v58
  %v68 = vmul.f32 %v48, %v58
  %v69 = vmul.f32 %v49, %v58
  %v70 = vmul.f32 %v50, %v58
  %v71 = vmul.f32 %v51, %v58
  %v72 = vmul.f32 %v52, %v58
  %v73 = vmul.f32 %v53, %v58
  %v74 = vmul.f32 %v54, %v58
  %v75 = vmul.f32 %v55, %v58
  %v76 = vld [vmem:[%s3] sm:$0x1]
  %v78 = vperm.slane %v76, 0
  %v80 = vadd.f32 %v60, %v78
  %v81 = vadd.f32 %v61, %v78
  %v82 = vadd.f32 %v62, %v78
  %v83 = vadd.f32 %v63, %v78
  %v84 = vadd.f32 %v64, %v78
  %v85 = vadd.f32 %v65, %v78
  %v86 = vadd.f32 %v66, %v78
  %v87 = vadd.f32 %v67, %v78
  %v88 = vadd.f32 %v68, %v78
  %v89 = vadd.f32 %v69, %v78
  %v90 = vadd.f32 %v70, %v78
  %v91 = vadd.f32 %v71, %v78
  %v92 = vadd.f32 %v72, %v78
  %v93 = vadd.f32 %v73, %v78
  %v94 = vadd.f32 %v74, %v78
  %v95 = vadd.f32 %v75, %v78
  %v96 = vmax.f32 %v80, 0.0
  %v97 = vmax.f32 %v81, 0.0
  %v98 = vmax.f32 %v82, 0.0
  %v99 = vmax.f32 %v83, 0.0
  %v100 = vmax.f32 %v84, 0.0
  %v101 = vmax.f32 %v85, 0.0
  %v102 = vmax.f32 %v86, 0.0
  %v103 = vmax.f32 %v87, 0.0
  %v104 = vmax.f32 %v88, 0.0
  %v105 = vmax.f32 %v89, 0.0
  %v106 = vmax.f32 %v90, 0.0
  %v107 = vmax.f32 %v91, 0.0
  %v108 = vmax.f32 %v92, 0.0
  %v109 = vmax.f32 %v93, 0.0
  %v110 = vmax.f32 %v94, 0.0
  %v111 = vmax.f32 %v95, 0.0
  %v112 = vpack.c.bf16 %v96, %v96
  %v113 = vpack.c.bf16 %v97, %v97
  %v114 = vpack.c.bf16 %v98, %v98
  %v115 = vpack.c.bf16 %v99, %v99
  %v116 = vpack.c.bf16 %v100, %v100
  %v117 = vpack.c.bf16 %v101, %v101
  %v118 = vpack.c.bf16 %v102, %v102
  %v119 = vpack.c.bf16 %v103, %v103
  %v120 = vpack.c.bf16 %v104, %v104
  %v121 = vpack.c.bf16 %v105, %v105
  %v122 = vpack.c.bf16 %v106, %v106
  %v123 = vpack.c.bf16 %v107, %v107
  %v124 = vpack.c.bf16 %v108, %v108
  %v125 = vpack.c.bf16 %v109, %v109
  %v126 = vpack.c.bf16 %v110, %v110
  %v127 = vpack.c.bf16 %v111, %v111
  %vm128 = vcmask 584704
  %129 = vst.msk [vmem:[#allocation2] sm:$0xf] %vm128, 0
  %130 = vst.msk [vmem:[#allocation2 + $0x4] sm:$0xf] %vm128, 0
  %131 = vst.msk [vmem:[#allocation2 + $0x8] sm:$0xf] %vm128, 0
  %132 = vst.msk [vmem:[#allocation2 + $0xc] sm:$0xf] %vm128, 0
  %133 = vst.msk [vmem:[#allocation2 + $0x10] sm:$0xf] %vm128, 0
  %134 = vst.msk [vmem:[#allocation2 + $0x14] sm:$0xf] %vm128, 0
  %135 = vst.msk [vmem:[#allocation2 + $0x18] sm:$0xf] %vm128, 0
  %136 = vst.msk [vmem:[#allocation2 + $0x1c] sm:$0xf] %vm128, 0
  %137 = vst.msk [vmem:[#allocation2 + $0x20] sm:$0xf] %vm128, 0
  %138 = vst.msk [vmem:[#allocation2 + $0x24] sm:$0xf] %vm128, 0
  %139 = vst.msk [vmem:[#allocation2 + $0x28] sm:$0xf] %vm128, 0
  %140 = vst.msk [vmem:[#allocation2 + $0x2c] sm:$0xf] %vm128, 0
  %141 = vst.msk [vmem:[#allocation2 + $0x30] sm:$0xf] %vm128, 0
  %142 = vst.msk [vmem:[#allocation2 + $0x34] sm:$0xf] %vm128, 0
  %143 = vst.msk [vmem:[#allocation2 + $0x38] sm:$0xf] %vm128, 0
  %144 = vst.msk [vmem:[#allocation2 + $0x3c] sm:$0xf] %vm128, 0
  %v146 = vshrl.u32 %v112, 16
  %v148 = vrot.slane %v146, 7
  %v149 = vshll.u32 %v112, 16
  %v151 = vor.u32 %v148, %v149
  %v153 = vshrl.u32 %v113, 16
  %v155 = vrot.slane %v153, 7
  %v156 = vshll.u32 %v113, 16
  %v158 = vor.u32 %v155, %v156
  %v160 = vshrl.u32 %v114, 16
  %v162 = vrot.slane %v160, 7
  %v163 = vshll.u32 %v114, 16
  %v165 = vor.u32 %v162, %v163
  %v167 = vshrl.u32 %v115, 16
  %v169 = vrot.slane %v167, 7
  %v170 = vshll.u32 %v115, 16
  %v172 = vor.u32 %v169, %v170
  %v174 = vshrl.u32 %v116, 16
  %v176 = vrot.slane %v174, 7
  %v177 = vshll.u32 %v116, 16
  %v179 = vor.u32 %v176, %v177
  %v181 = vshrl.u32 %v117, 16
  %v183 = vrot.slane %v181, 7
  %v184 = vshll.u32 %v117, 16
  %v186 = vor.u32 %v183, %v184
  %v188 = vshrl.u32 %v118, 16
  %v190 = vrot.slane %v188, 7
  %v191 = vshll.u32 %v118, 16
  %v193 = vor.u32 %v190, %v191
  %v195 = vshrl.u32 %v120, 16
  %v197 = vrot.slane %v195, 7
  %v198 = vshll.u32 %v120, 16
  %v200 = vor.u32 %v197, %v198
  %v202 = vshrl.u32 %v121, 16
  %v204 = vrot.slane %v202, 7
  %v205 = vshll.u32 %v121, 16
  %v207 = vor.u32 %v204, %v205
  %v209 = vshrl.u32 %v122, 16
  %v211 = vrot.slane %v209, 7
  %v212 = vshll.u32 %v122, 16
  %v214 = vor.u32 %v211, %v212
  %v216 = vshrl.u32 %v123, 16
  %v218 = vrot.slane %v216, 7
  %v219 = vshll.u32 %v123, 16
  %v221 = vor.u32 %v218, %v219
  %v223 = vshrl.u32 %v124, 16
  %v225 = vrot.slane %v223, 7
  %v226 = vshll.u32 %v124, 16
  %v228 = vor.u32 %v225, %v226
  %v230 = vshrl.u32 %v125, 16
  %v232 = vrot.slane %v230, 7
  %v233 = vshll.u32 %v125, 16
  %v235 = vor.u32 %v232, %v233
  %v237 = vshrl.u32 %v126, 16
  %v239 = vrot.slane %v237, 7
  %v240 = vshll.u32 %v126, 16
  %v242 = vor.u32 %v239, %v240
  %s257 = scalar_lea.vmem [#allocation2], 4
  %vm258 = vcmask 60416
  %vm259 = vsmask.f32 7938
  %vm260 = vmand %vm258, %vm259
  %v261 = vld [vmem:[%s257] sm:$0xf]
  %v262 = vsel %vm260, %v151, %v261
  %263 = vst [vmem:[%s257] sm:$0xf] %v262
  %v264 = vld [vmem:[%s257 + $0x4] sm:$0xf]
  %v265 = vsel %vm260, %v158, %v264
  %266 = vst [vmem:[%s257 + $0x4] sm:$0xf] %v265
  %v267 = vld [vmem:[%s257 + $0x8] sm:$0xf]
  %v268 = vsel %vm260, %v165, %v267
  %269 = vst [vmem:[%s257 + $0x8] sm:$0xf] %v268
  %v270 = vld [vmem:[%s257 + $0xc] sm:$0xf]
  %v271 = vsel %vm260, %v172, %v270
  %272 = vst [vmem:[%s257 + $0xc] sm:$0xf] %v271
  %v273 = vld [vmem:[%s257 + $0x10] sm:$0xf]
  %v274 = vsel %vm260, %v179, %v273
  %275 = vst [vmem:[%s257 + $0x10] sm:$0xf] %v274
  %v276 = vld [vmem:[%s257 + $0x14] sm:$0xf]
  %v277 = vsel %vm260, %v186, %v276
  %278 = vst [vmem:[%s257 + $0x14] sm:$0xf] %v277
  %v279 = vld [vmem:[%s257 + $0x18] sm:$0xf]
  %v280 = vsel %vm260, %v193, %v279
  %281 = vst [vmem:[%s257 + $0x18] sm:$0xf] %v280
  %v282 = vld [vmem:[%s257 + $0x20] sm:$0xf]
  %v283 = vsel %vm260, %v200, %v282
  %284 = vst [vmem:[%s257 + $0x20] sm:$0xf] %v283
  %v285 = vld [vmem:[%s257 + $0x24] sm:$0xf]
  %v286 = vsel %vm260, %v207, %v285
  %287 = vst [vmem:[%s257 + $0x24] sm:$0xf] %v286
  %v288 = vld [vmem:[%s257 + $0x28] sm:$0xf]
  %v289 = vsel %vm260, %v214, %v288
  %290 = vst [vmem:[%s257 + $0x28] sm:$0xf] %v289
  %v291 = vld [vmem:[%s257 + $0x2c] sm:$0xf]
  %v292 = vsel %vm260, %v221, %v291
  %293 = vst [vmem:[%s257 + $0x2c] sm:$0xf] %v292
  %v294 = vld [vmem:[%s257 + $0x30] sm:$0xf]
  %v295 = vsel %vm260, %v228, %v294
  %296 = vst [vmem:[%s257 + $0x30] sm:$0xf] %v295
  %v297 = vld [vmem:[%s257 + $0x34] sm:$0xf]
  %v298 = vsel %vm260, %v235, %v297
  %299 = vst [vmem:[%s257 + $0x34] sm:$0xf] %v298
  %v300 = vld [vmem:[%s257 + $0x38] sm:$0xf]
  %v301 = vsel %vm260, %v242, %v300
  %302 = vst [vmem:[%s257 + $0x38] sm:$0xf] %v301
  %317 = vrot.lane.b32.xlu0 %v112, 8
  %v318 = vpop.permute.xlu0 %317
  %319 = vrot.lane.b32.xlu0 %v113, 8
  %v320 = vpop.permute.xlu0 %319
  %321 = vrot.lane.b32.xlu0 %v114, 8
  %v322 = vpop.permute.xlu0 %321
  %323 = vrot.lane.b32.xlu0 %v115, 8
  %v324 = vpop.permute.xlu0 %323
  %325 = vrot.lane.b32.xlu0 %v116, 8
  %v326 = vpop.permute.xlu0 %325
  %327 = vrot.lane.b32.xlu0 %v117, 8
  %v328 = vpop.permute.xlu0 %327
  %329 = vrot.lane.b32.xlu0 %v118, 8
  %v330 = vpop.permute.xlu0 %329
  %331 = vrot.lane.b32.xlu0 %v120, 8
  %v332 = vpop.permute.xlu0 %331
  %333 = vrot.lane.b32.xlu0 %v121, 8
  %v334 = vpop.permute.xlu0 %333
  %335 = vrot.lane.b32.xlu0 %v122, 8
  %v336 = vpop.permute.xlu0 %335
  %337 = vrot.lane.b32.xlu0 %v123, 8
  %v338 = vpop.permute.xlu0 %337
  %339 = vrot.lane.b32.xlu0 %v124, 8
  %v340 = vpop.permute.xlu0 %339
  %341 = vrot.lane.b32.xlu0 %v125, 8
  %v342 = vpop.permute.xlu0 %341
  %343 = vrot.lane.b32.xlu0 %v126, 8
  %v344 = vpop.permute.xlu0 %343
  %vm359 = vcmask 126016
  %360 = vst.msk [vmem:[%s257] sm:$0xf] %vm359, %v318
  %361 = vst.msk [vmem:[%s257 + $0x4] sm:$0xf] %vm359, %v320
  %362 = vst.msk [vmem:[%s257 + $0x8] sm:$0xf] %vm359, %v322
  %363 = vst.msk [vmem:[%s257 + $0xc] sm:$0xf] %vm359, %v324
  %364 = vst.msk [vmem:[%s257 + $0x10] sm:$0xf] %vm359, %v326
  %365 = vst.msk [vmem:[%s257 + $0x14] sm:$0xf] %vm359, %v328
  %366 = vst.msk [vmem:[%s257 + $0x18] sm:$0xf] %vm359, %v330
  %367 = vst.msk [vmem:[%s257 + $0x20] sm:$0xf] %vm359, %v332
  %368 = vst.msk [vmem:[%s257 + $0x24] sm:$0xf] %vm359, %v334
  %369 = vst.msk [vmem:[%s257 + $0x28] sm:$0xf] %vm359, %v336
  %370 = vst.msk [vmem:[%s257 + $0x2c] sm:$0xf] %vm359, %v338
  %371 = vst.msk [vmem:[%s257 + $0x30] sm:$0xf] %vm359, %v340
  %372 = vst.msk [vmem:[%s257 + $0x34] sm:$0xf] %vm359, %v342
  %373 = vst.msk [vmem:[%s257 + $0x38] sm:$0xf] %vm359, %v344
  %v374 = vrot.slane %v146, 4
  %v375 = vrot.slane %v149, 5
  %v376 = vor.u32 %v374, %v375
  %v377 = vrot.slane %v376, 4
  %v378 = vrot.slane %v153, 4
  %v379 = vrot.slane %v156, 5
  %v380 = vor.u32 %v378, %v379
  %v381 = vrot.slane %v380, 4
  %v382 = vrot.slane %v160, 4
  %v383 = vrot.slane %v163, 5
  %v384 = vor.u32 %v382, %v383
  %v385 = vrot.slane %v384, 4
  %v386 = vrot.slane %v167, 4
  %v387 = vrot.slane %v170, 5
  %v388 = vor.u32 %v386, %v387
  %v389 = vrot.slane %v388, 4
  %v390 = vrot.slane %v174, 4
  %v391 = vrot.slane %v177, 5
  %v392 = vor.u32 %v390, %v391
  %v393 = vrot.slane %v392, 4
  %v394 = vrot.slane %v181, 4
  %v395 = vrot.slane %v184, 5
  %v396 = vor.u32 %v394, %v395
  %v397 = vrot.slane %v396, 4
  %v398 = vrot.slane %v188, 4
  %v399 = vrot.slane %v191, 5
  %v400 = vor.u32 %v398, %v399
  %v401 = vrot.slane %v400, 4
  %v402 = vrot.slane %v195, 4
  %v403 = vrot.slane %v198, 5
  %v404 = vor.u32 %v402, %v403
  %v405 = vrot.slane %v404, 4
  %v406 = vrot.slane %v202, 4
  %v407 = vrot.slane %v205, 5
  %v408 = vor.u32 %v406, %v407
  %v409 = vrot.slane %v408, 4
  %v410 = vrot.slane %v209, 4
  %v411 = vrot.slane %v212, 5
  %v412 = vor.u32 %v410, %v411
  %v413 = vrot.slane %v412, 4
  %v414 = vrot.slane %v216, 4
  %v415 = vrot.slane %v219, 5
  %v416 = vor.u32 %v414, %v415
  %v417 = vrot.slane %v416, 4
  %v418 = vrot.slane %v223, 4
  %v419 = vrot.slane %v226, 5
  %v420 = vor.u32 %v418, %v419
  %v421 = vrot.slane %v420, 4
  %v422 = vrot.slane %v230, 4
  %v423 = vrot.slane %v233, 5
  %v424 = vor.u32 %v422, %v423
  %v425 = vrot.slane %v424, 4
  %v426 = vrot.slane %v237, 4
  %v427 = vrot.slane %v240, 5
  %v428 = vor.u32 %v426, %v427
  %v429 = vrot.slane %v428, 4
  %430 = vrot.lane.b32.xlu0 %v377, 16
  %v431 = vpop.permute.xlu0 %430
  %432 = vrot.lane.b32.xlu0 %v381, 16
  %v433 = vpop.permute.xlu0 %432
  %434 = vrot.lane.b32.xlu0 %v385, 16
  %v435 = vpop.permute.xlu0 %434
  %436 = vrot.lane.b32.xlu0 %v389, 16
  %v437 = vpop.permute.xlu0 %436
  %438 = vrot.lane.b32.xlu0 %v393, 16
  %v439 = vpop.permute.xlu0 %438
  %440 = vrot.lane.b32.xlu0 %v397, 16
  %v441 = vpop.permute.xlu0 %440
  %442 = vrot.lane.b32.xlu0 %v401, 16
  %v443 = vpop.permute.xlu0 %442
  %444 = vrot.lane.b32.xlu0 %v405, 16
  %v445 = vpop.permute.xlu0 %444
  %446 = vrot.lane.b32.xlu0 %v409, 16
  %v447 = vpop.permute.xlu0 %446
  %448 = vrot.lane.b32.xlu0 %v413, 16
  %v449 = vpop.permute.xlu0 %448
  %450 = vrot.lane.b32.xlu0 %v417, 16
  %v451 = vpop.permute.xlu0 %450
  %452 = vrot.lane.b32.xlu0 %v421, 16
  %v453 = vpop.permute.xlu0 %452
  %454 = vrot.lane.b32.xlu0 %v425, 16
  %v455 = vpop.permute.xlu0 %454
  %456 = vrot.lane.b32.xlu0 %v429, 16
  %v457 = vpop.permute.xlu0 %456
  %vm472 = vcmask 191616
  %vm473 = vsmask.f32 3328
  %vm474 = vmand %vm472, %vm473
  %v475 = vld [vmem:[%s257] sm:$0xf]
  %v476 = vsel %vm474, %v431, %v475
  %477 = vst [vmem:[%s257] sm:$0xf] %v476
  %v478 = vld [vmem:[%s257 + $0x4] sm:$0xf]
  %v479 = vsel %vm474, %v433, %v478
  %480 = vst [vmem:[%s257 + $0x4] sm:$0xf] %v479
  %v481 = vld [vmem:[%s257 + $0x8] sm:$0xf]
  %v482 = vsel %vm474, %v435, %v481
  %483 = vst [vmem:[%s257 + $0x8] sm:$0xf] %v482
  %v484 = vld [vmem:[%s257 + $0xc] sm:$0xf]
  %v485 = vsel %vm474, %v437, %v484
  %486 = vst [vmem:[%s257 + $0xc] sm:$0xf] %v485
  %v487 = vld [vmem:[%s257 + $0x10] sm:$0xf]
  %v488 = vsel %vm474, %v439, %v487
  %489 = vst [vmem:[%s257 + $0x10] sm:$0xf] %v488
  %v490 = vld [vmem:[%s257 + $0x14] sm:$0xf]
  %v491 = vsel %vm474, %v441, %v490
  %492 = vst [vmem:[%s257 + $0x14] sm:$0xf] %v491
  %v493 = vld [vmem:[%s257 + $0x18] sm:$0xf]
  %v494 = vsel %vm474, %v443, %v493
  %495 = vst [vmem:[%s257 + $0x18] sm:$0xf] %v494
  %v496 = vld [vmem:[%s257 + $0x20] sm:$0xf]
  %v497 = vsel %vm474, %v445, %v496
  %498 = vst [vmem:[%s257 + $0x20] sm:$0xf] %v497
  %v499 = vld [vmem:[%s257 + $0x24] sm:$0xf]
  %v500 = vsel %vm474, %v447, %v499
  %501 = vst [vmem:[%s257 + $0x24] sm:$0xf] %v500
  %v502 = vld [vmem:[%s257 + $0x28] sm:$0xf]
  %v503 = vsel %vm474, %v449, %v502
  %504 = vst [vmem:[%s257 + $0x28] sm:$0xf] %v503
  %v505 = vld [vmem:[%s257 + $0x2c] sm:$0xf]
  %v506 = vsel %vm474, %v451, %v505
  %507 = vst [vmem:[%s257 + $0x2c] sm:$0xf] %v506
  %v508 = vld [vmem:[%s257 + $0x30] sm:$0xf]
  %v509 = vsel %vm474, %v453, %v508
  %510 = vst [vmem:[%s257 + $0x30] sm:$0xf] %v509
  %v511 = vld [vmem:[%s257 + $0x34] sm:$0xf]
  %v512 = vsel %vm474, %v455, %v511
  %513 = vst [vmem:[%s257 + $0x34] sm:$0xf] %v512
  %v514 = vld [vmem:[%s257 + $0x38] sm:$0xf]
  %v515 = vsel %vm474, %v457, %v514
  %516 = vst [vmem:[%s257 + $0x38] sm:$0xf] %v515
  %v518 = vshrl.u32 %v119, 16
  %v520 = vrot.slane %v518, 7
  %v521 = vshll.u32 %v119, 16
  %v523 = vor.u32 %v520, %v521
  %v525 = vshrl.u32 %v127, 16
  %v527 = vrot.slane %v525, 7
  %v528 = vshll.u32 %v127, 16
  %v530 = vor.u32 %v527, %v528
  %531 = vrot.lane.b32.xlu0 %v151, 24
  %v532 = vpop.permute.xlu0 %531
  %533 = vrot.lane.b32.xlu0 %v158, 24
  %v534 = vpop.permute.xlu0 %533
  %535 = vrot.lane.b32.xlu0 %v165, 24
  %v536 = vpop.permute.xlu0 %535
  %537 = vrot.lane.b32.xlu0 %v172, 24
  %v538 = vpop.permute.xlu0 %537
  %539 = vrot.lane.b32.xlu0 %v179, 24
  %v540 = vpop.permute.xlu0 %539
  %541 = vrot.lane.b32.xlu0 %v186, 24
  %v542 = vpop.permute.xlu0 %541
  %543 = vrot.lane.b32.xlu0 %v193, 24
  %v544 = vpop.permute.xlu0 %543
  %545 = vrot.lane.b32.xlu0 %v523, 24
  %v546 = vpop.permute.xlu0 %545
  %547 = vrot.lane.b32.xlu0 %v200, 24
  %v548 = vpop.permute.xlu0 %547
  %549 = vrot.lane.b32.xlu0 %v207, 24
  %v550 = vpop.permute.xlu0 %549
  %551 = vrot.lane.b32.xlu0 %v214, 24
  %v552 = vpop.permute.xlu0 %551
  %553 = vrot.lane.b32.xlu0 %v221, 24
  %v554 = vpop.permute.xlu0 %553
  %555 = vrot.lane.b32.xlu0 %v228, 24
  %v556 = vpop.permute.xlu0 %555
  %557 = vrot.lane.b32.xlu0 %v235, 24
  %v558 = vpop.permute.xlu0 %557
  %559 = vrot.lane.b32.xlu0 %v242, 24
  %v560 = vpop.permute.xlu0 %559
  %561 = vrot.lane.b32.xlu0 %v530, 24
  %v562 = vpop.permute.xlu0 %561
  %vm579 = vcmask 257216
  %vm580 = vmand %vm579, %vm259
  %v581 = vld [vmem:[#allocation2] sm:$0xf]
  %v582 = vsel %vm580, %v532, %v581
  %583 = vst [vmem:[#allocation2] sm:$0xf] %v582
  %v584 = vld [vmem:[#allocation2 + $0x4] sm:$0xf]
  %v585 = vsel %vm580, %v534, %v584
  %586 = vst [vmem:[#allocation2 + $0x4] sm:$0xf] %v585
  %v587 = vld [vmem:[#allocation2 + $0x8] sm:$0xf]
  %v588 = vsel %vm580, %v536, %v587
  %589 = vst [vmem:[#allocation2 + $0x8] sm:$0xf] %v588
  %v590 = vld [vmem:[#allocation2 + $0xc] sm:$0xf]
  %v591 = vsel %vm580, %v538, %v590
  %592 = vst [vmem:[#allocation2 + $0xc] sm:$0xf] %v591
  %v593 = vld [vmem:[#allocation2 + $0x10] sm:$0xf]
  %v594 = vsel %vm580, %v540, %v593
  %595 = vst [vmem:[#allocation2 + $0x10] sm:$0xf] %v594
  %v596 = vld [vmem:[#allocation2 + $0x14] sm:$0xf]
  %v597 = vsel %vm580, %v542, %v596
  %598 = vst [vmem:[#allocation2 + $0x14] sm:$0xf] %v597
  %v599 = vld [vmem:[#allocation2 + $0x18] sm:$0xf]
  %v600 = vsel %vm580, %v544, %v599
  %601 = vst [vmem:[#allocation2 + $0x18] sm:$0xf] %v600
  %v602 = vld [vmem:[#allocation2 + $0x1c] sm:$0xf]
  %v603 = vsel %vm580, %v546, %v602
  %604 = vst [vmem:[#allocation2 + $0x1c] sm:$0xf] %v603
  %v605 = vld [vmem:[#allocation2 + $0x20] sm:$0xf]
  %v606 = vsel %vm580, %v548, %v605
  %607 = vst [vmem:[#allocation2 + $0x20] sm:$0xf] %v606
  %v608 = vld [vmem:[#allocation2 + $0x24] sm:$0xf]
  %v609 = vsel %vm580, %v550, %v608
  %610 = vst [vmem:[#allocation2 + $0x24] sm:$0xf] %v609
  %v611 = vld [vmem:[#allocation2 + $0x28] sm:$0xf]
  %v612 = vsel %vm580, %v552, %v611
  %613 = vst [vmem:[#allocation2 + $0x28] sm:$0xf] %v612
  %v614 = vld [vmem:[#allocation2 + $0x2c] sm:$0xf]
  %v615 = vsel %vm580, %v554, %v614
  %616 = vst [vmem:[#allocation2 + $0x2c] sm:$0xf] %v615
  %v617 = vld [vmem:[#allocation2 + $0x30] sm:$0xf]
  %v618 = vsel %vm580, %v556, %v617
  %619 = vst [vmem:[#allocation2 + $0x30] sm:$0xf] %v618
  %v620 = vld [vmem:[#allocation2 + $0x34] sm:$0xf]
  %v621 = vsel %vm580, %v558, %v620
  %622 = vst [vmem:[#allocation2 + $0x34] sm:$0xf] %v621
  %v623 = vld [vmem:[#allocation2 + $0x38] sm:$0xf]
  %v624 = vsel %vm580, %v560, %v623
  %625 = vst [vmem:[#allocation2 + $0x38] sm:$0xf] %v624
  %v626 = vld [vmem:[#allocation2 + $0x3c] sm:$0xf]
  %v627 = vsel %vm580, %v562, %v626
  %628 = vst [vmem:[#allocation2 + $0x3c] sm:$0xf] %v627
  %631 = vrot.lane.b32.xlu0 %v112, 32
  %v632 = vpop.permute.xlu0 %631
  %633 = vrot.lane.b32.xlu0 %v113, 32
  %v634 = vpop.permute.xlu0 %633
  %635 = vrot.lane.b32.xlu0 %v114, 32
  %v636 = vpop.permute.xlu0 %635
  %637 = vrot.lane.b32.xlu0 %v115, 32
  %v638 = vpop.permute.xlu0 %637
  %639 = vrot.lane.b32.xlu0 %v116, 32
  %v640 = vpop.permute.xlu0 %639
  %641 = vrot.lane.b32.xlu0 %v117, 32
  %v642 = vpop.permute.xlu0 %641
  %643 = vrot.lane.b32.xlu0 %v118, 32
  %v644 = vpop.permute.xlu0 %643
  %645 = vrot.lane.b32.xlu0 %v119, 32
  %v646 = vpop.permute.xlu0 %645
  %647 = vrot.lane.b32.xlu0 %v120, 32
  %v648 = vpop.permute.xlu0 %647
  %649 = vrot.lane.b32.xlu0 %v121, 32
  %v650 = vpop.permute.xlu0 %649
  %651 = vrot.lane.b32.xlu0 %v122, 32
  %v652 = vpop.permute.xlu0 %651
  %653 = vrot.lane.b32.xlu0 %v123, 32
  %v654 = vpop.permute.xlu0 %653
  %655 = vrot.lane.b32.xlu0 %v124, 32
  %v656 = vpop.permute.xlu0 %655
  %657 = vrot.lane.b32.xlu0 %v125, 32
  %v658 = vpop.permute.xlu0 %657
  %659 = vrot.lane.b32.xlu0 %v126, 32
  %v660 = vpop.permute.xlu0 %659
  %661 = vrot.lane.b32.xlu0 %v127, 32
  %v662 = vpop.permute.xlu0 %661
  %vm679 = vcmask 322816
  %680 = vst.msk [vmem:[#allocation2] sm:$0xf] %vm679, %v632
  %681 = vst.msk [vmem:[#allocation2 + $0x4] sm:$0xf] %vm679, %v634
  %682 = vst.msk [vmem:[#allocation2 + $0x8] sm:$0xf] %vm679, %v636
  %683 = vst.msk [vmem:[#allocation2 + $0xc] sm:$0xf] %vm679, %v638
  %684 = vst.msk [vmem:[#allocation2 + $0x10] sm:$0xf] %vm679, %v640
  %685 = vst.msk [vmem:[#allocation2 + $0x14] sm:$0xf] %vm679, %v642
  %686 = vst.msk [vmem:[#allocation2 + $0x18] sm:$0xf] %vm679, %v644
  %687 = vst.msk [vmem:[#allocation2 + $0x1c] sm:$0xf] %vm679, %v646
  %688 = vst.msk [vmem:[#allocation2 + $0x20] sm:$0xf] %vm679, %v648
  %689 = vst.msk [vmem:[#allocation2 + $0x24] sm:$0xf] %vm679, %v650
  %690 = vst.msk [vmem:[#allocation2 + $0x28] sm:$0xf] %vm679, %v652
  %691 = vst.msk [vmem:[#allocation2 + $0x2c] sm:$0xf] %vm679, %v654
  %692 = vst.msk [vmem:[#allocation2 + $0x30] sm:$0xf] %vm679, %v656
  %693 = vst.msk [vmem:[#allocation2 + $0x34] sm:$0xf] %vm679, %v658
  %694 = vst.msk [vmem:[#allocation2 + $0x38] sm:$0xf] %vm679, %v660
  %695 = vst.msk [vmem:[#allocation2 + $0x3c] sm:$0xf] %vm679, %v662
  %v696 = vrot.slane %v518, 4
  %v697 = vrot.slane %v521, 5
  %v698 = vor.u32 %v696, %v697
  %v699 = vrot.slane %v698, 4
  %v700 = vrot.slane %v525, 4
  %v701 = vrot.slane %v528, 5
  %v702 = vor.u32 %v700, %v701
  %v703 = vrot.slane %v702, 4
  %704 = vrot.lane.b32.xlu0 %v377, 40
  %v705 = vpop.permute.xlu0 %704
  %706 = vrot.lane.b32.xlu0 %v381, 40
  %v707 = vpop.permute.xlu0 %706
  %708 = vrot.lane.b32.xlu0 %v385, 40
  %v709 = vpop.permute.xlu0 %708
  %710 = vrot.lane.b32.xlu0 %v389, 40
  %v711 = vpop.permute.xlu0 %710
  %712 = vrot.lane.b32.xlu0 %v393, 40
  %v713 = vpop.permute.xlu0 %712
  %714 = vrot.lane.b32.xlu0 %v397, 40
  %v715 = vpop.permute.xlu0 %714
  %716 = vrot.lane.b32.xlu0 %v401, 40
  %v717 = vpop.permute.xlu0 %716
  %718 = vrot.lane.b32.xlu0 %v699, 40
  %v719 = vpop.permute.xlu0 %718
  %720 = vrot.lane.b32.xlu0 %v405, 40
  %v721 = vpop.permute.xlu0 %720
  %722 = vrot.lane.b32.xlu0 %v409, 40
  %v723 = vpop.permute.xlu0 %722
  %724 = vrot.lane.b32.xlu0 %v413, 40
  %v725 = vpop.permute.xlu0 %724
  %726 = vrot.lane.b32.xlu0 %v417, 40
  %v727 = vpop.permute.xlu0 %726
  %728 = vrot.lane.b32.xlu0 %v421, 40
  %v729 = vpop.permute.xlu0 %728
  %730 = vrot.lane.b32.xlu0 %v425, 40
  %v731 = vpop.permute.xlu0 %730
  %732 = vrot.lane.b32.xlu0 %v429, 40
  %v733 = vpop.permute.xlu0 %732
  %734 = vrot.lane.b32.xlu0 %v703, 40
  %v735 = vpop.permute.xlu0 %734
  %vm752 = vcmask 388416
  %vm753 = vmand %vm752, %vm473
  %v754 = vld [vmem:[#allocation2] sm:$0xf]
  %v755 = vsel %vm753, %v705, %v754
  %756 = vst [vmem:[#allocation2] sm:$0xf] %v755
  %v757 = vld [vmem:[#allocation2 + $0x4] sm:$0xf]
  %v758 = vsel %vm753, %v707, %v757
  %759 = vst [vmem:[#allocation2 + $0x4] sm:$0xf] %v758
  %v760 = vld [vmem:[#allocation2 + $0x8] sm:$0xf]
  %v761 = vsel %vm753, %v709, %v760
  %762 = vst [vmem:[#allocation2 + $0x8] sm:$0xf] %v761
  %v763 = vld [vmem:[#allocation2 + $0xc] sm:$0xf]
  %v764 = vsel %vm753, %v711, %v763
  %765 = vst [vmem:[#allocation2 + $0xc] sm:$0xf] %v764
  %v766 = vld [vmem:[#allocation2 + $0x10] sm:$0xf]
  %v767 = vsel %vm753, %v713, %v766
  %768 = vst [vmem:[#allocation2 + $0x10] sm:$0xf] %v767
  %v769 = vld [vmem:[#allocation2 + $0x14] sm:$0xf]
  %v770 = vsel %vm753, %v715, %v769
  %771 = vst [vmem:[#allocation2 + $0x14] sm:$0xf] %v770
  %v772 = vld [vmem:[#allocation2 + $0x18] sm:$0xf]
  %v773 = vsel %vm753, %v717, %v772
  %774 = vst [vmem:[#allocation2 + $0x18] sm:$0xf] %v773
  %v775 = vld [vmem:[#allocation2 + $0x1c] sm:$0xf]
  %v776 = vsel %vm753, %v719, %v775
  %777 = vst [vmem:[#allocation2 + $0x1c] sm:$0xf] %v776
  %v778 = vld [vmem:[#allocation2 + $0x20] sm:$0xf]
  %v779 = vsel %vm753, %v721, %v778
  %780 = vst [vmem:[#allocation2 + $0x20] sm:$0xf] %v779
  %v781 = vld [vmem:[#allocation2 + $0x24] sm:$0xf]
  %v782 = vsel %vm753, %v723, %v781
  %783 = vst [vmem:[#allocation2 + $0x24] sm:$0xf] %v782
  %v784 = vld [vmem:[#allocation2 + $0x28] sm:$0xf]
  %v785 = vsel %vm753, %v725, %v784
  %786 = vst [vmem:[#allocation2 + $0x28] sm:$0xf] %v785
  %v787 = vld [vmem:[#allocation2 + $0x2c] sm:$0xf]
  %v788 = vsel %vm753, %v727, %v787
  %789 = vst [vmem:[#allocation2 + $0x2c] sm:$0xf] %v788
  %v790 = vld [vmem:[#allocation2 + $0x30] sm:$0xf]
  %v791 = vsel %vm753, %v729, %v790
  %792 = vst [vmem:[#allocation2 + $0x30] sm:$0xf] %v791
  %v793 = vld [vmem:[#allocation2 + $0x34] sm:$0xf]
  %v794 = vsel %vm753, %v731, %v793
  %795 = vst [vmem:[#allocation2 + $0x34] sm:$0xf] %v794
  %v796 = vld [vmem:[#allocation2 + $0x38] sm:$0xf]
  %v797 = vsel %vm753, %v733, %v796
  %798 = vst [vmem:[#allocation2 + $0x38] sm:$0xf] %v797
  %v799 = vld [vmem:[#allocation2 + $0x3c] sm:$0xf]
  %v800 = vsel %vm753, %v735, %v799
  %801 = vst [vmem:[#allocation2 + $0x3c] sm:$0xf] %v800
  %802 = vrot.lane.b32.xlu0 %v158, 48
  %v803 = vpop.permute.xlu0 %802
  %804 = vrot.lane.b32.xlu0 %v165, 48
  %v805 = vpop.permute.xlu0 %804
  %806 = vrot.lane.b32.xlu0 %v172, 48
  %v807 = vpop.permute.xlu0 %806
  %808 = vrot.lane.b32.xlu0 %v179, 48
  %v809 = vpop.permute.xlu0 %808
  %810 = vrot.lane.b32.xlu0 %v186, 48
  %v811 = vpop.permute.xlu0 %810
  %812 = vrot.lane.b32.xlu0 %v193, 48
  %v813 = vpop.permute.xlu0 %812
  %814 = vrot.lane.b32.xlu0 %v523, 48
  %v815 = vpop.permute.xlu0 %814
  %816 = vrot.lane.b32.xlu0 %v207, 48
  %v817 = vpop.permute.xlu0 %816
  %818 = vrot.lane.b32.xlu0 %v214, 48
  %v819 = vpop.permute.xlu0 %818
  %820 = vrot.lane.b32.xlu0 %v221, 48
  %v821 = vpop.permute.xlu0 %820
  %822 = vrot.lane.b32.xlu0 %v228, 48
  %v823 = vpop.permute.xlu0 %822
  %824 = vrot.lane.b32.xlu0 %v235, 48
  %v825 = vpop.permute.xlu0 %824
  %826 = vrot.lane.b32.xlu0 %v242, 48
  %v827 = vpop.permute.xlu0 %826
  %828 = vrot.lane.b32.xlu0 %v530, 48
  %v829 = vpop.permute.xlu0 %828
  %vm844 = vcmask 454016
  %vm845 = vmand %vm844, %vm259
  %v846 = vld [vmem:[#allocation2] sm:$0xf]
  %v847 = vsel %vm845, %v803, %v846
  %848 = vst [vmem:[#allocation2] sm:$0xf] %v847
  %v849 = vld [vmem:[#allocation2 + $0x4] sm:$0xf]
  %v850 = vsel %vm845, %v805, %v849
  %851 = vst [vmem:[#allocation2 + $0x4] sm:$0xf] %v850
  %v852 = vld [vmem:[#allocation2 + $0x8] sm:$0xf]
  %v853 = vsel %vm845, %v807, %v852
  %854 = vst [vmem:[#allocation2 + $0x8] sm:$0xf] %v853
  %v855 = vld [vmem:[#allocation2 + $0xc] sm:$0xf]
  %v856 = vsel %vm845, %v809, %v855
  %857 = vst [vmem:[#allocation2 + $0xc] sm:$0xf] %v856
  %v858 = vld [vmem:[#allocation2 + $0x10] sm:$0xf]
  %v859 = vsel %vm845, %v811, %v858
  %860 = vst [vmem:[#allocation2 + $0x10] sm:$0xf] %v859
  %v861 = vld [vmem:[#allocation2 + $0x14] sm:$0xf]
  %v862 = vsel %vm845, %v813, %v861
  %863 = vst [vmem:[#allocation2 + $0x14] sm:$0xf] %v862
  %v864 = vld [vmem:[#allocation2 + $0x18] sm:$0xf]
  %v865 = vsel %vm845, %v815, %v864
  %866 = vst [vmem:[#allocation2 + $0x18] sm:$0xf] %v865
  %v867 = vld [vmem:[#allocation2 + $0x20] sm:$0xf]
  %v868 = vsel %vm845, %v817, %v867
  %869 = vst [vmem:[#allocation2 + $0x20] sm:$0xf] %v868
  %v870 = vld [vmem:[#allocation2 + $0x24] sm:$0xf]
  %v871 = vsel %vm845, %v819, %v870
  %872 = vst [vmem:[#allocation2 + $0x24] sm:$0xf] %v871
  %v873 = vld [vmem:[#allocation2 + $0x28] sm:$0xf]
  %v874 = vsel %vm845, %v821, %v873
  %875 = vst [vmem:[#allocation2 + $0x28] sm:$0xf] %v874
  %v876 = vld [vmem:[#allocation2 + $0x2c] sm:$0xf]
  %v877 = vsel %vm845, %v823, %v876
  %878 = vst [vmem:[#allocation2 + $0x2c] sm:$0xf] %v877
  %v879 = vld [vmem:[#allocation2 + $0x30] sm:$0xf]
  %v880 = vsel %vm845, %v825, %v879
  %881 = vst [vmem:[#allocation2 + $0x30] sm:$0xf] %v880
  %v882 = vld [vmem:[#allocation2 + $0x34] sm:$0xf]
  %v883 = vsel %vm845, %v827, %v882
  %884 = vst [vmem:[#allocation2 + $0x34] sm:$0xf] %v883
  %v885 = vld [vmem:[#allocation2 + $0x38] sm:$0xf]
  %v886 = vsel %vm845, %v829, %v885
  %887 = vst [vmem:[#allocation2 + $0x38] sm:$0xf] %v886
  %888 = vrot.lane.b32.xlu0 %v113, 56
  %v889 = vpop.permute.xlu0 %888
  %890 = vrot.lane.b32.xlu0 %v114, 56
  %v891 = vpop.permute.xlu0 %890
  %892 = vrot.lane.b32.xlu0 %v115, 56
  %v893 = vpop.permute.xlu0 %892
  %894 = vrot.lane.b32.xlu0 %v116, 56
  %v895 = vpop.permute.xlu0 %894
  %896 = vrot.lane.b32.xlu0 %v117, 56
  %v897 = vpop.permute.xlu0 %896
  %898 = vrot.lane.b32.xlu0 %v118, 56
  %v899 = vpop.permute.xlu0 %898
  %900 = vrot.lane.b32.xlu0 %v119, 56
  %v901 = vpop.permute.xlu0 %900
  %902 = vrot.lane.b32.xlu0 %v121, 56
  %v903 = vpop.permute.xlu0 %902
  %904 = vrot.lane.b32.xlu0 %v122, 56
  %v905 = vpop.permute.xlu0 %904
  %906 = vrot.lane.b32.xlu0 %v123, 56
  %v907 = vpop.permute.xlu0 %906
  %908 = vrot.lane.b32.xlu0 %v124, 56
  %v909 = vpop.permute.xlu0 %908
  %910 = vrot.lane.b32.xlu0 %v125, 56
  %v911 = vpop.permute.xlu0 %910
  %912 = vrot.lane.b32.xlu0 %v126, 56
  %v913 = vpop.permute.xlu0 %912
  %914 = vrot.lane.b32.xlu0 %v127, 56
  %v915 = vpop.permute.xlu0 %914
  %vm930 = vcmask 519616
  %931 = vst.msk [vmem:[#allocation2] sm:$0xf] %vm930, %v889
  %932 = vst.msk [vmem:[#allocation2 + $0x4] sm:$0xf] %vm930, %v891
  %933 = vst.msk [vmem:[#allocation2 + $0x8] sm:$0xf] %vm930, %v893
  %934 = vst.msk [vmem:[#allocation2 + $0xc] sm:$0xf] %vm930, %v895
  %935 = vst.msk [vmem:[#allocation2 + $0x10] sm:$0xf] %vm930, %v897
  %936 = vst.msk [vmem:[#allocation2 + $0x14] sm:$0xf] %vm930, %v899
  %937 = vst.msk [vmem:[#allocation2 + $0x18] sm:$0xf] %vm930, %v901
  %938 = vst.msk [vmem:[#allocation2 + $0x20] sm:$0xf] %vm930, %v903
  %939 = vst.msk [vmem:[#allocation2 + $0x24] sm:$0xf] %vm930, %v905
  %940 = vst.msk [vmem:[#allocation2 + $0x28] sm:$0xf] %vm930, %v907
  %941 = vst.msk [vmem:[#allocation2 + $0x2c] sm:$0xf] %vm930, %v909
  %942 = vst.msk [vmem:[#allocation2 + $0x30] sm:$0xf] %vm930, %v911
  %943 = vst.msk [vmem:[#allocation2 + $0x34] sm:$0xf] %vm930, %v913
  %944 = vst.msk [vmem:[#allocation2 + $0x38] sm:$0xf] %vm930, %v915
  %945 = vrot.lane.b32.xlu0 %v381, 64
  %v946 = vpop.permute.xlu0 %945
  %947 = vrot.lane.b32.xlu0 %v385, 64
  %v948 = vpop.permute.xlu0 %947
  %949 = vrot.lane.b32.xlu0 %v389, 64
  %v950 = vpop.permute.xlu0 %949
  %951 = vrot.lane.b32.xlu0 %v393, 64
  %v952 = vpop.permute.xlu0 %951
  %953 = vrot.lane.b32.xlu0 %v397, 64
  %v954 = vpop.permute.xlu0 %953
  %955 = vrot.lane.b32.xlu0 %v401, 64
  %v956 = vpop.permute.xlu0 %955
  %957 = vrot.lane.b32.xlu0 %v699, 64
  %v958 = vpop.permute.xlu0 %957
  %959 = vrot.lane.b32.xlu0 %v409, 64
  %v960 = vpop.permute.xlu0 %959
  %961 = vrot.lane.b32.xlu0 %v413, 64
  %v962 = vpop.permute.xlu0 %961
  %963 = vrot.lane.b32.xlu0 %v417, 64
  %v964 = vpop.permute.xlu0 %963
  %965 = vrot.lane.b32.xlu0 %v421, 64
  %v966 = vpop.permute.xlu0 %965
  %967 = vrot.lane.b32.xlu0 %v425, 64
  %v968 = vpop.permute.xlu0 %967
  %969 = vrot.lane.b32.xlu0 %v429, 64
  %v970 = vpop.permute.xlu0 %969
  %971 = vrot.lane.b32.xlu0 %v703, 64
  %v972 = vpop.permute.xlu0 %971
  %vm987 = vcmask 585216
  %vm988 = vmand %vm987, %vm473
  %v989 = vld [vmem:[#allocation2] sm:$0xf]
  %v990 = vsel %vm988, %v946, %v989
  %991 = vst [vmem:[#allocation2] sm:$0xf] %v990
  %v992 = vld [vmem:[#allocation2 + $0x4] sm:$0xf]
  %v993 = vsel %vm988, %v948, %v992
  %994 = vst [vmem:[#allocation2 + $0x4] sm:$0xf] %v993
  %v995 = vld [vmem:[#allocation2 + $0x8] sm:$0xf]
  %v996 = vsel %vm988, %v950, %v995
  %997 = vst [vmem:[#allocation2 + $0x8] sm:$0xf] %v996
  %v998 = vld [vmem:[#allocation2 + $0xc] sm:$0xf]
  %v999 = vsel %vm988, %v952, %v998
  %1000 = vst [vmem:[#allocation2 + $0xc] sm:$0xf] %v999
  %v1001 = vld [vmem:[#allocation2 + $0x10] sm:$0xf]
  %v1002 = vsel %vm988, %v954, %v1001
  %1003 = vst [vmem:[#allocation2 + $0x10] sm:$0xf] %v1002
  %v1004 = vld [vmem:[#allocation2 + $0x14] sm:$0xf]
  %v1005 = vsel %vm988, %v956, %v1004
  %1006 = vst [vmem:[#allocation2 + $0x14] sm:$0xf] %v1005
  %v1007 = vld [vmem:[#allocation2 + $0x18] sm:$0xf]
  %v1008 = vsel %vm988, %v958, %v1007
  %1009 = vst [vmem:[#allocation2 + $0x18] sm:$0xf] %v1008
  %v1010 = vld [vmem:[#allocation2 + $0x20] sm:$0xf]
  %v1011 = vsel %vm988, %v960, %v1010
  %1012 = vst [vmem:[#allocation2 + $0x20] sm:$0xf] %v1011
  %v1013 = vld [vmem:[#allocation2 + $0x24] sm:$0xf]
  %v1014 = vsel %vm988, %v962, %v1013
  %1015 = vst [vmem:[#allocation2 + $0x24] sm:$0xf] %v1014
  %v1016 = vld [vmem:[#allocation2 + $0x28] sm:$0xf]
  %v1017 = vsel %vm988, %v964, %v1016
  %1018 = vst [vmem:[#allocation2 + $0x28] sm:$0xf] %v1017
  %v1019 = vld [vmem:[#allocation2 + $0x2c] sm:$0xf]
  %v1020 = vsel %vm988, %v966, %v1019
  %1021 = vst [vmem:[#allocation2 + $0x2c] sm:$0xf] %v1020
  %v1022 = vld [vmem:[#allocation2 + $0x30] sm:$0xf]
  %v1023 = vsel %vm988, %v968, %v1022
  %1024 = vst [vmem:[#allocation2 + $0x30] sm:$0xf] %v1023
  %v1025 = vld [vmem:[#allocation2 + $0x34] sm:$0xf]
  %v1026 = vsel %vm988, %v970, %v1025
  %1027 = vst [vmem:[#allocation2 + $0x34] sm:$0xf] %v1026
  %v1028 = vld [vmem:[#allocation2 + $0x38] sm:$0xf]
  %v1029 = vsel %vm988, %v972, %v1028
  %1030 = vst [vmem:[#allocation2 + $0x38] sm:$0xf] %v1029
  %v1031 = vld [vmem:[#allocation2] sm:$0xf]
  %v1032 = vld [vmem:[#allocation2 + $0x4] sm:$0xf]
  %v1033 = vld [vmem:[#allocation2 + $0x8] sm:$0xf]
  %v1034 = vld [vmem:[#allocation2 + $0xc] sm:$0xf]
  %v1035 = vld [vmem:[#allocation2 + $0x10] sm:$0xf]
  %v1036 = vld [vmem:[#allocation2 + $0x14] sm:$0xf]
  %v1037 = vld [vmem:[#allocation2 + $0x18] sm:$0xf]
  %v1038 = vld [vmem:[#allocation2 + $0x1c] sm:$0xf]
  %v1039 = vld [vmem:[#allocation2 + $0x20] sm:$0xf]
  %v1040 = vld [vmem:[#allocation2 + $0x24] sm:$0xf]
  %v1041 = vld [vmem:[#allocation2 + $0x28] sm:$0xf]
  %v1042 = vld [vmem:[#allocation2 + $0x2c] sm:$0xf]
  %v1043 = vld [vmem:[#allocation2 + $0x30] sm:$0xf]
  %v1044 = vld [vmem:[#allocation2 + $0x34] sm:$0xf]
  %v1045 = vld [vmem:[#allocation2 + $0x38] sm:$0xf]
  %v1046 = vld [vmem:[#allocation2 + $0x3c] sm:$0xf]
  %v1047 = vld [vmem:[%s1] sm:$0xf]
  %v1048 = vld [vmem:[%s1 + $0x4] sm:$0xf]
  %v1049 = vld [vmem:[%s1 + $0x8] sm:$0xf]
  %v1050 = vld [vmem:[%s1 + $0xc] sm:$0xf]
  %v1051 = vld [vmem:[%s1 + $0x10] sm:$0xf]
  %v1052 = vld [vmem:[%s1 + $0x14] sm:$0xf]
  %v1053 = vld [vmem:[%s1 + $0x18] sm:$0xf]
  %v1054 = vld [vmem:[%s1 + $0x1c] sm:$0xf]
  %v1055 = vld [vmem:[%s1 + $0x20] sm:$0xf]
  %v1072 = vunpack.c.l.b16 %v1031
  %v1073 = vunpack.c.l.b16 %v1032
  %v1074 = vunpack.c.l.b16 %v1033
  %v1075 = vunpack.c.l.b16 %v1034
  %v1076 = vunpack.c.l.b16 %v1035
  %v1077 = vunpack.c.l.b16 %v1036
  %v1078 = vunpack.c.l.b16 %v1037
  %v1079 = vunpack.c.l.b16 %v1038
  %v1080 = vunpack.c.l.b16 %v1039
  %v1081 = vunpack.c.l.b16 %v1040
  %v1082 = vunpack.c.l.b16 %v1041
  %v1083 = vunpack.c.l.b16 %v1042
  %v1084 = vunpack.c.l.b16 %v1043
  %v1085 = vunpack.c.l.b16 %v1044
  %v1086 = vunpack.c.l.b16 %v1045
  %v1087 = vunpack.c.l.b16 %v1046
  %v1088 = vpack.c.b16 %v1073, %v1072
  %v1089 = vpack.c.b16 %v1075, %v1074
  %v1090 = vpack.c.b16 %v1077, %v1076
  %v1091 = vpack.c.b16 %v1079, %v1078
  %v1092 = vpack.c.b16 %v1081, %v1080
  %v1093 = vpack.c.b16 %v1083, %v1082
  %v1094 = vpack.c.b16 %v1085, %v1084
  %v1095 = vpack.c.b16 %v1087, %v1086
  %v1105 = vunpack.c.l.b16 %v1047
  %v1106 = vunpack.c.l.b16 %v1048
  %v1107 = vunpack.c.l.b16 %v1049
  %v1108 = vunpack.c.l.b16 %v1050
  %v1109 = vunpack.c.l.b16 %v1051
  %v1110 = vunpack.c.l.b16 %v1052
  %v1111 = vunpack.c.l.b16 %v1053
  %v1112 = vunpack.c.l.b16 %v1054
  %v1113 = vunpack.c.l.b16 %v1055
  %v1114 = vpack.c.b16 %v1106, %v1105
  %v1115 = vpack.c.b16 %v1108, %v1107
  %v1116 = vpack.c.b16 %v1110, %v1109
  %v1117 = vpack.c.b16 %v1112, %v1111
  %v1118 = vpack.c.b16 %v1113, %v1113
  %vm1123 = vcmask 588800
  %v1125 = vsel %vm1123, %v1088, 0
  %v1128 = vsel %vm1123, %v1089, 0
  %v1131 = vsel %vm1123, %v1090, 0
  %v1134 = vsel %vm1123, %v1091, 0
  %v1137 = vsel %vm1123, %v1092, 0
  %v1140 = vsel %vm1123, %v1093, 0
  %v1143 = vsel %vm1123, %v1094, 0
  %v1146 = vsel %vm1123, %v1095, 0
  %vm1148 = vcmask 1043456
  %v1150 = vsel %vm1148, %v1118, 0
  %1152 = vmatpush.bf16.msra.mxu0 0
  %1153 = vmatpush.bf16.msra.mxu0 0
  %1154 = vmatpush.bf16.msra.mxu0 0
  %1155 = vmatpush.bf16.msra.mxu0 %v1150
  %1156 = vmatpush.bf16.msra.mxu0 %v1117
  %1157 = vmatpush.bf16.msra.mxu0 %v1116
  %1158 = vmatpush.bf16.msra.mxu0 %v1115
  %1159 = vmatpush.bf16.msra.mxu0 %v1114
  %1160 = vmatmul.bf16.gmra.mxu0 %v1125
  %v1161 = vpop.f32.mrf.mxu0
  %v1162 = vadd.f32 0.0, %v1161
  %v1163 = vpop.f32.mrf.mxu0
  %v1164 = vadd.f32 0.0, %v1163
  %1165 = vmatmul.bf16.gmra.mxu0 %v1128
  %v1166 = vpop.f32.mrf.mxu0
  %v1167 = vadd.f32 0.0, %v1166
  %v1168 = vpop.f32.mrf.mxu0
  %v1169 = vadd.f32 0.0, %v1168
  %1170 = vmatmul.bf16.gmra.mxu0 %v1131
  %v1171 = vpop.f32.mrf.mxu0
  %v1172 = vadd.f32 0.0, %v1171
  %v1173 = vpop.f32.mrf.mxu0
  %v1174 = vadd.f32 0.0, %v1173
  %1175 = vmatmul.bf16.gmra.mxu0 %v1134
  %v1176 = vpop.f32.mrf.mxu0
  %v1177 = vadd.f32 0.0, %v1176
  %v1178 = vpop.f32.mrf.mxu0
  %v1179 = vadd.f32 0.0, %v1178
  %1180 = vmatmul.bf16.gmra.mxu0 %v1137
  %v1181 = vpop.f32.mrf.mxu0
  %v1182 = vadd.f32 0.0, %v1181
  %v1183 = vpop.f32.mrf.mxu0
  %v1184 = vadd.f32 0.0, %v1183
  %1185 = vmatmul.bf16.gmra.mxu0 %v1140
  %v1186 = vpop.f32.mrf.mxu0
  %v1187 = vadd.f32 0.0, %v1186
  %v1188 = vpop.f32.mrf.mxu0
  %v1189 = vadd.f32 0.0, %v1188
  %1190 = vmatmul.bf16.gmra.mxu0 %v1143
  %v1191 = vpop.f32.mrf.mxu0
  %v1192 = vadd.f32 0.0, %v1191
  %v1193 = vpop.f32.mrf.mxu0
  %v1194 = vadd.f32 0.0, %v1193
  %1195 = vmatmul.bf16.gmra.mxu0 %v1146
  %v1196 = vpop.f32.mrf.mxu0
  %v1197 = vadd.f32 0.0, %v1196
  %v1198 = vpop.f32.mrf.mxu0
  %v1199 = vadd.f32 0.0, %v1198
  %1200 = vdwg.mxu0
  %v1201 = vld [vmem:[%s4] sm:$0x1]
  %v1203 = vperm.slane %v1201, 0
  %v1205 = vmul.f32 %v1162, %v1203
  %v1206 = vmul.f32 %v1164, %v1203
  %v1207 = vmul.f32 %v1167, %v1203
  %v1208 = vmul.f32 %v1169, %v1203
  %v1209 = vmul.f32 %v1172, %v1203
  %v1210 = vmul.f32 %v1174, %v1203
  %v1211 = vmul.f32 %v1177, %v1203
  %v1212 = vmul.f32 %v1179, %v1203
  %v1213 = vmul.f32 %v1182, %v1203
  %v1214 = vmul.f32 %v1184, %v1203
  %v1215 = vmul.f32 %v1187, %v1203
  %v1216 = vmul.f32 %v1189, %v1203
  %v1217 = vmul.f32 %v1192, %v1203
  %v1218 = vmul.f32 %v1194, %v1203
  %v1219 = vmul.f32 %v1197, %v1203
  %v1220 = vmul.f32 %v1199, %v1203
  %v1221 = vld [vmem:[%s5] sm:$0x1]
  %v1223 = vperm.slane %v1221, 0
  %v1225 = vadd.f32 %v1205, %v1223
  %v1226 = vadd.f32 %v1206, %v1223
  %v1227 = vadd.f32 %v1207, %v1223
  %v1228 = vadd.f32 %v1208, %v1223
  %v1229 = vadd.f32 %v1209, %v1223
  %v1230 = vadd.f32 %v1210, %v1223
  %v1231 = vadd.f32 %v1211, %v1223
  %v1232 = vadd.f32 %v1212, %v1223
  %v1233 = vadd.f32 %v1213, %v1223
  %v1234 = vadd.f32 %v1214, %v1223
  %v1235 = vadd.f32 %v1215, %v1223
  %v1236 = vadd.f32 %v1216, %v1223
  %v1237 = vadd.f32 %v1217, %v1223
  %v1238 = vadd.f32 %v1218, %v1223
  %v1239 = vadd.f32 %v1219, %v1223
  %v1240 = vadd.f32 %v1220, %v1223
  %v1241 = vmax.f32 %v1225, 0.0
  %v1242 = vmax.f32 %v1226, 0.0
  %v1243 = vmax.f32 %v1227, 0.0
  %v1244 = vmax.f32 %v1228, 0.0
  %v1245 = vmax.f32 %v1229, 0.0
  %v1246 = vmax.f32 %v1230, 0.0
  %v1247 = vmax.f32 %v1231, 0.0
  %v1248 = vmax.f32 %v1232, 0.0
  %v1249 = vmax.f32 %v1233, 0.0
  %v1250 = vmax.f32 %v1234, 0.0
  %v1251 = vmax.f32 %v1235, 0.0
  %v1252 = vmax.f32 %v1236, 0.0
  %v1253 = vmax.f32 %v1237, 0.0
  %v1254 = vmax.f32 %v1238, 0.0
  %v1255 = vmax.f32 %v1239, 0.0
  %v1256 = vmax.f32 %v1240, 0.0
  %v1257 = vpack.c.bf16 %v1241, %v1241
  %v1258 = vpack.c.bf16 %v1242, %v1242
  %v1259 = vpack.c.bf16 %v1243, %v1243
  %v1260 = vpack.c.bf16 %v1244, %v1244
  %v1261 = vpack.c.bf16 %v1245, %v1245
  %v1262 = vpack.c.bf16 %v1246, %v1246
  %v1263 = vpack.c.bf16 %v1247, %v1247
  %v1264 = vpack.c.bf16 %v1248, %v1248
  %v1265 = vpack.c.bf16 %v1249, %v1249
  %v1266 = vpack.c.bf16 %v1250, %v1250
  %v1267 = vpack.c.bf16 %v1251, %v1251
  %v1268 = vpack.c.bf16 %v1252, %v1252
  %v1269 = vpack.c.bf16 %v1253, %v1253
  %v1270 = vpack.c.bf16 %v1254, %v1254
  %v1271 = vpack.c.bf16 %v1255, %v1255
  %v1272 = vpack.c.bf16 %v1256, %v1256
  %vm1273 = vcmask 60416
  %1274 = vst.msk [vmem:[%s6] sm:$0xf] %vm1273, %v1257
  %1275 = vst.msk [vmem:[%s6 + $0x4] sm:$0xf] %vm1273, %v1258
  %1276 = vst.msk [vmem:[%s6 + $0x8] sm:$0xf] %vm1273, %v1259
  %1277 = vst.msk [vmem:[%s6 + $0xc] sm:$0xf] %vm1273, %v1260
  %1278 = vst.msk [vmem:[%s6 + $0x10] sm:$0xf] %vm1273, %v1261
  %1279 = vst.msk [vmem:[%s6 + $0x14] sm:$0xf] %vm1273, %v1262
  %1280 = vst.msk [vmem:[%s6 + $0x18] sm:$0xf] %vm1273, %v1263
  %1281 = vst.msk [vmem:[%s6 + $0x1c] sm:$0xf] %vm1273, %v1264
  %1282 = vst.msk [vmem:[%s6 + $0x20] sm:$0xf] %vm1273, %v1265
  %1283 = vst.msk [vmem:[%s6 + $0x24] sm:$0xf] %vm1273, %v1266
  %1284 = vst.msk [vmem:[%s6 + $0x28] sm:$0xf] %vm1273, %v1267
  %1285 = vst.msk [vmem:[%s6 + $0x2c] sm:$0xf] %vm1273, %v1268
  %1286 = vst.msk [vmem:[%s6 + $0x30] sm:$0xf] %vm1273, %v1269
  %1287 = vst.msk [vmem:[%s6 + $0x34] sm:$0xf] %vm1273, %v1270
  %1288 = vst.msk [vmem:[%s6 + $0x38] sm:$0xf] %vm1273, %v1271
  %1289 = vst.msk [vmem:[%s6 + $0x3c] sm:$0xf] %vm1273, %v1272
  // Predicated region
  $region26: #{_lambda_.6} parent=0 // pred_check
    _
  $region27: #{_lambda_.6} parent=0 // pred_check_branch
    %1291 = sbr.rel (0) target = $region29
  $region28: #{_lambda_.6} parent=0 // pred_region
    _
  $region29: #{_lambda_.6} parent=0 // pred_fallthru
    _
  // Predicated region
  $region30: #{_lambda_.6} parent=0 // pred_check
    _
  $region31: #{_lambda_.6} parent=0 // pred_check_branch
    %1293 = sbr.rel (0) target = $region33
  $region32: #{_lambda_.6} parent=0 // pred_region
    _
  $region33: #{_lambda_.6} parent=0 // pred_fallthru
    _

// kernel: _lambda_.4
$region0: #{_lambda_.4}
  #allocation0 [shape = 'u32[]', space=smem, size = 0x4, offset = 0x4, fixed_abs, tag = 'smem constant byte address 0x4 - core index']
  #allocation1 [shape = 'u32[72,128]{1,0:T(1,128)}', space=vmem, size = 0x9000, scoped, tag = 'internal scratch']
  #allocation2 [shape = 'bf16[2,8,8,36]{3,2,1,0:T(8,128)(2,1)}', space=vmem, size = 0x8000, scoped, tag = 'scratch operand']
  %s0 = inlined_call_operand.vmem [shape: f32[2,4,8,8,4], index: 0, kind: input, shape index: {}]
  %s1 = inlined_call_operand.vmem [shape: bf16[36,8], index: 1, kind: input, shape index: {}]
  %s2 = inlined_call_operand.vmem [shape: f32[1,4], index: 2, kind: input, shape index: {}]
  %s3 = inlined_call_operand.vmem [shape: f32[1,4], index: 3, kind: input, shape index: {}]
  %s4 = inlined_call_operand.vmem [shape: f32[1,8], index: 4, kind: input, shape index: {}]
  %s5 = inlined_call_operand.vmem [shape: f32[1,8], index: 5, kind: input, shape index: {}]
  %s6 = inlined_call_operand.vmem [shape: bf16[2,8,8,8], index: 6, kind: output, shape index: {}]
  %s7 = sld [smem:[#allocation0]]
  $region34: #{_lambda_.4} parent=0
    _
  %s9 = ssub.s32 1, %s7
  %s10 = scalar_select 0, %s9, %s7
  // Predicated region
  $region2: #{_lambda_.4} parent=0 // pred_check
    _
  $region3: #{_lambda_.4} parent=0 // pred_check_branch
    %12 = sbr.rel (0) target = $region5
  $region4: #{_lambda_.4} parent=0 // pred_region
    _
  $region5: #{_lambda_.4} parent=0 // pred_fallthru
    _
  // Predicated region
  $region6: #{_lambda_.4} parent=0 // pred_check
    _
  $region7: #{_lambda_.4} parent=0 // pred_check_branch
    %14 = sbr.rel (0) target = $region9
  $region8: #{_lambda_.4} parent=0 // pred_region
    _
  $region9: #{_lambda_.4} parent=0 // pred_fallthru
    _
  // Predicated region
  $region10: #{_lambda_.4} parent=0 // pred_check
    _
  $region11: #{_lambda_.4} parent=0 // pred_check_branch
    %16 = sbr.rel (0) target = $region13
  $region12: #{_lambda_.4} parent=0 // pred_region
    _
  $region13: #{_lambda_.4} parent=0 // pred_fallthru
    _
  // Predicated region
  $region14: #{_lambda_.4} parent=0 // pred_check
    _
  $region15: #{_lambda_.4} parent=0 // pred_check_branch
    %18 = sbr.rel (0) target = $region17
  $region16: #{_lambda_.4} parent=0 // pred_region
    _
  $region17: #{_lambda_.4} parent=0 // pred_fallthru
    _
  // Predicated region
  $region18: #{_lambda_.4} parent=0 // pred_check
    _
  $region19: #{_lambda_.4} parent=0 // pred_check_branch
    %20 = sbr.rel (0) target = $region21
  $region20: #{_lambda_.4} parent=0 // pred_region
    _
  $region21: #{_lambda_.4} parent=0 // pred_fallthru
    _
  // Predicated region
  $region22: #{_lambda_.4} parent=0 // pred_check
    _
  $region23: #{_lambda_.4} parent=0 // pred_check_branch
    %22 = sbr.rel (0) target = $region25
  $region24: #{_lambda_.4} parent=0 // pred_region
    _
  $region25: #{_lambda_.4} parent=0 // pred_fallthru
    _
  %v24 = vld [vmem:[%s0] sm:$0xff]
  %v25 = vld [vmem:[%s0 + $0x8] sm:$0xff]
  %v26 = vld [vmem:[%s0 + $0x10] sm:$0xff]
  %v27 = vld [vmem:[%s0 + $0x18] sm:$0xff]
  %v28 = vld [vmem:[%s0 + $0x20] sm:$0xff]
  %v29 = vld [vmem:[%s0 + $0x28] sm:$0xff]
  %v30 = vld [vmem:[%s0 + $0x30] sm:$0xff]
  %v31 = vld [vmem:[%s0 + $0x38] sm:$0xff]
  %v32 = vld [vmem:[%s0 + $0x40] sm:$0xff]
  %v33 = vld [vmem:[%s0 + $0x48] sm:$0xff]
  %v34 = vld [vmem:[%s0 + $0x50] sm:$0xff]
  %v35 = vld [vmem:[%s0 + $0x58] sm:$0xff]
  %v36 = vld [vmem:[%s0 + $0x60] sm:$0xff]
  %v37 = vld [vmem:[%s0 + $0x68] sm:$0xff]
  %v38 = vld [vmem:[%s0 + $0x70] sm:$0xff]
  %v39 = vld [vmem:[%s0 + $0x78] sm:$0xff]
  %v40 = vld [vmem:[%s0 + $0x80] sm:$0xff]
  %v41 = vld [vmem:[%s0 + $0x88] sm:$0xff]
  %v42 = vld [vmem:[%s0 + $0x90] sm:$0xff]
  %v43 = vld [vmem:[%s0 + $0x98] sm:$0xff]
  %v44 = vld [vmem:[%s0 + $0xa0] sm:$0xff]
  %v45 = vld [vmem:[%s0 + $0xa8] sm:$0xff]
  %v46 = vld [vmem:[%s0 + $0xb0] sm:$0xff]
  %v47 = vld [vmem:[%s0 + $0xb8] sm:$0xff]
  %v48 = vld [vmem:[%s0 + $0xc0] sm:$0xff]
  %v49 = vld [vmem:[%s0 + $0xc8] sm:$0xff]
  %v50 = vld [vmem:[%s0 + $0xd0] sm:$0xff]
  %v51 = vld [vmem:[%s0 + $0xd8] sm:$0xff]
  %v52 = vld [vmem:[%s0 + $0xe0] sm:$0xff]
  %v53 = vld [vmem:[%s0 + $0xe8] sm:$0xff]
  %v54 = vld [vmem:[%s0 + $0xf0] sm:$0xff]
  %v55 = vld [vmem:[%s0 + $0xf8] sm:$0xff]
  %v56 = vld [vmem:[%s0 + $0x100] sm:$0xff]
  %v57 = vld [vmem:[%s0 + $0x108] sm:$0xff]
  %v58 = vld [vmem:[%s0 + $0x110] sm:$0xff]
  %v59 = vld [vmem:[%s0 + $0x118] sm:$0xff]
  %v60 = vld [vmem:[%s0 + $0x120] sm:$0xff]
  %v61 = vld [vmem:[%s0 + $0x128] sm:$0xff]
  %v62 = vld [vmem:[%s0 + $0x130] sm:$0xff]
  %v63 = vld [vmem:[%s0 + $0x138] sm:$0xff]
  %v64 = vld [vmem:[%s0 + $0x140] sm:$0xff]
  %v65 = vld [vmem:[%s0 + $0x148] sm:$0xff]
  %v66 = vld [vmem:[%s0 + $0x150] sm:$0xff]
  %v67 = vld [vmem:[%s0 + $0x158] sm:$0xff]
  %v68 = vld [vmem:[%s0 + $0x160] sm:$0xff]
  %v69 = vld [vmem:[%s0 + $0x168] sm:$0xff]
  %v70 = vld [vmem:[%s0 + $0x170] sm:$0xff]
  %v71 = vld [vmem:[%s0 + $0x178] sm:$0xff]
  %v72 = vld [vmem:[%s0 + $0x180] sm:$0xff]
  %v73 = vld [vmem:[%s0 + $0x188] sm:$0xff]
  %v74 = vld [vmem:[%s0 + $0x190] sm:$0xff]
  %v75 = vld [vmem:[%s0 + $0x198] sm:$0xff]
  %v76 = vld [vmem:[%s0 + $0x1a0] sm:$0xff]
  %v77 = vld [vmem:[%s0 + $0x1a8] sm:$0xff]
  %v78 = vld [vmem:[%s0 + $0x1b0] sm:$0xff]
  %v79 = vld [vmem:[%s0 + $0x1b8] sm:$0xff]
  %v80 = vld [vmem:[%s0 + $0x1c0] sm:$0xff]
  %v81 = vld [vmem:[%s0 + $0x1c8] sm:$0xff]
  %v82 = vld [vmem:[%s0 + $0x1d0] sm:$0xff]
  %v83 = vld [vmem:[%s0 + $0x1d8] sm:$0xff]
  %v84 = vld [vmem:[%s0 + $0x1e0] sm:$0xff]
  %v85 = vld [vmem:[%s0 + $0x1e8] sm:$0xff]
  %v86 = vld [vmem:[%s0 + $0x1f0] sm:$0xff]
  %v87 = vld [vmem:[%s0 + $0x1f8] sm:$0xff]
  %v88 = vld [vmem:[%s2] sm:$0x1]
  %v90 = vperm.slane %v88, 0
  %v92 = vmul.f32 %v24, %v90
  %v93 = vmul.f32 %v25, %v90
  %v94 = vmul.f32 %v26, %v90
  %v95 = vmul.f32 %v27, %v90
  %v96 = vmul.f32 %v28, %v90
  %v97 = vmul.f32 %v29, %v90
  %v98 = vmul.f32 %v30, %v90
  %v99 = vmul.f32 %v31, %v90
  %v100 = vmul.f32 %v56, %v90
  %v101 = vmul.f32 %v57, %v90
  %v102 = vmul.f32 %v58, %v90
  %v103 = vmul.f32 %v59, %v90
  %v104 = vmul.f32 %v60, %v90
  %v105 = vmul.f32 %v61, %v90
  %v106 = vmul.f32 %v62, %v90
  %v107 = vmul.f32 %v63, %v90
  %v108 = vld [vmem:[%s3] sm:$0x1]
  %v110 = vperm.slane %v108, 0
  %v112 = vadd.f32 %v92, %v110
  %v113 = vadd.f32 %v93, %v110
  %v114 = vadd.f32 %v94, %v110
  %v115 = vadd.f32 %v95, %v110
  %v116 = vadd.f32 %v96, %v110
  %v117 = vadd.f32 %v97, %v110
  %v118 = vadd.f32 %v98, %v110
  %v119 = vadd.f32 %v99, %v110
  %v120 = vadd.f32 %v100, %v110
  %v121 = vadd.f32 %v101, %v110
  %v122 = vadd.f32 %v102, %v110
  %v123 = vadd.f32 %v103, %v110
  %v124 = vadd.f32 %v104, %v110
  %v125 = vadd.f32 %v105, %v110
  %v126 = vadd.f32 %v106, %v110
  %v127 = vadd.f32 %v107, %v110
  %v128 = vmax.f32 %v112, 0.0
  %v129 = vmax.f32 %v113, 0.0
  %v130 = vmax.f32 %v114, 0.0
  %v131 = vmax.f32 %v115, 0.0
  %v132 = vmax.f32 %v116, 0.0
  %v133 = vmax.f32 %v117, 0.0
  %v134 = vmax.f32 %v118, 0.0
  %v135 = vmax.f32 %v119, 0.0
  %v136 = vmax.f32 %v120, 0.0
  %v137 = vmax.f32 %v121, 0.0
  %v138 = vmax.f32 %v122, 0.0
  %v139 = vmax.f32 %v123, 0.0
  %v140 = vmax.f32 %v124, 0.0
  %v141 = vmax.f32 %v125, 0.0
  %v142 = vmax.f32 %v126, 0.0
  %v143 = vmax.f32 %v127, 0.0
  %v144 = vpack.c.bf16 %v128, %v128
  %v145 = vpack.c.bf16 %v129, %v129
  %v146 = vpack.c.bf16 %v130, %v130
  %v147 = vpack.c.bf16 %v131, %v131
  %v148 = vpack.c.bf16 %v132, %v132
  %v149 = vpack.c.bf16 %v133, %v133
  %v150 = vpack.c.bf16 %v134, %v134
  %v151 = vpack.c.bf16 %v135, %v135
  %v152 = vpack.c.bf16 %v136, %v136
  %v153 = vpack.c.bf16 %v137, %v137
  %v154 = vpack.c.bf16 %v138, %v138
  %v155 = vpack.c.bf16 %v139, %v139
  %v156 = vpack.c.bf16 %v140, %v140
  %v157 = vpack.c.bf16 %v141, %v141
  %v158 = vpack.c.bf16 %v142, %v142
  %v159 = vpack.c.bf16 %v143, %v143
  %v160 = vmul.f32 %v32, %v90
  %v161 = vmul.f32 %v33, %v90
  %v162 = vmul.f32 %v34, %v90
  %v163 = vmul.f32 %v35, %v90
  %v164 = vmul.f32 %v36, %v90
  %v165 = vmul.f32 %v37, %v90
  %v166 = vmul.f32 %v38, %v90
  %v167 = vmul.f32 %v39, %v90
  %v168 = vmul.f32 %v64, %v90
  %v169 = vmul.f32 %v65, %v90
  %v170 = vmul.f32 %v66, %v90
  %v171 = vmul.f32 %v67, %v90
  %v172 = vmul.f32 %v68, %v90
  %v173 = vmul.f32 %v69, %v90
  %v174 = vmul.f32 %v70, %v90
  %v175 = vmul.f32 %v71, %v90
  %v176 = vadd.f32 %v160, %v110
  %v177 = vadd.f32 %v161, %v110
  %v178 = vadd.f32 %v162, %v110
  %v179 = vadd.f32 %v163, %v110
  %v180 = vadd.f32 %v164, %v110
  %v181 = vadd.f32 %v165, %v110
  %v182 = vadd.f32 %v166, %v110
  %v183 = vadd.f32 %v167, %v110
  %v184 = vadd.f32 %v168, %v110
  %v185 = vadd.f32 %v169, %v110
  %v186 = vadd.f32 %v170, %v110
  %v187 = vadd.f32 %v171, %v110
  %v188 = vadd.f32 %v172, %v110
  %v189 = vadd.f32 %v173, %v110
  %v190 = vadd.f32 %v174, %v110
  %v191 = vadd.f32 %v175, %v110
  %v192 = vmax.f32 %v176, 0.0
  %v193 = vmax.f32 %v177, 0.0
  %v194 = vmax.f32 %v178, 0.0
  %v195 = vmax.f32 %v179, 0.0
  %v196 = vmax.f32 %v180, 0.0
  %v197 = vmax.f32 %v181, 0.0
  %v198 = vmax.f32 %v182, 0.0
  %v199 = vmax.f32 %v183, 0.0
  %v200 = vmax.f32 %v184, 0.0
  %v201 = vmax.f32 %v185, 0.0
  %v202 = vmax.f32 %v186, 0.0
  %v203 = vmax.f32 %v187, 0.0
  %v204 = vmax.f32 %v188, 0.0
  %v205 = vmax.f32 %v189, 0.0
  %v206 = vmax.f32 %v190, 0.0
  %v207 = vmax.f32 %v191, 0.0
  %v208 = vpack.c.bf16 %v192, %v192
  %v209 = vpack.c.bf16 %v193, %v193
  %v210 = vpack.c.bf16 %v194, %v194
  %v211 = vpack.c.bf16 %v195, %v195
  %v212 = vpack.c.bf16 %v196, %v196
  %v213 = vpack.c.bf16 %v197, %v197
  %v214 = vpack.c.bf16 %v198, %v198
  %v215 = vpack.c.bf16 %v199, %v199
  %v216 = vpack.c.bf16 %v200, %v200
  %v217 = vpack.c.bf16 %v201, %v201
  %v218 = vpack.c.bf16 %v202, %v202
  %v219 = vpack.c.bf16 %v203, %v203
  %v220 = vpack.c.bf16 %v204, %v204
  %v221 = vpack.c.bf16 %v205, %v205
  %v222 = vpack.c.bf16 %v206, %v206
  %v223 = vpack.c.bf16 %v207, %v207
  %v224 = vmul.f32 %v40, %v90
  %v225 = vmul.f32 %v41, %v90
  %v226 = vmul.f32 %v42, %v90
  %v227 = vmul.f32 %v43, %v90
  %v228 = vmul.f32 %v44, %v90
  %v229 = vmul.f32 %v45, %v90
  %v230 = vmul.f32 %v46, %v90
  %v231 = vmul.f32 %v47, %v90
  %v232 = vmul.f32 %v72, %v90
  %v233 = vmul.f32 %v73, %v90
  %v234 = vmul.f32 %v74, %v90
  %v235 = vmul.f32 %v75, %v90
  %v236 = vmul.f32 %v76, %v90
  %v237 = vmul.f32 %v77, %v90
  %v238 = vmul.f32 %v78, %v90
  %v239 = vmul.f32 %v79, %v90
  %v240 = vadd.f32 %v224, %v110
  %v241 = vadd.f32 %v225, %v110
  %v242 = vadd.f32 %v226, %v110
  %v243 = vadd.f32 %v227, %v110
  %v244 = vadd.f32 %v228, %v110
  %v245 = vadd.f32 %v229, %v110
  %v246 = vadd.f32 %v230, %v110
  %v247 = vadd.f32 %v231, %v110
  %v248 = vadd.f32 %v232, %v110
  %v249 = vadd.f32 %v233, %v110
  %v250 = vadd.f32 %v234, %v110
  %v251 = vadd.f32 %v235, %v110
  %v252 = vadd.f32 %v236, %v110
  %v253 = vadd.f32 %v237, %v110
  %v254 = vadd.f32 %v238, %v110
  %v255 = vadd.f32 %v239, %v110
  %v256 = vmax.f32 %v240, 0.0
  %v257 = vmax.f32 %v241, 0.0
  %v258 = vmax.f32 %v242, 0.0
  %v259 = vmax.f32 %v243, 0.0
  %v260 = vmax.f32 %v244, 0.0
  %v261 = vmax.f32 %v245, 0.0
  %v262 = vmax.f32 %v246, 0.0
  %v263 = vmax.f32 %v247, 0.0
  %v264 = vmax.f32 %v248, 0.0
  %v265 = vmax.f32 %v249, 0.0
  %v266 = vmax.f32 %v250, 0.0
  %v267 = vmax.f32 %v251, 0.0
  %v268 = vmax.f32 %v252, 0.0
  %v269 = vmax.f32 %v253, 0.0
  %v270 = vmax.f32 %v254, 0.0
  %v271 = vmax.f32 %v255, 0.0
  %v272 = vpack.c.bf16 %v256, %v256
  %v273 = vpack.c.bf16 %v257, %v257
  %v274 = vpack.c.bf16 %v258, %v258
  %v275 = vpack.c.bf16 %v259, %v259
  %v276 = vpack.c.bf16 %v260, %v260
  %v277 = vpack.c.bf16 %v261, %v261
  %v278 = vpack.c.bf16 %v262, %v262
  %v279 = vpack.c.bf16 %v263, %v263
  %v280 = vpack.c.bf16 %v264, %v264
  %v281 = vpack.c.bf16 %v265, %v265
  %v282 = vpack.c.bf16 %v266, %v266
  %v283 = vpack.c.bf16 %v267, %v267
  %v284 = vpack.c.bf16 %v268, %v268
  %v285 = vpack.c.bf16 %v269, %v269
  %v286 = vpack.c.bf16 %v270, %v270
  %v287 = vpack.c.bf16 %v271, %v271
  %v288 = vmul.f32 %v48, %v90
  %v289 = vmul.f32 %v49, %v90
  %v290 = vmul.f32 %v50, %v90
  %v291 = vmul.f32 %v51, %v90
  %v292 = vmul.f32 %v52, %v90
  %v293 = vmul.f32 %v53, %v90
  %v294 = vmul.f32 %v54, %v90
  %v295 = vmul.f32 %v55, %v90
  %v296 = vmul.f32 %v80, %v90
  %v297 = vmul.f32 %v81, %v90
  %v298 = vmul.f32 %v82, %v90
  %v299 = vmul.f32 %v83, %v90
  %v300 = vmul.f32 %v84, %v90
  %v301 = vmul.f32 %v85, %v90
  %v302 = vmul.f32 %v86, %v90
  %v303 = vmul.f32 %v87, %v90
  %v304 = vadd.f32 %v288, %v110
  %v305 = vadd.f32 %v289, %v110
  %v306 = vadd.f32 %v290, %v110
  %v307 = vadd.f32 %v291, %v110
  %v308 = vadd.f32 %v292, %v110
  %v309 = vadd.f32 %v293, %v110
  %v310 = vadd.f32 %v294, %v110
  %v311 = vadd.f32 %v295, %v110
  %v312 = vadd.f32 %v296, %v110
  %v313 = vadd.f32 %v297, %v110
  %v314 = vadd.f32 %v298, %v110
  %v315 = vadd.f32 %v299, %v110
  %v316 = vadd.f32 %v300, %v110
  %v317 = vadd.f32 %v301, %v110
  %v318 = vadd.f32 %v302, %v110
  %v319 = vadd.f32 %v303, %v110
  %v320 = vmax.f32 %v304, 0.0
  %v321 = vmax.f32 %v305, 0.0
  %v322 = vmax.f32 %v306, 0.0
  %v323 = vmax.f32 %v307, 0.0
  %v324 = vmax.f32 %v308, 0.0
  %v325 = vmax.f32 %v309, 0.0
  %v326 = vmax.f32 %v310, 0.0
  %v327 = vmax.f32 %v311, 0.0
  %v328 = vmax.f32 %v312, 0.0
  %v329 = vmax.f32 %v313, 0.0
  %v330 = vmax.f32 %v314, 0.0
  %v331 = vmax.f32 %v315, 0.0
  %v332 = vmax.f32 %v316, 0.0
  %v333 = vmax.f32 %v317, 0.0
  %v334 = vmax.f32 %v318, 0.0
  %v335 = vmax.f32 %v319, 0.0
  %v336 = vpack.c.bf16 %v320, %v320
  %v337 = vpack.c.bf16 %v321, %v321
  %v338 = vpack.c.bf16 %v322, %v322
  %v339 = vpack.c.bf16 %v323, %v323
  %v340 = vpack.c.bf16 %v324, %v324
  %v341 = vpack.c.bf16 %v325, %v325
  %v342 = vpack.c.bf16 %v326, %v326
  %v343 = vpack.c.bf16 %v327, %v327
  %v344 = vpack.c.bf16 %v328, %v328
  %v345 = vpack.c.bf16 %v329, %v329
  %v346 = vpack.c.bf16 %v330, %v330
  %v347 = vpack.c.bf16 %v331, %v331
  %v348 = vpack.c.bf16 %v332, %v332
  %v349 = vpack.c.bf16 %v333, %v333
  %v350 = vpack.c.bf16 %v334, %v334
  %v351 = vpack.c.bf16 %v335, %v335
  %vm352 = vcmask 289792
  %353 = vst.msk [vmem:[#allocation2] sm:$0xf] %vm352, 0
  %354 = vst.msk [vmem:[#allocation2 + $0x4] sm:$0xf] %vm352, 0
  %355 = vst.msk [vmem:[#allocation2 + $0x8] sm:$0xf] %vm352, 0
  %356 = vst.msk [vmem:[#allocation2 + $0xc] sm:$0xf] %vm352, 0
  %357 = vst.msk [vmem:[#allocation2 + $0x10] sm:$0xf] %vm352, 0
  %358 = vst.msk [vmem:[#allocation2 + $0x14] sm:$0xf] %vm352, 0
  %359 = vst.msk [vmem:[#allocation2 + $0x18] sm:$0xf] %vm352, 0
  %360 = vst.msk [vmem:[#allocation2 + $0x1c] sm:$0xf] %vm352, 0
  %361 = vst.msk [vmem:[#allocation2 + $0x20] sm:$0xf] %vm352, 0
  %362 = vst.msk [vmem:[#allocation2 + $0x24] sm:$0xf] %vm352, 0
  %363 = vst.msk [vmem:[#allocation2 + $0x28] sm:$0xf] %vm352, 0
  %364 = vst.msk [vmem:[#allocation2 + $0x2c] sm:$0xf] %vm352, 0
  %365 = vst.msk [vmem:[#allocation2 + $0x30] sm:$0xf] %vm352, 0
  %366 = vst.msk [vmem:[#allocation2 + $0x34] sm:$0xf] %vm352, 0
  %367 = vst.msk [vmem:[#allocation2 + $0x38] sm:$0xf] %vm352, 0
  %368 = vst.msk [vmem:[#allocation2 + $0x3c] sm:$0xf] %vm352, 0
  %v370 = vshrl.u32 %v336, 16
  %v372 = vrot.slane %v370, 7
  %v373 = vshll.u32 %v336, 16
  %v375 = vor.u32 %v372, %v373
  %v377 = vshrl.u32 %v337, 16
  %v379 = vrot.slane %v377, 7
  %v380 = vshll.u32 %v337, 16
  %v382 = vor.u32 %v379, %v380
  %v384 = vshrl.u32 %v338, 16
  %v386 = vrot.slane %v384, 7
  %v387 = vshll.u32 %v338, 16
  %v389 = vor.u32 %v386, %v387
  %v391 = vshrl.u32 %v339, 16
  %v393 = vrot.slane %v391, 7
  %v394 = vshll.u32 %v339, 16
  %v396 = vor.u32 %v393, %v394
  %v398 = vshrl.u32 %v340, 16
  %v400 = vrot.slane %v398, 7
  %v401 = vshll.u32 %v340, 16
  %v403 = vor.u32 %v400, %v401
  %v405 = vshrl.u32 %v341, 16
  %v407 = vrot.slane %v405, 7
  %v408 = vshll.u32 %v341, 16
  %v410 = vor.u32 %v407, %v408
  %v412 = vshrl.u32 %v342, 16
  %v414 = vrot.slane %v412, 7
  %v415 = vshll.u32 %v342, 16
  %v417 = vor.u32 %v414, %v415
  %v419 = vshrl.u32 %v344, 16
  %v421 = vrot.slane %v419, 7
  %v422 = vshll.u32 %v344, 16
  %v424 = vor.u32 %v421, %v422
  %v426 = vshrl.u32 %v345, 16
  %v428 = vrot.slane %v426, 7
  %v429 = vshll.u32 %v345, 16
  %v431 = vor.u32 %v428, %v429
  %v433 = vshrl.u32 %v346, 16
  %v435 = vrot.slane %v433, 7
  %v436 = vshll.u32 %v346, 16
  %v438 = vor.u32 %v435, %v436
  %v440 = vshrl.u32 %v347, 16
  %v442 = vrot.slane %v440, 7
  %v443 = vshll.u32 %v347, 16
  %v445 = vor.u32 %v442, %v443
  %v447 = vshrl.u32 %v348, 16
  %v449 = vrot.slane %v447, 7
  %v450 = vshll.u32 %v348, 16
  %v452 = vor.u32 %v449, %v450
  %v454 = vshrl.u32 %v349, 16
  %v456 = vrot.slane %v454, 7
  %v457 = vshll.u32 %v349, 16
  %v459 = vor.u32 %v456, %v457
  %v461 = vshrl.u32 %v350, 16
  %v463 = vrot.slane %v461, 7
  %v464 = vshll.u32 %v350, 16
  %v466 = vor.u32 %v463, %v464
  %s481 = scalar_lea.vmem [#allocation2], 4
  %vm482 = vcmask 27648
  %vm483 = vsmask.f32 7938
  %vm484 = vmand %vm482, %vm483
  %v485 = vld [vmem:[%s481] sm:$0xf]
  %v486 = vsel %vm484, %v375, %v485
  %487 = vst [vmem:[%s481] sm:$0xf] %v486
  %v488 = vld [vmem:[%s481 + $0x4] sm:$0xf]
  %v489 = vsel %vm484, %v382, %v488
  %490 = vst [vmem:[%s481 + $0x4] sm:$0xf] %v489
  %v491 = vld [vmem:[%s481 + $0x8] sm:$0xf]
  %v492 = vsel %vm484, %v389, %v491
  %493 = vst [vmem:[%s481 + $0x8] sm:$0xf] %v492
  %v494 = vld [vmem:[%s481 + $0xc] sm:$0xf]
  %v495 = vsel %vm484, %v396, %v494
  %496 = vst [vmem:[%s481 + $0xc] sm:$0xf] %v495
  %v497 = vld [vmem:[%s481 + $0x10] sm:$0xf]
  %v498 = vsel %vm484, %v403, %v497
  %499 = vst [vmem:[%s481 + $0x10] sm:$0xf] %v498
  %v500 = vld [vmem:[%s481 + $0x14] sm:$0xf]
  %v501 = vsel %vm484, %v410, %v500
  %502 = vst [vmem:[%s481 + $0x14] sm:$0xf] %v501
  %v503 = vld [vmem:[%s481 + $0x18] sm:$0xf]
  %v504 = vsel %vm484, %v417, %v503
  %505 = vst [vmem:[%s481 + $0x18] sm:$0xf] %v504
  %v506 = vld [vmem:[%s481 + $0x20] sm:$0xf]
  %v507 = vsel %vm484, %v424, %v506
  %508 = vst [vmem:[%s481 + $0x20] sm:$0xf] %v507
  %v509 = vld [vmem:[%s481 + $0x24] sm:$0xf]
  %v510 = vsel %vm484, %v431, %v509
  %511 = vst [vmem:[%s481 + $0x24] sm:$0xf] %v510
  %v512 = vld [vmem:[%s481 + $0x28] sm:$0xf]
  %v513 = vsel %vm484, %v438, %v512
  %514 = vst [vmem:[%s481 + $0x28] sm:$0xf] %v513
  %v515 = vld [vmem:[%s481 + $0x2c] sm:$0xf]
  %v516 = vsel %vm484, %v445, %v515
  %517 = vst [vmem:[%s481 + $0x2c] sm:$0xf] %v516
  %v518 = vld [vmem:[%s481 + $0x30] sm:$0xf]
  %v519 = vsel %vm484, %v452, %v518
  %520 = vst [vmem:[%s481 + $0x30] sm:$0xf] %v519
  %v521 = vld [vmem:[%s481 + $0x34] sm:$0xf]
  %v522 = vsel %vm484, %v459, %v521
  %523 = vst [vmem:[%s481 + $0x34] sm:$0xf] %v522
  %v524 = vld [vmem:[%s481 + $0x38] sm:$0xf]
  %v525 = vsel %vm484, %v466, %v524
  %526 = vst [vmem:[%s481 + $0x38] sm:$0xf] %v525
  %541 = vrot.lane.b32.xlu0 %v272, 4
  %v542 = vpop.permute.xlu0 %541
  %543 = vrot.lane.b32.xlu0 %v273, 4
  %v544 = vpop.permute.xlu0 %543
  %545 = vrot.lane.b32.xlu0 %v274, 4
  %v546 = vpop.permute.xlu0 %545
  %547 = vrot.lane.b32.xlu0 %v275, 4
  %v548 = vpop.permute.xlu0 %547
  %549 = vrot.lane.b32.xlu0 %v276, 4
  %v550 = vpop.permute.xlu0 %549
  %551 = vrot.lane.b32.xlu0 %v277, 4
  %v552 = vpop.permute.xlu0 %551
  %553 = vrot.lane.b32.xlu0 %v278, 4
  %v554 = vpop.permute.xlu0 %553
  %555 = vrot.lane.b32.xlu0 %v280, 4
  %v556 = vpop.permute.xlu0 %555
  %557 = vrot.lane.b32.xlu0 %v281, 4
  %v558 = vpop.permute.xlu0 %557
  %559 = vrot.lane.b32.xlu0 %v282, 4
  %v560 = vpop.permute.xlu0 %559
  %561 = vrot.lane.b32.xlu0 %v283, 4
  %v562 = vpop.permute.xlu0 %561
  %563 = vrot.lane.b32.xlu0 %v284, 4
  %v564 = vpop.permute.xlu0 %563
  %565 = vrot.lane.b32.xlu0 %v285, 4
  %v566 = vpop.permute.xlu0 %565
  %567 = vrot.lane.b32.xlu0 %v286, 4
  %v568 = vpop.permute.xlu0 %567
  %vm583 = vcmask 60448
  %584 = vst.msk [vmem:[%s481] sm:$0xf] %vm583, %v542
  %585 = vst.msk [vmem:[%s481 + $0x4] sm:$0xf] %vm583, %v544
  %586 = vst.msk [vmem:[%s481 + $0x8] sm:$0xf] %vm583, %v546
  %587 = vst.msk [vmem:[%s481 + $0xc] sm:$0xf] %vm583, %v548
  %588 = vst.msk [vmem:[%s481 + $0x10] sm:$0xf] %vm583, %v550
  %589 = vst.msk [vmem:[%s481 + $0x14] sm:$0xf] %vm583, %v552
  %590 = vst.msk [vmem:[%s481 + $0x18] sm:$0xf] %vm583, %v554
  %591 = vst.msk [vmem:[%s481 + $0x20] sm:$0xf] %vm583, %v556
  %592 = vst.msk [vmem:[%s481 + $0x24] sm:$0xf] %vm583, %v558
  %593 = vst.msk [vmem:[%s481 + $0x28] sm:$0xf] %vm583, %v560
  %594 = vst.msk [vmem:[%s481 + $0x2c] sm:$0xf] %vm583, %v562
  %595 = vst.msk [vmem:[%s481 + $0x30] sm:$0xf] %vm583, %v564
  %596 = vst.msk [vmem:[%s481 + $0x34] sm:$0xf] %vm583, %v566
  %597 = vst.msk [vmem:[%s481 + $0x38] sm:$0xf] %vm583, %v568
  %612 = vrot.lane.b32.xlu0 %v336, 8
  %v613 = vpop.permute.xlu0 %612
  %614 = vrot.lane.b32.xlu0 %v337, 8
  %v615 = vpop.permute.xlu0 %614
  %616 = vrot.lane.b32.xlu0 %v338, 8
  %v617 = vpop.permute.xlu0 %616
  %618 = vrot.lane.b32.xlu0 %v339, 8
  %v619 = vpop.permute.xlu0 %618
  %620 = vrot.lane.b32.xlu0 %v340, 8
  %v621 = vpop.permute.xlu0 %620
  %622 = vrot.lane.b32.xlu0 %v341, 8
  %v623 = vpop.permute.xlu0 %622
  %624 = vrot.lane.b32.xlu0 %v342, 8
  %v625 = vpop.permute.xlu0 %624
  %626 = vrot.lane.b32.xlu0 %v344, 8
  %v627 = vpop.permute.xlu0 %626
  %628 = vrot.lane.b32.xlu0 %v345, 8
  %v629 = vpop.permute.xlu0 %628
  %630 = vrot.lane.b32.xlu0 %v346, 8
  %v631 = vpop.permute.xlu0 %630
  %632 = vrot.lane.b32.xlu0 %v347, 8
  %v633 = vpop.permute.xlu0 %632
  %634 = vrot.lane.b32.xlu0 %v348, 8
  %v635 = vpop.permute.xlu0 %634
  %636 = vrot.lane.b32.xlu0 %v349, 8
  %v637 = vpop.permute.xlu0 %636
  %638 = vrot.lane.b32.xlu0 %v350, 8
  %v639 = vpop.permute.xlu0 %638
  %vm654 = vcmask 93248
  %655 = vst.msk [vmem:[%s481] sm:$0xf] %vm654, %v613
  %656 = vst.msk [vmem:[%s481 + $0x4] sm:$0xf] %vm654, %v615
  %657 = vst.msk [vmem:[%s481 + $0x8] sm:$0xf] %vm654, %v617
  %658 = vst.msk [vmem:[%s481 + $0xc] sm:$0xf] %vm654, %v619
  %659 = vst.msk [vmem:[%s481 + $0x10] sm:$0xf] %vm654, %v621
  %660 = vst.msk [vmem:[%s481 + $0x14] sm:$0xf] %vm654, %v623
  %661 = vst.msk [vmem:[%s481 + $0x18] sm:$0xf] %vm654, %v625
  %662 = vst.msk [vmem:[%s481 + $0x20] sm:$0xf] %vm654, %v627
  %663 = vst.msk [vmem:[%s481 + $0x24] sm:$0xf] %vm654, %v629
  %664 = vst.msk [vmem:[%s481 + $0x28] sm:$0xf] %vm654, %v631
  %665 = vst.msk [vmem:[%s481 + $0x2c] sm:$0xf] %vm654, %v633
  %666 = vst.msk [vmem:[%s481 + $0x30] sm:$0xf] %vm654, %v635
  %667 = vst.msk [vmem:[%s481 + $0x34] sm:$0xf] %vm654, %v637
  %668 = vst.msk [vmem:[%s481 + $0x38] sm:$0xf] %vm654, %v639
  %v670 = vshrl.u32 %v208, 16
  %v672 = vrot.slane %v670, 7
  %v673 = vshll.u32 %v208, 16
  %v675 = vor.u32 %v672, %v673
  %v677 = vshrl.u32 %v209, 16
  %v679 = vrot.slane %v677, 7
  %v680 = vshll.u32 %v209, 16
  %v682 = vor.u32 %v679, %v680
  %v684 = vshrl.u32 %v210, 16
  %v686 = vrot.slane %v684, 7
  %v687 = vshll.u32 %v210, 16
  %v689 = vor.u32 %v686, %v687
  %v691 = vshrl.u32 %v211, 16
  %v693 = vrot.slane %v691, 7
  %v694 = vshll.u32 %v211, 16
  %v696 = vor.u32 %v693, %v694
  %v698 = vshrl.u32 %v212, 16
  %v700 = vrot.slane %v698, 7
  %v701 = vshll.u32 %v212, 16
  %v703 = vor.u32 %v700, %v701
  %v705 = vshrl.u32 %v213, 16
  %v707 = vrot.slane %v705, 7
  %v708 = vshll.u32 %v213, 16
  %v710 = vor.u32 %v707, %v708
  %v712 = vshrl.u32 %v214, 16
  %v714 = vrot.slane %v712, 7
  %v715 = vshll.u32 %v214, 16
  %v717 = vor.u32 %v714, %v715
  %v719 = vshrl.u32 %v215, 16
  %v721 = vrot.slane %v719, 7
  %v722 = vshll.u32 %v215, 16
  %v724 = vor.u32 %v721, %v722
  %v726 = vshrl.u32 %v216, 16
  %v728 = vrot.slane %v726, 7
  %v729 = vshll.u32 %v216, 16
  %v731 = vor.u32 %v728, %v729
  %v733 = vshrl.u32 %v217, 16
  %v735 = vrot.slane %v733, 7
  %v736 = vshll.u32 %v217, 16
  %v738 = vor.u32 %v735, %v736
  %v740 = vshrl.u32 %v218, 16
  %v742 = vrot.slane %v740, 7
  %v743 = vshll.u32 %v218, 16
  %v745 = vor.u32 %v742, %v743
  %v747 = vshrl.u32 %v219, 16
  %v749 = vrot.slane %v747, 7
  %v750 = vshll.u32 %v219, 16
  %v752 = vor.u32 %v749, %v750
  %v754 = vshrl.u32 %v220, 16
  %v756 = vrot.slane %v754, 7
  %v757 = vshll.u32 %v220, 16
  %v759 = vor.u32 %v756, %v757
  %v761 = vshrl.u32 %v221, 16
  %v763 = vrot.slane %v761, 7
  %v764 = vshll.u32 %v221, 16
  %v766 = vor.u32 %v763, %v764
  %v768 = vshrl.u32 %v222, 16
  %v770 = vrot.slane %v768, 7
  %v771 = vshll.u32 %v222, 16
  %v773 = vor.u32 %v770, %v771
  %v775 = vshrl.u32 %v223, 16
  %v777 = vrot.slane %v775, 7
  %v778 = vshll.u32 %v223, 16
  %v780 = vor.u32 %v777, %v778
  %781 = vrot.lane.b32.xlu0 %v675, 12
  %v782 = vpop.permute.xlu0 %781
  %783 = vrot.lane.b32.xlu0 %v682, 12
  %v784 = vpop.permute.xlu0 %783
  %785 = vrot.lane.b32.xlu0 %v689, 12
  %v786 = vpop.permute.xlu0 %785
  %787 = vrot.lane.b32.xlu0 %v696, 12
  %v788 = vpop.permute.xlu0 %787
  %789 = vrot.lane.b32.xlu0 %v703, 12
  %v790 = vpop.permute.xlu0 %789
  %791 = vrot.lane.b32.xlu0 %v710, 12
  %v792 = vpop.permute.xlu0 %791
  %793 = vrot.lane.b32.xlu0 %v717, 12
  %v794 = vpop.permute.xlu0 %793
  %795 = vrot.lane.b32.xlu0 %v724, 12
  %v796 = vpop.permute.xlu0 %795
  %797 = vrot.lane.b32.xlu0 %v731, 12
  %v798 = vpop.permute.xlu0 %797
  %799 = vrot.lane.b32.xlu0 %v738, 12
  %v800 = vpop.permute.xlu0 %799
  %801 = vrot.lane.b32.xlu0 %v745, 12
  %v802 = vpop.permute.xlu0 %801
  %803 = vrot.lane.b32.xlu0 %v752, 12
  %v804 = vpop.permute.xlu0 %803
  %805 = vrot.lane.b32.xlu0 %v759, 12
  %v806 = vpop.permute.xlu0 %805
  %807 = vrot.lane.b32.xlu0 %v766, 12
  %v808 = vpop.permute.xlu0 %807
  %809 = vrot.lane.b32.xlu0 %v773, 12
  %v810 = vpop.permute.xlu0 %809
  %811 = vrot.lane.b32.xlu0 %v780, 12
  %v812 = vpop.permute.xlu0 %811
  %vm829 = vcmask 126048
  %vm830 = vmand %vm829, %vm483
  %v831 = vld [vmem:[#allocation2] sm:$0xf]
  %v832 = vsel %vm830, %v782, %v831
  %833 = vst [vmem:[#allocation2] sm:$0xf] %v832
  %v834 = vld [vmem:[#allocation2 + $0x4] sm:$0xf]
  %v835 = vsel %vm830, %v784, %v834
  %836 = vst [vmem:[#allocation2 + $0x4] sm:$0xf] %v835
  %v837 = vld [vmem:[#allocation2 + $0x8] sm:$0xf]
  %v838 = vsel %vm830, %v786, %v837
  %839 = vst [vmem:[#allocation2 + $0x8] sm:$0xf] %v838
  %v840 = vld [vmem:[#allocation2 + $0xc] sm:$0xf]
  %v841 = vsel %vm830, %v788, %v840
  %842 = vst [vmem:[#allocation2 + $0xc] sm:$0xf] %v841
  %v843 = vld [vmem:[#allocation2 + $0x10] sm:$0xf]
  %v844 = vsel %vm830, %v790, %v843
  %845 = vst [vmem:[#allocation2 + $0x10] sm:$0xf] %v844
  %v846 = vld [vmem:[#allocation2 + $0x14] sm:$0xf]
  %v847 = vsel %vm830, %v792, %v846
  %848 = vst [vmem:[#allocation2 + $0x14] sm:$0xf] %v847
  %v849 = vld [vmem:[#allocation2 + $0x18] sm:$0xf]
  %v850 = vsel %vm830, %v794, %v849
  %851 = vst [vmem:[#allocation2 + $0x18] sm:$0xf] %v850
  %v852 = vld [vmem:[#allocation2 + $0x1c] sm:$0xf]
  %v853 = vsel %vm830, %v796, %v852
  %854 = vst [vmem:[#allocation2 + $0x1c] sm:$0xf] %v853
  %v855 = vld [vmem:[#allocation2 + $0x20] sm:$0xf]
  %v856 = vsel %vm830, %v798, %v855
  %857 = vst [vmem:[#allocation2 + $0x20] sm:$0xf] %v856
  %v858 = vld [vmem:[#allocation2 + $0x24] sm:$0xf]
  %v859 = vsel %vm830, %v800, %v858
  %860 = vst [vmem:[#allocation2 + $0x24] sm:$0xf] %v859
  %v861 = vld [vmem:[#allocation2 + $0x28] sm:$0xf]
  %v862 = vsel %vm830, %v802, %v861
  %863 = vst [vmem:[#allocation2 + $0x28] sm:$0xf] %v862
  %v864 = vld [vmem:[#allocation2 + $0x2c] sm:$0xf]
  %v865 = vsel %vm830, %v804, %v864
  %866 = vst [vmem:[#allocation2 + $0x2c] sm:$0xf] %v865
  %v867 = vld [vmem:[#allocation2 + $0x30] sm:$0xf]
  %v868 = vsel %vm830, %v806, %v867
  %869 = vst [vmem:[#allocation2 + $0x30] sm:$0xf] %v868
  %v870 = vld [vmem:[#allocation2 + $0x34] sm:$0xf]
  %v871 = vsel %vm830, %v808, %v870
  %872 = vst [vmem:[#allocation2 + $0x34] sm:$0xf] %v871
  %v873 = vld [vmem:[#allocation2 + $0x38] sm:$0xf]
  %v874 = vsel %vm830, %v810, %v873
  %875 = vst [vmem:[#allocation2 + $0x38] sm:$0xf] %v874
  %v876 = vld [vmem:[#allocation2 + $0x3c] sm:$0xf]
  %v877 = vsel %vm830, %v812, %v876
  %878 = vst [vmem:[#allocation2 + $0x3c] sm:$0xf] %v877
  %895 = vrot.lane.b32.xlu0 %v144, 16
  %v896 = vpop.permute.xlu0 %895
  %897 = vrot.lane.b32.xlu0 %v145, 16
  %v898 = vpop.permute.xlu0 %897
  %899 = vrot.lane.b32.xlu0 %v146, 16
  %v900 = vpop.permute.xlu0 %899
  %901 = vrot.lane.b32.xlu0 %v147, 16
  %v902 = vpop.permute.xlu0 %901
  %903 = vrot.lane.b32.xlu0 %v148, 16
  %v904 = vpop.permute.xlu0 %903
  %905 = vrot.lane.b32.xlu0 %v149, 16
  %v906 = vpop.permute.xlu0 %905
  %907 = vrot.lane.b32.xlu0 %v150, 16
  %v908 = vpop.permute.xlu0 %907
  %909 = vrot.lane.b32.xlu0 %v151, 16
  %v910 = vpop.permute.xlu0 %909
  %911 = vrot.lane.b32.xlu0 %v152, 16
  %v912 = vpop.permute.xlu0 %911
  %913 = vrot.lane.b32.xlu0 %v153, 16
  %v914 = vpop.permute.xlu0 %913
  %915 = vrot.lane.b32.xlu0 %v154, 16
  %v916 = vpop.permute.xlu0 %915
  %917 = vrot.lane.b32.xlu0 %v155, 16
  %v918 = vpop.permute.xlu0 %917
  %919 = vrot.lane.b32.xlu0 %v156, 16
  %v920 = vpop.permute.xlu0 %919
  %921 = vrot.lane.b32.xlu0 %v157, 16
  %v922 = vpop.permute.xlu0 %921
  %923 = vrot.lane.b32.xlu0 %v158, 16
  %v924 = vpop.permute.xlu0 %923
  %925 = vrot.lane.b32.xlu0 %v159, 16
  %v926 = vpop.permute.xlu0 %925
  %vm943 = vcmask 158848
  %944 = vst.msk [vmem:[#allocation2] sm:$0xf] %vm943, %v896
  %945 = vst.msk [vmem:[#allocation2 + $0x4] sm:$0xf] %vm943, %v898
  %946 = vst.msk [vmem:[#allocation2 + $0x8] sm:$0xf] %vm943, %v900
  %947 = vst.msk [vmem:[#allocation2 + $0xc] sm:$0xf] %vm943, %v902
  %948 = vst.msk [vmem:[#allocation2 + $0x10] sm:$0xf] %vm943, %v904
  %949 = vst.msk [vmem:[#allocation2 + $0x14] sm:$0xf] %vm943, %v906
  %950 = vst.msk [vmem:[#allocation2 + $0x18] sm:$0xf] %vm943, %v908
  %951 = vst.msk [vmem:[#allocation2 + $0x1c] sm:$0xf] %vm943, %v910
  %952 = vst.msk [vmem:[#allocation2 + $0x20] sm:$0xf] %vm943, %v912
  %953 = vst.msk [vmem:[#allocation2 + $0x24] sm:$0xf] %vm943, %v914
  %954 = vst.msk [vmem:[#allocation2 + $0x28] sm:$0xf] %vm943, %v916
  %955 = vst.msk [vmem:[#allocation2 + $0x2c] sm:$0xf] %vm943, %v918
  %956 = vst.msk [vmem:[#allocation2 + $0x30] sm:$0xf] %vm943, %v920
  %957 = vst.msk [vmem:[#allocation2 + $0x34] sm:$0xf] %vm943, %v922
  %958 = vst.msk [vmem:[#allocation2 + $0x38] sm:$0xf] %vm943, %v924
  %959 = vst.msk [vmem:[#allocation2 + $0x3c] sm:$0xf] %vm943, %v926
  %976 = vrot.lane.b32.xlu0 %v208, 20
  %v977 = vpop.permute.xlu0 %976
  %978 = vrot.lane.b32.xlu0 %v209, 20
  %v979 = vpop.permute.xlu0 %978
  %980 = vrot.lane.b32.xlu0 %v210, 20
  %v981 = vpop.permute.xlu0 %980
  %982 = vrot.lane.b32.xlu0 %v211, 20
  %v983 = vpop.permute.xlu0 %982
  %984 = vrot.lane.b32.xlu0 %v212, 20
  %v985 = vpop.permute.xlu0 %984
  %986 = vrot.lane.b32.xlu0 %v213, 20
  %v987 = vpop.permute.xlu0 %986
  %988 = vrot.lane.b32.xlu0 %v214, 20
  %v989 = vpop.permute.xlu0 %988
  %990 = vrot.lane.b32.xlu0 %v215, 20
  %v991 = vpop.permute.xlu0 %990
  %992 = vrot.lane.b32.xlu0 %v216, 20
  %v993 = vpop.permute.xlu0 %992
  %994 = vrot.lane.b32.xlu0 %v217, 20
  %v995 = vpop.permute.xlu0 %994
  %996 = vrot.lane.b32.xlu0 %v218, 20
  %v997 = vpop.permute.xlu0 %996
  %998 = vrot.lane.b32.xlu0 %v219, 20
  %v999 = vpop.permute.xlu0 %998
  %1000 = vrot.lane.b32.xlu0 %v220, 20
  %v1001 = vpop.permute.xlu0 %1000
  %1002 = vrot.lane.b32.xlu0 %v221, 20
  %v1003 = vpop.permute.xlu0 %1002
  %1004 = vrot.lane.b32.xlu0 %v222, 20
  %v1005 = vpop.permute.xlu0 %1004
  %1006 = vrot.lane.b32.xlu0 %v223, 20
  %v1007 = vpop.permute.xlu0 %1006
  %vm1024 = vcmask 191648
  %1025 = vst.msk [vmem:[#allocation2] sm:$0xf] %vm1024, %v977
  %1026 = vst.msk [vmem:[#allocation2 + $0x4] sm:$0xf] %vm1024, %v979
  %1027 = vst.msk [vmem:[#allocation2 + $0x8] sm:$0xf] %vm1024, %v981
  %1028 = vst.msk [vmem:[#allocation2 + $0xc] sm:$0xf] %vm1024, %v983
  %1029 = vst.msk [vmem:[#allocation2 + $0x10] sm:$0xf] %vm1024, %v985
  %1030 = vst.msk [vmem:[#allocation2 + $0x14] sm:$0xf] %vm1024, %v987
  %1031 = vst.msk [vmem:[#allocation2 + $0x18] sm:$0xf] %vm1024, %v989
  %1032 = vst.msk [vmem:[#allocation2 + $0x1c] sm:$0xf] %vm1024, %v991
  %1033 = vst.msk [vmem:[#allocation2 + $0x20] sm:$0xf] %vm1024, %v993
  %1034 = vst.msk [vmem:[#allocation2 + $0x24] sm:$0xf] %vm1024, %v995
  %1035 = vst.msk [vmem:[#allocation2 + $0x28] sm:$0xf] %vm1024, %v997
  %1036 = vst.msk [vmem:[#allocation2 + $0x2c] sm:$0xf] %vm1024, %v999
  %1037 = vst.msk [vmem:[#allocation2 + $0x30] sm:$0xf] %vm1024, %v1001
  %1038 = vst.msk [vmem:[#allocation2 + $0x34] sm:$0xf] %vm1024, %v1003
  %1039 = vst.msk [vmem:[#allocation2 + $0x38] sm:$0xf] %vm1024, %v1005
  %1040 = vst.msk [vmem:[#allocation2 + $0x3c] sm:$0xf] %vm1024, %v1007
  %v1042 = vshrl.u32 %v343, 16
  %v1044 = vrot.slane %v1042, 7
  %v1045 = vshll.u32 %v343, 16
  %v1047 = vor.u32 %v1044, %v1045
  %v1049 = vshrl.u32 %v351, 16
  %v1051 = vrot.slane %v1049, 7
  %v1052 = vshll.u32 %v351, 16
  %v1054 = vor.u32 %v1051, %v1052
  %1055 = vrot.lane.b32.xlu0 %v375, 24
  %v1056 = vpop.permute.xlu0 %1055
  %1057 = vrot.lane.b32.xlu0 %v382, 24
  %v1058 = vpop.permute.xlu0 %1057
  %1059 = vrot.lane.b32.xlu0 %v389, 24
  %v1060 = vpop.permute.xlu0 %1059
  %1061 = vrot.lane.b32.xlu0 %v396, 24
  %v1062 = vpop.permute.xlu0 %1061
  %1063 = vrot.lane.b32.xlu0 %v403, 24
  %v1064 = vpop.permute.xlu0 %1063
  %1065 = vrot.lane.b32.xlu0 %v410, 24
  %v1066 = vpop.permute.xlu0 %1065
  %1067 = vrot.lane.b32.xlu0 %v417, 24
  %v1068 = vpop.permute.xlu0 %1067
  %1069 = vrot.lane.b32.xlu0 %v1047, 24
  %v1070 = vpop.permute.xlu0 %1069
  %1071 = vrot.lane.b32.xlu0 %v424, 24
  %v1072 = vpop.permute.xlu0 %1071
  %1073 = vrot.lane.b32.xlu0 %v431, 24
  %v1074 = vpop.permute.xlu0 %1073
  %1075 = vrot.lane.b32.xlu0 %v438, 24
  %v1076 = vpop.permute.xlu0 %1075
  %1077 = vrot.lane.b32.xlu0 %v445, 24
  %v1078 = vpop.permute.xlu0 %1077
  %1079 = vrot.lane.b32.xlu0 %v452, 24
  %v1080 = vpop.permute.xlu0 %1079
  %1081 = vrot.lane.b32.xlu0 %v459, 24
  %v1082 = vpop.permute.xlu0 %1081
  %1083 = vrot.lane.b32.xlu0 %v466, 24
  %v1084 = vpop.permute.xlu0 %1083
  %1085 = vrot.lane.b32.xlu0 %v1054, 24
  %v1086 = vpop.permute.xlu0 %1085
  %vm1103 = vcmask 224448
  %vm1104 = vmand %vm1103, %vm483
  %v1105 = vld [vmem:[#allocation2] sm:$0xf]
  %v1106 = vsel %vm1104, %v1056, %v1105
  %1107 = vst [vmem:[#allocation2] sm:$0xf] %v1106
  %v1108 = vld [vmem:[#allocation2 + $0x4] sm:$0xf]
  %v1109 = vsel %vm1104, %v1058, %v1108
  %1110 = vst [vmem:[#allocation2 + $0x4] sm:$0xf] %v1109
  %v1111 = vld [vmem:[#allocation2 + $0x8] sm:$0xf]
  %v1112 = vsel %vm1104, %v1060, %v1111
  %1113 = vst [vmem:[#allocation2 + $0x8] sm:$0xf] %v1112
  %v1114 = vld [vmem:[#allocation2 + $0xc] sm:$0xf]
  %v1115 = vsel %vm1104, %v1062, %v1114
  %1116 = vst [vmem:[#allocation2 + $0xc] sm:$0xf] %v1115
  %v1117 = vld [vmem:[#allocation2 + $0x10] sm:$0xf]
  %v1118 = vsel %vm1104, %v1064, %v1117
  %1119 = vst [vmem:[#allocation2 + $0x10] sm:$0xf] %v1118
  %v1120 = vld [vmem:[#allocation2 + $0x14] sm:$0xf]
  %v1121 = vsel %vm1104, %v1066, %v1120
  %1122 = vst [vmem:[#allocation2 + $0x14] sm:$0xf] %v1121
  %v1123 = vld [vmem:[#allocation2 + $0x18] sm:$0xf]
  %v1124 = vsel %vm1104, %v1068, %v1123
  %1125 = vst [vmem:[#allocation2 + $0x18] sm:$0xf] %v1124
  %v1126 = vld [vmem:[#allocation2 + $0x1c] sm:$0xf]
  %v1127 = vsel %vm1104, %v1070, %v1126
  %1128 = vst [vmem:[#allocation2 + $0x1c] sm:$0xf] %v1127
  %v1129 = vld [vmem:[#allocation2 + $0x20] sm:$0xf]
  %v1130 = vsel %vm1104, %v1072, %v1129
  %1131 = vst [vmem:[#allocation2 + $0x20] sm:$0xf] %v1130
  %v1132 = vld [vmem:[#allocation2 + $0x24] sm:$0xf]
  %v1133 = vsel %vm1104, %v1074, %v1132
  %1134 = vst [vmem:[#allocation2 + $0x24] sm:$0xf] %v1133
  %v1135 = vld [vmem:[#allocation2 + $0x28] sm:$0xf]
  %v1136 = vsel %vm1104, %v1076, %v1135
  %1137 = vst [vmem:[#allocation2 + $0x28] sm:$0xf] %v1136
  %v1138 = vld [vmem:[#allocation2 + $0x2c] sm:$0xf]
  %v1139 = vsel %vm1104, %v1078, %v1138
  %1140 = vst [vmem:[#allocation2 + $0x2c] sm:$0xf] %v1139
  %v1141 = vld [vmem:[#allocation2 + $0x30] sm:$0xf]
  %v1142 = vsel %vm1104, %v1080, %v1141
  %1143 = vst [vmem:[#allocation2 + $0x30] sm:$0xf] %v1142
  %v1144 = vld [vmem:[#allocation2 + $0x34] sm:$0xf]
  %v1145 = vsel %vm1104, %v1082, %v1144
  %1146 = vst [vmem:[#allocation2 + $0x34] sm:$0xf] %v1145
  %v1147 = vld [vmem:[#allocation2 + $0x38] sm:$0xf]
  %v1148 = vsel %vm1104, %v1084, %v1147
  %1149 = vst [vmem:[#allocation2 + $0x38] sm:$0xf] %v1148
  %v1150 = vld [vmem:[#allocation2 + $0x3c] sm:$0xf]
  %v1151 = vsel %vm1104, %v1086, %v1150
  %1152 = vst [vmem:[#allocation2 + $0x3c] sm:$0xf] %v1151
  %1155 = vrot.lane.b32.xlu0 %v272, 28
  %v1156 = vpop.permute.xlu0 %1155
  %1157 = vrot.lane.b32.xlu0 %v273, 28
  %v1158 = vpop.permute.xlu0 %1157
  %1159 = vrot.lane.b32.xlu0 %v274, 28
  %v1160 = vpop.permute.xlu0 %1159
  %1161 = vrot.lane.b32.xlu0 %v275, 28
  %v1162 = vpop.permute.xlu0 %1161
  %1163 = vrot.lane.b32.xlu0 %v276, 28
  %v1164 = vpop.permute.xlu0 %1163
  %1165 = vrot.lane.b32.xlu0 %v277, 28
  %v1166 = vpop.permute.xlu0 %1165
  %1167 = vrot.lane.b32.xlu0 %v278, 28
  %v1168 = vpop.permute.xlu0 %1167
  %1169 = vrot.lane.b32.xlu0 %v279, 28
  %v1170 = vpop.permute.xlu0 %1169
  %1171 = vrot.lane.b32.xlu0 %v280, 28
  %v1172 = vpop.permute.xlu0 %1171
  %1173 = vrot.lane.b32.xlu0 %v281, 28
  %v1174 = vpop.permute.xlu0 %1173
  %1175 = vrot.lane.b32.xlu0 %v282, 28
  %v1176 = vpop.permute.xlu0 %1175
  %1177 = vrot.lane.b32.xlu0 %v283, 28
  %v1178 = vpop.permute.xlu0 %1177
  %1179 = vrot.lane.b32.xlu0 %v284, 28
  %v1180 = vpop.permute.xlu0 %1179
  %1181 = vrot.lane.b32.xlu0 %v285, 28
  %v1182 = vpop.permute.xlu0 %1181
  %1183 = vrot.lane.b32.xlu0 %v286, 28
  %v1184 = vpop.permute.xlu0 %1183
  %1185 = vrot.lane.b32.xlu0 %v287, 28
  %v1186 = vpop.permute.xlu0 %1185
  %vm1203 = vcmask 257248
  %1204 = vst.msk [vmem:[#allocation2] sm:$0xf] %vm1203, %v1156
  %1205 = vst.msk [vmem:[#allocation2 + $0x4] sm:$0xf] %vm1203, %v1158
  %1206 = vst.msk [vmem:[#allocation2 + $0x8] sm:$0xf] %vm1203, %v1160
  %1207 = vst.msk [vmem:[#allocation2 + $0xc] sm:$0xf] %vm1203, %v1162
  %1208 = vst.msk [vmem:[#allocation2 + $0x10] sm:$0xf] %vm1203, %v1164
  %1209 = vst.msk [vmem:[#allocation2 + $0x14] sm:$0xf] %vm1203, %v1166
  %1210 = vst.msk [vmem:[#allocation2 + $0x18] sm:$0xf] %vm1203, %v1168
  %1211 = vst.msk [vmem:[#allocation2 + $0x1c] sm:$0xf] %vm1203, %v1170
  %1212 = vst.msk [vmem:[#allocation2 + $0x20] sm:$0xf] %vm1203, %v1172
  %1213 = vst.msk [vmem:[#allocation2 + $0x24] sm:$0xf] %vm1203, %v1174
  %1214 = vst.msk [vmem:[#allocation2 + $0x28] sm:$0xf] %vm1203, %v1176
  %1215 = vst.msk [vmem:[#allocation2 + $0x2c] sm:$0xf] %vm1203, %v1178
  %1216 = vst.msk [vmem:[#allocation2 + $0x30] sm:$0xf] %vm1203, %v1180
  %1217 = vst.msk [vmem:[#allocation2 + $0x34] sm:$0xf] %vm1203, %v1182
  %1218 = vst.msk [vmem:[#allocation2 + $0x38] sm:$0xf] %vm1203, %v1184
  %1219 = vst.msk [vmem:[#allocation2 + $0x3c] sm:$0xf] %vm1203, %v1186
  %1222 = vrot.lane.b32.xlu0 %v336, 32
  %v1223 = vpop.permute.xlu0 %1222
  %1224 = vrot.lane.b32.xlu0 %v337, 32
  %v1225 = vpop.permute.xlu0 %1224
  %1226 = vrot.lane.b32.xlu0 %v338, 32
  %v1227 = vpop.permute.xlu0 %1226
  %1228 = vrot.lane.b32.xlu0 %v339, 32
  %v1229 = vpop.permute.xlu0 %1228
  %1230 = vrot.lane.b32.xlu0 %v340, 32
  %v1231 = vpop.permute.xlu0 %1230
  %1232 = vrot.lane.b32.xlu0 %v341, 32
  %v1233 = vpop.permute.xlu0 %1232
  %1234 = vrot.lane.b32.xlu0 %v342, 32
  %v1235 = vpop.permute.xlu0 %1234
  %1236 = vrot.lane.b32.xlu0 %v343, 32
  %v1237 = vpop.permute.xlu0 %1236
  %1238 = vrot.lane.b32.xlu0 %v344, 32
  %v1239 = vpop.permute.xlu0 %1238
  %1240 = vrot.lane.b32.xlu0 %v345, 32
  %v1241 = vpop.permute.xlu0 %1240
  %1242 = vrot.lane.b32.xlu0 %v346, 32
  %v1243 = vpop.permute.xlu0 %1242
  %1244 = vrot.lane.b32.xlu0 %v347, 32
  %v1245 = vpop.permute.xlu0 %1244
  %1246 = vrot.lane.b32.xlu0 %v348, 32
  %v1247 = vpop.permute.xlu0 %1246
  %1248 = vrot.lane.b32.xlu0 %v349, 32
  %v1249 = vpop.permute.xlu0 %1248
  %1250 = vrot.lane.b32.xlu0 %v350, 32
  %v1251 = vpop.permute.xlu0 %1250
  %1252 = vrot.lane.b32.xlu0 %v351, 32
  %v1253 = vpop.permute.xlu0 %1252
  %vm1270 = vcmask 290048
  %1271 = vst.msk [vmem:[#allocation2] sm:$0xf] %vm1270, %v1223
  %1272 = vst.msk [vmem:[#allocation2 + $0x4] sm:$0xf] %vm1270, %v1225
  %1273 = vst.msk [vmem:[#allocation2 + $0x8] sm:$0xf] %vm1270, %v1227
  %1274 = vst.msk [vmem:[#allocation2 + $0xc] sm:$0xf] %vm1270, %v1229
  %1275 = vst.msk [vmem:[#allocation2 + $0x10] sm:$0xf] %vm1270, %v1231
  %1276 = vst.msk [vmem:[#allocation2 + $0x14] sm:$0xf] %vm1270, %v1233
  %1277 = vst.msk [vmem:[#allocation2 + $0x18] sm:$0xf] %vm1270, %v1235
  %1278 = vst.msk [vmem:[#allocation2 + $0x1c] sm:$0xf] %vm1270, %v1237
  %1279 = vst.msk [vmem:[#allocation2 + $0x20] sm:$0xf] %vm1270, %v1239
  %1280 = vst.msk [vmem:[#allocation2 + $0x24] sm:$0xf] %vm1270, %v1241
  %1281 = vst.msk [vmem:[#allocation2 + $0x28] sm:$0xf] %vm1270, %v1243
  %1282 = vst.msk [vmem:[#allocation2 + $0x2c] sm:$0xf] %vm1270, %v1245
  %1283 = vst.msk [vmem:[#allocation2 + $0x30] sm:$0xf] %vm1270, %v1247
  %1284 = vst.msk [vmem:[#allocation2 + $0x34] sm:$0xf] %vm1270, %v1249
  %1285 = vst.msk [vmem:[#allocation2 + $0x38] sm:$0xf] %vm1270, %v1251
  %1286 = vst.msk [vmem:[#allocation2 + $0x3c] sm:$0xf] %vm1270, %v1253
  %v1287 = vld [vmem:[#allocation2] sm:$0xf]
  %v1288 = vld [vmem:[#allocation2 + $0x4] sm:$0xf]
  %v1289 = vld [vmem:[#allocation2 + $0x8] sm:$0xf]
  %v1290 = vld [vmem:[#allocation2 + $0xc] sm:$0xf]
  %v1291 = vld [vmem:[#allocation2 + $0x10] sm:$0xf]
  %v1292 = vld [vmem:[#allocation2 + $0x14] sm:$0xf]
  %v1293 = vld [vmem:[#allocation2 + $0x18] sm:$0xf]
  %v1294 = vld [vmem:[#allocation2 + $0x1c] sm:$0xf]
  %v1295 = vld [vmem:[#allocation2 + $0x20] sm:$0xf]
  %v1296 = vld [vmem:[#allocation2 + $0x24] sm:$0xf]
  %v1297 = vld [vmem:[#allocation2 + $0x28] sm:$0xf]
  %v1298 = vld [vmem:[#allocation2 + $0x2c] sm:$0xf]
  %v1299 = vld [vmem:[#allocation2 + $0x30] sm:$0xf]
  %v1300 = vld [vmem:[#allocation2 + $0x34] sm:$0xf]
  %v1301 = vld [vmem:[#allocation2 + $0x38] sm:$0xf]
  %v1302 = vld [vmem:[#allocation2 + $0x3c] sm:$0xf]
  %v1303 = vld [vmem:[%s1] sm:$0xf]
  %v1304 = vld [vmem:[%s1 + $0x4] sm:$0xf]
  %v1305 = vld [vmem:[%s1 + $0x8] sm:$0xf]
  %v1306 = vld [vmem:[%s1 + $0xc] sm:$0xf]
  %v1307 = vld [vmem:[%s1 + $0x10] sm:$0x3]
  %v1324 = vunpack.c.l.b16 %v1287
  %v1325 = vunpack.c.l.b16 %v1288
  %v1326 = vunpack.c.l.b16 %v1289
  %v1327 = vunpack.c.l.b16 %v1290
  %v1328 = vunpack.c.l.b16 %v1291
  %v1329 = vunpack.c.l.b16 %v1292
  %v1330 = vunpack.c.l.b16 %v1293
  %v1331 = vunpack.c.l.b16 %v1294
  %v1332 = vunpack.c.l.b16 %v1295
  %v1333 = vunpack.c.l.b16 %v1296
  %v1334 = vunpack.c.l.b16 %v1297
  %v1335 = vunpack.c.l.b16 %v1298
  %v1336 = vunpack.c.l.b16 %v1299
  %v1337 = vunpack.c.l.b16 %v1300
  %v1338 = vunpack.c.l.b16 %v1301
  %v1339 = vunpack.c.l.b16 %v1302
  %v1340 = vpack.c.b16 %v1325, %v1324
  %v1341 = vpack.c.b16 %v1327, %v1326
  %v1342 = vpack.c.b16 %v1329, %v1328
  %v1343 = vpack.c.b16 %v1331, %v1330
  %v1344 = vpack.c.b16 %v1333, %v1332
  %v1345 = vpack.c.b16 %v1335, %v1334
  %v1346 = vpack.c.b16 %v1337, %v1336
  %v1347 = vpack.c.b16 %v1339, %v1338
  %v1353 = vunpack.c.l.b16 %v1303
  %v1354 = vunpack.c.l.b16 %v1304
  %v1355 = vunpack.c.l.b16 %v1305
  %v1356 = vunpack.c.l.b16 %v1306
  %v1357 = vunpack.c.l.b16 %v1307
  %v1358 = vpack.c.b16 %v1354, %v1353
  %v1359 = vpack.c.b16 %v1356, %v1355
  %v1360 = vpack.c.b16 %v1357, %v1357
  %vm1363 = vcmask 293888
  %v1365 = vsel %vm1363, %v1340, 0
  %v1368 = vsel %vm1363, %v1341, 0
  %v1371 = vsel %vm1363, %v1342, 0
  %v1374 = vsel %vm1363, %v1343, 0
  %v1377 = vsel %vm1363, %v1344, 0
  %v1380 = vsel %vm1363, %v1345, 0
  %v1383 = vsel %vm1363, %v1346, 0
  %v1386 = vsel %vm1363, %v1347, 0
  %vm1388 = vcmask 1041408
  %v1390 = vsel %vm1388, %v1360, 0
  %1392 = vmatpush.bf16.msra.mxu0 0
  %1393 = vmatpush.bf16.msra.mxu0 0
  %1394 = vmatpush.bf16.msra.mxu0 0
  %1395 = vmatpush.bf16.msra.mxu0 0
  %1396 = vmatpush.bf16.msra.mxu0 0
  %1397 = vmatpush.bf16.msra.mxu0 %v1390
  %1398 = vmatpush.bf16.msra.mxu0 %v1359
  %1399 = vmatpush.bf16.msra.mxu0 %v1358
  %1400 = vmatmul.bf16.gmra.mxu0 %v1365
  %v1401 = vpop.f32.mrf.mxu0
  %v1402 = vadd.f32 0.0, %v1401
  %v1403 = vpop.f32.mrf.mxu0
  %v1404 = vadd.f32 0.0, %v1403
  %1405 = vmatmul.bf16.gmra.mxu0 %v1368
  %v1406 = vpop.f32.mrf.mxu0
  %v1407 = vadd.f32 0.0, %v1406
  %v1408 = vpop.f32.mrf.mxu0
  %v1409 = vadd.f32 0.0, %v1408
  %1410 = vmatmul.bf16.gmra.mxu0 %v1371
  %v1411 = vpop.f32.mrf.mxu0
  %v1412 = vadd.f32 0.0, %v1411
  %v1413 = vpop.f32.mrf.mxu0
  %v1414 = vadd.f32 0.0, %v1413
  %1415 = vmatmul.bf16.gmra.mxu0 %v1374
  %v1416 = vpop.f32.mrf.mxu0
  %v1417 = vadd.f32 0.0, %v1416
  %v1418 = vpop.f32.mrf.mxu0
  %v1419 = vadd.f32 0.0, %v1418
  %1420 = vmatmul.bf16.gmra.mxu0 %v1377
  %v1421 = vpop.f32.mrf.mxu0
  %v1422 = vadd.f32 0.0, %v1421
  %v1423 = vpop.f32.mrf.mxu0
  %v1424 = vadd.f32 0.0, %v1423
  %1425 = vmatmul.bf16.gmra.mxu0 %v1380
  %v1426 = vpop.f32.mrf.mxu0
  %v1427 = vadd.f32 0.0, %v1426
  %v1428 = vpop.f32.mrf.mxu0
  %v1429 = vadd.f32 0.0, %v1428
  %1430 = vmatmul.bf16.gmra.mxu0 %v1383
  %v1431 = vpop.f32.mrf.mxu0
  %v1432 = vadd.f32 0.0, %v1431
  %v1433 = vpop.f32.mrf.mxu0
  %v1434 = vadd.f32 0.0, %v1433
  %1435 = vmatmul.bf16.gmra.mxu0 %v1386
  %v1436 = vpop.f32.mrf.mxu0
  %v1437 = vadd.f32 0.0, %v1436
  %v1438 = vpop.f32.mrf.mxu0
  %v1439 = vadd.f32 0.0, %v1438
  %1440 = vdwg.mxu0
  %v1441 = vld [vmem:[%s4] sm:$0x1]
  %v1443 = vperm.slane %v1441, 0
  %v1445 = vmul.f32 %v1402, %v1443
  %v1446 = vmul.f32 %v1404, %v1443
  %v1447 = vmul.f32 %v1407, %v1443
  %v1448 = vmul.f32 %v1409, %v1443
  %v1449 = vmul.f32 %v1412, %v1443
  %v1450 = vmul.f32 %v1414, %v1443
  %v1451 = vmul.f32 %v1417, %v1443
  %v1452 = vmul.f32 %v1419, %v1443
  %v1453 = vmul.f32 %v1422, %v1443
  %v1454 = vmul.f32 %v1424, %v1443
  %v1455 = vmul.f32 %v1427, %v1443
  %v1456 = vmul.f32 %v1429, %v1443
  %v1457 = vmul.f32 %v1432, %v1443
  %v1458 = vmul.f32 %v1434, %v1443
  %v1459 = vmul.f32 %v1437, %v1443
  %v1460 = vmul.f32 %v1439, %v1443
  %v1461 = vld [vmem:[%s5] sm:$0x1]
  %v1463 = vperm.slane %v1461, 0
  %v1465 = vadd.f32 %v1445, %v1463
  %v1466 = vadd.f32 %v1446, %v1463
  %v1467 = vadd.f32 %v1447, %v1463
  %v1468 = vadd.f32 %v1448, %v1463
  %v1469 = vadd.f32 %v1449, %v1463
  %v1470 = vadd.f32 %v1450, %v1463
  %v1471 = vadd.f32 %v1451, %v1463
  %v1472 = vadd.f32 %v1452, %v1463
  %v1473 = vadd.f32 %v1453, %v1463
  %v1474 = vadd.f32 %v1454, %v1463
  %v1475 = vadd.f32 %v1455, %v1463
  %v1476 = vadd.f32 %v1456, %v1463
  %v1477 = vadd.f32 %v1457, %v1463
  %v1478 = vadd.f32 %v1458, %v1463
  %v1479 = vadd.f32 %v1459, %v1463
  %v1480 = vadd.f32 %v1460, %v1463
  %v1481 = vmax.f32 %v1465, 0.0
  %v1482 = vmax.f32 %v1466, 0.0
  %v1483 = vmax.f32 %v1467, 0.0
  %v1484 = vmax.f32 %v1468, 0.0
  %v1485 = vmax.f32 %v1469, 0.0
  %v1486 = vmax.f32 %v1470, 0.0
  %v1487 = vmax.f32 %v1471, 0.0
  %v1488 = vmax.f32 %v1472, 0.0
  %v1489 = vmax.f32 %v1473, 0.0
  %v1490 = vmax.f32 %v1474, 0.0
  %v1491 = vmax.f32 %v1475, 0.0
  %v1492 = vmax.f32 %v1476, 0.0
  %v1493 = vmax.f32 %v1477, 0.0
  %v1494 = vmax.f32 %v1478, 0.0
  %v1495 = vmax.f32 %v1479, 0.0
  %v1496 = vmax.f32 %v1480, 0.0
  %v1497 = vpack.c.bf16 %v1481, %v1481
  %v1498 = vpack.c.bf16 %v1482, %v1482
  %v1499 = vpack.c.bf16 %v1483, %v1483
  %v1500 = vpack.c.bf16 %v1484, %v1484
  %v1501 = vpack.c.bf16 %v1485, %v1485
  %v1502 = vpack.c.bf16 %v1486, %v1486
  %v1503 = vpack.c.bf16 %v1487, %v1487
  %v1504 = vpack.c.bf16 %v1488, %v1488
  %v1505 = vpack.c.bf16 %v1489, %v1489
  %v1506 = vpack.c.bf16 %v1490, %v1490
  %v1507 = vpack.c.bf16 %v1491, %v1491
  %v1508 = vpack.c.bf16 %v1492, %v1492
  %v1509 = vpack.c.bf16 %v1493, %v1493
  %v1510 = vpack.c.bf16 %v1494, %v1494
  %v1511 = vpack.c.bf16 %v1495, %v1495
  %v1512 = vpack.c.bf16 %v1496, %v1496
  %vm1513 = vcmask 60416
  %1514 = vst.msk [vmem:[%s6] sm:$0xf] %vm1513, %v1497
  %1515 = vst.msk [vmem:[%s6 + $0x4] sm:$0xf] %vm1513, %v1498
  %1516 = vst.msk [vmem:[%s6 + $0x8] sm:$0xf] %vm1513, %v1499
  %1517 = vst.msk [vmem:[%s6 + $0xc] sm:$0xf] %vm1513, %v1500
  %1518 = vst.msk [vmem:[%s6 + $0x10] sm:$0xf] %vm1513, %v1501
  %1519 = vst.msk [vmem:[%s6 + $0x14] sm:$0xf] %vm1513, %v1502
  %1520 = vst.msk [vmem:[%s6 + $0x18] sm:$0xf] %vm1513, %v1503
  %1521 = vst.msk [vmem:[%s6 + $0x1c] sm:$0xf] %vm1513, %v1504
  %1522 = vst.msk [vmem:[%s6 + $0x20] sm:$0xf] %vm1513, %v1505
  %1523 = vst.msk [vmem:[%s6 + $0x24] sm:$0xf] %vm1513, %v1506
  %1524 = vst.msk [vmem:[%s6 + $0x28] sm:$0xf] %vm1513, %v1507
  %1525 = vst.msk [vmem:[%s6 + $0x2c] sm:$0xf] %vm1513, %v1508
  %1526 = vst.msk [vmem:[%s6 + $0x30] sm:$0xf] %vm1513, %v1509
  %1527 = vst.msk [vmem:[%s6 + $0x34] sm:$0xf] %vm1513, %v1510
  %1528 = vst.msk [vmem:[%s6 + $0x38] sm:$0xf] %vm1513, %v1511
  %1529 = vst.msk [vmem:[%s6 + $0x3c] sm:$0xf] %vm1513, %v1512
  // Predicated region
  $region26: #{_lambda_.4} parent=0 // pred_check
    _
  $region27: #{_lambda_.4} parent=0 // pred_check_branch
    %1531 = sbr.rel (0) target = $region29
  $region28: #{_lambda_.4} parent=0 // pred_region
    _
  $region29: #{_lambda_.4} parent=0 // pred_fallthru
    _
  // Predicated region
  $region30: #{_lambda_.4} parent=0 // pred_check
    _
  $region31: #{_lambda_.4} parent=0 // pred_check_branch
    %1533 = sbr.rel (0) target = $region33
  $region32: #{_lambda_.4} parent=0 // pred_region
    _
  $region33: #{_lambda_.4} parent=0 // pred_fallthru
    _

// kernel: _lambda_.7
$region0: #{_lambda_.7}
  #allocation0 [shape = 'u32[]', space=smem, size = 0x4, offset = 0x4, fixed_abs, tag = 'smem constant byte address 0x4 - core index']
  #allocation1 [shape = 'u32[72,128]{1,0:T(1,128)}', space=vmem, size = 0x9000, scoped, tag = 'internal scratch']
  #allocation2 [shape = 'bf16[2,8,8,72]{3,2,1,0:T(8,128)(2,1)}', space=vmem, size = 0x8000, scoped, tag = 'scratch operand']
  %s0 = inlined_call_operand.vmem [shape: bf16[2,1,8,8,8], index: 0, kind: input, shape index: {}]
  %s1 = inlined_call_operand.vmem [shape: bf16[72,8], index: 1, kind: input, shape index: {}]
  %s2 = inlined_call_operand.vmem [shape: bf16[2,8,8,8], index: 2, kind: input, shape index: {}]
  %s3 = inlined_call_operand.vmem [shape: f32[2,8,8,8], index: 3, kind: output, shape index: {}]
  %s4 = sld [smem:[#allocation0]]
  $region22: #{_lambda_.7} parent=0
    _
  %s6 = ssub.s32 1, %s4
  %s7 = scalar_select 0, %s6, %s4
  // Predicated region
  $region2: #{_lambda_.7} parent=0 // pred_check
    _
  $region3: #{_lambda_.7} parent=0 // pred_check_branch
    %9 = sbr.rel (0) target = $region5
  $region4: #{_lambda_.7} parent=0 // pred_region
    _
  $region5: #{_lambda_.7} parent=0 // pred_fallthru
    _
  // Predicated region
  $region6: #{_lambda_.7} parent=0 // pred_check
    _
  $region7: #{_lambda_.7} parent=0 // pred_check_branch
    %11 = sbr.rel (0) target = $region9
  $region8: #{_lambda_.7} parent=0 // pred_region
    _
  $region9: #{_lambda_.7} parent=0 // pred_fallthru
    _
  // Predicated region
  $region10: #{_lambda_.7} parent=0 // pred_check
    _
  $region11: #{_lambda_.7} parent=0 // pred_check_branch
    %13 = sbr.rel (0) target = $region13
  $region12: #{_lambda_.7} parent=0 // pred_region
    _
  $region13: #{_lambda_.7} parent=0 // pred_fallthru
    _
  %v15 = vld [vmem:[%s0] sm:$0xf]
  %v16 = vld [vmem:[%s0 + $0x4] sm:$0xf]
  %v17 = vld [vmem:[%s0 + $0x8] sm:$0xf]
  %v18 = vld [vmem:[%s0 + $0xc] sm:$0xf]
  %v19 = vld [vmem:[%s0 + $0x10] sm:$0xf]
  %v20 = vld [vmem:[%s0 + $0x14] sm:$0xf]
  %v21 = vld [vmem:[%s0 + $0x18] sm:$0xf]
  %v22 = vld [vmem:[%s0 + $0x1c] sm:$0xf]
  %v23 = vld [vmem:[%s0 + $0x20] sm:$0xf]
  %v24 = vld [vmem:[%s0 + $0x24] sm:$0xf]
  %v25 = vld [vmem:[%s0 + $0x28] sm:$0xf]
  %v26 = vld [vmem:[%s0 + $0x2c] sm:$0xf]
  %v27 = vld [vmem:[%s0 + $0x30] sm:$0xf]
  %v28 = vld [vmem:[%s0 + $0x34] sm:$0xf]
  %v29 = vld [vmem:[%s0 + $0x38] sm:$0xf]
  %v30 = vld [vmem:[%s0 + $0x3c] sm:$0xf]
  %vm31 = vcmask 584704
  %32 = vst.msk [vmem:[#allocation2] sm:$0xf] %vm31, 0
  %33 = vst.msk [vmem:[#allocation2 + $0x4] sm:$0xf] %vm31, 0
  %34 = vst.msk [vmem:[#allocation2 + $0x8] sm:$0xf] %vm31, 0
  %35 = vst.msk [vmem:[#allocation2 + $0xc] sm:$0xf] %vm31, 0
  %36 = vst.msk [vmem:[#allocation2 + $0x10] sm:$0xf] %vm31, 0
  %37 = vst.msk [vmem:[#allocation2 + $0x14] sm:$0xf] %vm31, 0
  %38 = vst.msk [vmem:[#allocation2 + $0x18] sm:$0xf] %vm31, 0
  %39 = vst.msk [vmem:[#allocation2 + $0x1c] sm:$0xf] %vm31, 0
  %40 = vst.msk [vmem:[#allocation2 + $0x20] sm:$0xf] %vm31, 0
  %41 = vst.msk [vmem:[#allocation2 + $0x24] sm:$0xf] %vm31, 0
  %42 = vst.msk [vmem:[#allocation2 + $0x28] sm:$0xf] %vm31, 0
  %43 = vst.msk [vmem:[#allocation2 + $0x2c] sm:$0xf] %vm31, 0
  %44 = vst.msk [vmem:[#allocation2 + $0x30] sm:$0xf] %vm31, 0
  %45 = vst.msk [vmem:[#allocation2 + $0x34] sm:$0xf] %vm31, 0
  %46 = vst.msk [vmem:[#allocation2 + $0x38] sm:$0xf] %vm31, 0
  %47 = vst.msk [vmem:[#allocation2 + $0x3c] sm:$0xf] %vm31, 0
  %v49 = vshrl.u32 %v15, 16
  %v51 = vrot.slane %v49, 7
  %v52 = vshll.u32 %v15, 16
  %v54 = vor.u32 %v51, %v52
  %v56 = vshrl.u32 %v16, 16
  %v58 = vrot.slane %v56, 7
  %v59 = vshll.u32 %v16, 16
  %v61 = vor.u32 %v58, %v59
  %v63 = vshrl.u32 %v17, 16
  %v65 = vrot.slane %v63, 7
  %v66 = vshll.u32 %v17, 16
  %v68 = vor.u32 %v65, %v66
  %v70 = vshrl.u32 %v18, 16
  %v72 = vrot.slane %v70, 7
  %v73 = vshll.u32 %v18, 16
  %v75 = vor.u32 %v72, %v73
  %v77 = vshrl.u32 %v19, 16
  %v79 = vrot.slane %v77, 7
  %v80 = vshll.u32 %v19, 16
  %v82 = vor.u32 %v79, %v80
  %v84 = vshrl.u32 %v20, 16
  %v86 = vrot.slane %v84, 7
  %v87 = vshll.u32 %v20, 16
  %v89 = vor.u32 %v86, %v87
  %v91 = vshrl.u32 %v21, 16
  %v93 = vrot.slane %v91, 7
  %v94 = vshll.u32 %v21, 16
  %v96 = vor.u32 %v93, %v94
  %v98 = vshrl.u32 %v23, 16
  %v100 = vrot.slane %v98, 7
  %v101 = vshll.u32 %v23, 16
  %v103 = vor.u32 %v100, %v101
  %v105 = vshrl.u32 %v24, 16
  %v107 = vrot.slane %v105, 7
  %v108 = vshll.u32 %v24, 16
  %v110 = vor.u32 %v107, %v108
  %v112 = vshrl.u32 %v25, 16
  %v114 = vrot.slane %v112, 7
  %v115 = vshll.u32 %v25, 16
  %v117 = vor.u32 %v114, %v115
  %v119 = vshrl.u32 %v26, 16
  %v121 = vrot.slane %v119, 7
  %v122 = vshll.u32 %v26, 16
  %v124 = vor.u32 %v121, %v122
  %v126 = vshrl.u32 %v27, 16
  %v128 = vrot.slane %v126, 7
  %v129 = vshll.u32 %v27, 16
  %v131 = vor.u32 %v128, %v129
  %v133 = vshrl.u32 %v28, 16
  %v135 = vrot.slane %v133, 7
  %v136 = vshll.u32 %v28, 16
  %v138 = vor.u32 %v135, %v136
  %v140 = vshrl.u32 %v29, 16
  %v142 = vrot.slane %v140, 7
  %v143 = vshll.u32 %v29, 16
  %v145 = vor.u32 %v142, %v143
  %s160 = scalar_lea.vmem [#allocation2], 4
  %vm161 = vcmask 60416
  %vm162 = vsmask.f32 7938
  %vm163 = vmand %vm161, %vm162
  %v164 = vld [vmem:[%s160] sm:$0xf]
  %v165 = vsel %vm163, %v54, %v164
  %166 = vst [vmem:[%s160] sm:$0xf] %v165
  %v167 = vld [vmem:[%s160 + $0x4] sm:$0xf]
  %v168 = vsel %vm163, %v61, %v167
  %169 = vst [vmem:[%s160 + $0x4] sm:$0xf] %v168
  %v170 = vld [vmem:[%s160 + $0x8] sm:$0xf]
  %v171 = vsel %vm163, %v68, %v170
  %172 = vst [vmem:[%s160 + $0x8] sm:$0xf] %v171
  %v173 = vld [vmem:[%s160 + $0xc] sm:$0xf]
  %v174 = vsel %vm163, %v75, %v173
  %175 = vst [vmem:[%s160 + $0xc] sm:$0xf] %v174
  %v176 = vld [vmem:[%s160 + $0x10] sm:$0xf]
  %v177 = vsel %vm163, %v82, %v176
  %178 = vst [vmem:[%s160 + $0x10] sm:$0xf] %v177
  %v179 = vld [vmem:[%s160 + $0x14] sm:$0xf]
  %v180 = vsel %vm163, %v89, %v179
  %181 = vst [vmem:[%s160 + $0x14] sm:$0xf] %v180
  %v182 = vld [vmem:[%s160 + $0x18] sm:$0xf]
  %v183 = vsel %vm163, %v96, %v182
  %184 = vst [vmem:[%s160 + $0x18] sm:$0xf] %v183
  %v185 = vld [vmem:[%s160 + $0x20] sm:$0xf]
  %v186 = vsel %vm163, %v103, %v185
  %187 = vst [vmem:[%s160 + $0x20] sm:$0xf] %v186
  %v188 = vld [vmem:[%s160 + $0x24] sm:$0xf]
  %v189 = vsel %vm163, %v110, %v188
  %190 = vst [vmem:[%s160 + $0x24] sm:$0xf] %v189
  %v191 = vld [vmem:[%s160 + $0x28] sm:$0xf]
  %v192 = vsel %vm163, %v117, %v191
  %193 = vst [vmem:[%s160 + $0x28] sm:$0xf] %v192
  %v194 = vld [vmem:[%s160 + $0x2c] sm:$0xf]
  %v195 = vsel %vm163, %v124, %v194
  %196 = vst [vmem:[%s160 + $0x2c] sm:$0xf] %v195
  %v197 = vld [vmem:[%s160 + $0x30] sm:$0xf]
  %v198 = vsel %vm163, %v131, %v197
  %199 = vst [vmem:[%s160 + $0x30] sm:$0xf] %v198
  %v200 = vld [vmem:[%s160 + $0x34] sm:$0xf]
  %v201 = vsel %vm163, %v138, %v200
  %202 = vst [vmem:[%s160 + $0x34] sm:$0xf] %v201
  %v203 = vld [vmem:[%s160 + $0x38] sm:$0xf]
  %v204 = vsel %vm163, %v145, %v203
  %205 = vst [vmem:[%s160 + $0x38] sm:$0xf] %v204
  %220 = vrot.lane.b32.xlu0 %v15, 8
  %v221 = vpop.permute.xlu0 %220
  %222 = vrot.lane.b32.xlu0 %v16, 8
  %v223 = vpop.permute.xlu0 %222
  %224 = vrot.lane.b32.xlu0 %v17, 8
  %v225 = vpop.permute.xlu0 %224
  %226 = vrot.lane.b32.xlu0 %v18, 8
  %v227 = vpop.permute.xlu0 %226
  %228 = vrot.lane.b32.xlu0 %v19, 8
  %v229 = vpop.permute.xlu0 %228
  %230 = vrot.lane.b32.xlu0 %v20, 8
  %v231 = vpop.permute.xlu0 %230
  %232 = vrot.lane.b32.xlu0 %v21, 8
  %v233 = vpop.permute.xlu0 %232
  %234 = vrot.lane.b32.xlu0 %v23, 8
  %v235 = vpop.permute.xlu0 %234
  %236 = vrot.lane.b32.xlu0 %v24, 8
  %v237 = vpop.permute.xlu0 %236
  %238 = vrot.lane.b32.xlu0 %v25, 8
  %v239 = vpop.permute.xlu0 %238
  %240 = vrot.lane.b32.xlu0 %v26, 8
  %v241 = vpop.permute.xlu0 %240
  %242 = vrot.lane.b32.xlu0 %v27, 8
  %v243 = vpop.permute.xlu0 %242
  %244 = vrot.lane.b32.xlu0 %v28, 8
  %v245 = vpop.permute.xlu0 %244
  %246 = vrot.lane.b32.xlu0 %v29, 8
  %v247 = vpop.permute.xlu0 %246
  %vm262 = vcmask 126016
  %263 = vst.msk [vmem:[%s160] sm:$0xf] %vm262, %v221
  %264 = vst.msk [vmem:[%s160 + $0x4] sm:$0xf] %vm262, %v223
  %265 = vst.msk [vmem:[%s160 + $0x8] sm:$0xf] %vm262, %v225
  %266 = vst.msk [vmem:[%s160 + $0xc] sm:$0xf] %vm262, %v227
  %267 = vst.msk [vmem:[%s160 + $0x10] sm:$0xf] %vm262, %v229
  %268 = vst.msk [vmem:[%s160 + $0x14] sm:$0xf] %vm262, %v231
  %269 = vst.msk [vmem:[%s160 + $0x18] sm:$0xf] %vm262, %v233
  %270 = vst.msk [vmem:[%s160 + $0x20] sm:$0xf] %vm262, %v235
  %271 = vst.msk [vmem:[%s160 + $0x24] sm:$0xf] %vm262, %v237
  %272 = vst.msk [vmem:[%s160 + $0x28] sm:$0xf] %vm262, %v239
  %273 = vst.msk [vmem:[%s160 + $0x2c] sm:$0xf] %vm262, %v241
  %274 = vst.msk [vmem:[%s160 + $0x30] sm:$0xf] %vm262, %v243
  %275 = vst.msk [vmem:[%s160 + $0x34] sm:$0xf] %vm262, %v245
  %276 = vst.msk [vmem:[%s160 + $0x38] sm:$0xf] %vm262, %v247
  %v277 = vrot.slane %v49, 4
  %v278 = vrot.slane %v52, 5
  %v279 = vor.u32 %v277, %v278
  %v280 = vrot.slane %v279, 4
  %v281 = vrot.slane %v56, 4
  %v282 = vrot.slane %v59, 5
  %v283 = vor.u32 %v281, %v282
  %v284 = vrot.slane %v283, 4
  %v285 = vrot.slane %v63, 4
  %v286 = vrot.slane %v66, 5
  %v287 = vor.u32 %v285, %v286
  %v288 = vrot.slane %v287, 4
  %v289 = vrot.slane %v70, 4
  %v290 = vrot.slane %v73, 5
  %v291 = vor.u32 %v289, %v290
  %v292 = vrot.slane %v291, 4
  %v293 = vrot.slane %v77, 4
  %v294 = vrot.slane %v80, 5
  %v295 = vor.u32 %v293, %v294
  %v296 = vrot.slane %v295, 4
  %v297 = vrot.slane %v84, 4
  %v298 = vrot.slane %v87, 5
  %v299 = vor.u32 %v297, %v298
  %v300 = vrot.slane %v299, 4
  %v301 = vrot.slane %v91, 4
  %v302 = vrot.slane %v94, 5
  %v303 = vor.u32 %v301, %v302
  %v304 = vrot.slane %v303, 4
  %v305 = vrot.slane %v98, 4
  %v306 = vrot.slane %v101, 5
  %v307 = vor.u32 %v305, %v306
  %v308 = vrot.slane %v307, 4
  %v309 = vrot.slane %v105, 4
  %v310 = vrot.slane %v108, 5
  %v311 = vor.u32 %v309, %v310
  %v312 = vrot.slane %v311, 4
  %v313 = vrot.slane %v112, 4
  %v314 = vrot.slane %v115, 5
  %v315 = vor.u32 %v313, %v314
  %v316 = vrot.slane %v315, 4
  %v317 = vrot.slane %v119, 4
  %v318 = vrot.slane %v122, 5
  %v319 = vor.u32 %v317, %v318
  %v320 = vrot.slane %v319, 4
  %v321 = vrot.slane %v126, 4
  %v322 = vrot.slane %v129, 5
  %v323 = vor.u32 %v321, %v322
  %v324 = vrot.slane %v323, 4
  %v325 = vrot.slane %v133, 4
  %v326 = vrot.slane %v136, 5
  %v327 = vor.u32 %v325, %v326
  %v328 = vrot.slane %v327, 4
  %v329 = vrot.slane %v140, 4
  %v330 = vrot.slane %v143, 5
  %v331 = vor.u32 %v329, %v330
  %v332 = vrot.slane %v331, 4
  %333 = vrot.lane.b32.xlu0 %v280, 16
  %v334 = vpop.permute.xlu0 %333
  %335 = vrot.lane.b32.xlu0 %v284, 16
  %v336 = vpop.permute.xlu0 %335
  %337 = vrot.lane.b32.xlu0 %v288, 16
  %v338 = vpop.permute.xlu0 %337
  %339 = vrot.lane.b32.xlu0 %v292, 16
  %v340 = vpop.permute.xlu0 %339
  %341 = vrot.lane.b32.xlu0 %v296, 16
  %v342 = vpop.permute.xlu0 %341
  %343 = vrot.lane.b32.xlu0 %v300, 16
  %v344 = vpop.permute.xlu0 %343
  %345 = vrot.lane.b32.xlu0 %v304, 16
  %v346 = vpop.permute.xlu0 %345
  %347 = vrot.lane.b32.xlu0 %v308, 16
  %v348 = vpop.permute.xlu0 %347
  %349 = vrot.lane.b32.xlu0 %v312, 16
  %v350 = vpop.permute.xlu0 %349
  %351 = vrot.lane.b32.xlu0 %v316, 16
  %v352 = vpop.permute.xlu0 %351
  %353 = vrot.lane.b32.xlu0 %v320, 16
  %v354 = vpop.permute.xlu0 %353
  %355 = vrot.lane.b32.xlu0 %v324, 16
  %v356 = vpop.permute.xlu0 %355
  %357 = vrot.lane.b32.xlu0 %v328, 16
  %v358 = vpop.permute.xlu0 %357
  %359 = vrot.lane.b32.xlu0 %v332, 16
  %v360 = vpop.permute.xlu0 %359
  %vm375 = vcmask 191616
  %vm376 = vsmask.f32 3328
  %vm377 = vmand %vm375, %vm376
  %v378 = vld [vmem:[%s160] sm:$0xf]
  %v379 = vsel %vm377, %v334, %v378
  %380 = vst [vmem:[%s160] sm:$0xf] %v379
  %v381 = vld [vmem:[%s160 + $0x4] sm:$0xf]
  %v382 = vsel %vm377, %v336, %v381
  %383 = vst [vmem:[%s160 + $0x4] sm:$0xf] %v382
  %v384 = vld [vmem:[%s160 + $0x8] sm:$0xf]
  %v385 = vsel %vm377, %v338, %v384
  %386 = vst [vmem:[%s160 + $0x8] sm:$0xf] %v385
  %v387 = vld [vmem:[%s160 + $0xc] sm:$0xf]
  %v388 = vsel %vm377, %v340, %v387
  %389 = vst [vmem:[%s160 + $0xc] sm:$0xf] %v388
  %v390 = vld [vmem:[%s160 + $0x10] sm:$0xf]
  %v391 = vsel %vm377, %v342, %v390
  %392 = vst [vmem:[%s160 + $0x10] sm:$0xf] %v391
  %v393 = vld [vmem:[%s160 + $0x14] sm:$0xf]
  %v394 = vsel %vm377, %v344, %v393
  %395 = vst [vmem:[%s160 + $0x14] sm:$0xf] %v394
  %v396 = vld [vmem:[%s160 + $0x18] sm:$0xf]
  %v397 = vsel %vm377, %v346, %v396
  %398 = vst [vmem:[%s160 + $0x18] sm:$0xf] %v397
  %v399 = vld [vmem:[%s160 + $0x20] sm:$0xf]
  %v400 = vsel %vm377, %v348, %v399
  %401 = vst [vmem:[%s160 + $0x20] sm:$0xf] %v400
  %v402 = vld [vmem:[%s160 + $0x24] sm:$0xf]
  %v403 = vsel %vm377, %v350, %v402
  %404 = vst [vmem:[%s160 + $0x24] sm:$0xf] %v403
  %v405 = vld [vmem:[%s160 + $0x28] sm:$0xf]
  %v406 = vsel %vm377, %v352, %v405
  %407 = vst [vmem:[%s160 + $0x28] sm:$0xf] %v406
  %v408 = vld [vmem:[%s160 + $0x2c] sm:$0xf]
  %v409 = vsel %vm377, %v354, %v408
  %410 = vst [vmem:[%s160 + $0x2c] sm:$0xf] %v409
  %v411 = vld [vmem:[%s160 + $0x30] sm:$0xf]
  %v412 = vsel %vm377, %v356, %v411
  %413 = vst [vmem:[%s160 + $0x30] sm:$0xf] %v412
  %v414 = vld [vmem:[%s160 + $0x34] sm:$0xf]
  %v415 = vsel %vm377, %v358, %v414
  %416 = vst [vmem:[%s160 + $0x34] sm:$0xf] %v415
  %v417 = vld [vmem:[%s160 + $0x38] sm:$0xf]
  %v418 = vsel %vm377, %v360, %v417
  %419 = vst [vmem:[%s160 + $0x38] sm:$0xf] %v418
  %v421 = vshrl.u32 %v22, 16
  %v423 = vrot.slane %v421, 7
  %v424 = vshll.u32 %v22, 16
  %v426 = vor.u32 %v423, %v424
  %v428 = vshrl.u32 %v30, 16
  %v430 = vrot.slane %v428, 7
  %v431 = vshll.u32 %v30, 16
  %v433 = vor.u32 %v430, %v431
  %434 = vrot.lane.b32.xlu0 %v54, 24
  %v435 = vpop.permute.xlu0 %434
  %436 = vrot.lane.b32.xlu0 %v61, 24
  %v437 = vpop.permute.xlu0 %436
  %438 = vrot.lane.b32.xlu0 %v68, 24
  %v439 = vpop.permute.xlu0 %438
  %440 = vrot.lane.b32.xlu0 %v75, 24
  %v441 = vpop.permute.xlu0 %440
  %442 = vrot.lane.b32.xlu0 %v82, 24
  %v443 = vpop.permute.xlu0 %442
  %444 = vrot.lane.b32.xlu0 %v89, 24
  %v445 = vpop.permute.xlu0 %444
  %446 = vrot.lane.b32.xlu0 %v96, 24
  %v447 = vpop.permute.xlu0 %446
  %448 = vrot.lane.b32.xlu0 %v426, 24
  %v449 = vpop.permute.xlu0 %448
  %450 = vrot.lane.b32.xlu0 %v103, 24
  %v451 = vpop.permute.xlu0 %450
  %452 = vrot.lane.b32.xlu0 %v110, 24
  %v453 = vpop.permute.xlu0 %452
  %454 = vrot.lane.b32.xlu0 %v117, 24
  %v455 = vpop.permute.xlu0 %454
  %456 = vrot.lane.b32.xlu0 %v124, 24
  %v457 = vpop.permute.xlu0 %456
  %458 = vrot.lane.b32.xlu0 %v131, 24
  %v459 = vpop.permute.xlu0 %458
  %460 = vrot.lane.b32.xlu0 %v138, 24
  %v461 = vpop.permute.xlu0 %460
  %462 = vrot.lane.b32.xlu0 %v145, 24
  %v463 = vpop.permute.xlu0 %462
  %464 = vrot.lane.b32.xlu0 %v433, 24
  %v465 = vpop.permute.xlu0 %464
  %vm482 = vcmask 257216
  %vm483 = vmand %vm482, %vm162
  %v484 = vld [vmem:[#allocation2] sm:$0xf]
  %v485 = vsel %vm483, %v435, %v484
  %486 = vst [vmem:[#allocation2] sm:$0xf] %v485
  %v487 = vld [vmem:[#allocation2 + $0x4] sm:$0xf]
  %v488 = vsel %vm483, %v437, %v487
  %489 = vst [vmem:[#allocation2 + $0x4] sm:$0xf] %v488
  %v490 = vld [vmem:[#allocation2 + $0x8] sm:$0xf]
  %v491 = vsel %vm483, %v439, %v490
  %492 = vst [vmem:[#allocation2 + $0x8] sm:$0xf] %v491
  %v493 = vld [vmem:[#allocation2 + $0xc] sm:$0xf]
  %v494 = vsel %vm483, %v441, %v493
  %495 = vst [vmem:[#allocation2 + $0xc] sm:$0xf] %v494
  %v496 = vld [vmem:[#allocation2 + $0x10] sm:$0xf]
  %v497 = vsel %vm483, %v443, %v496
  %498 = vst [vmem:[#allocation2 + $0x10] sm:$0xf] %v497
  %v499 = vld [vmem:[#allocation2 + $0x14] sm:$0xf]
  %v500 = vsel %vm483, %v445, %v499
  %501 = vst [vmem:[#allocation2 + $0x14] sm:$0xf] %v500
  %v502 = vld [vmem:[#allocation2 + $0x18] sm:$0xf]
  %v503 = vsel %vm483, %v447, %v502
  %504 = vst [vmem:[#allocation2 + $0x18] sm:$0xf] %v503
  %v505 = vld [vmem:[#allocation2 + $0x1c] sm:$0xf]
  %v506 = vsel %vm483, %v449, %v505
  %507 = vst [vmem:[#allocation2 + $0x1c] sm:$0xf] %v506
  %v508 = vld [vmem:[#allocation2 + $0x20] sm:$0xf]
  %v509 = vsel %vm483, %v451, %v508
  %510 = vst [vmem:[#allocation2 + $0x20] sm:$0xf] %v509
  %v511 = vld [vmem:[#allocation2 + $0x24] sm:$0xf]
  %v512 = vsel %vm483, %v453, %v511
  %513 = vst [vmem:[#allocation2 + $0x24] sm:$0xf] %v512
  %v514 = vld [vmem:[#allocation2 + $0x28] sm:$0xf]
  %v515 = vsel %vm483, %v455, %v514
  %516 = vst [vmem:[#allocation2 + $0x28] sm:$0xf] %v515
  %v517 = vld [vmem:[#allocation2 + $0x2c] sm:$0xf]
  %v518 = vsel %vm483, %v457, %v517
  %519 = vst [vmem:[#allocation2 + $0x2c] sm:$0xf] %v518
  %v520 = vld [vmem:[#allocation2 + $0x30] sm:$0xf]
  %v521 = vsel %vm483, %v459, %v520
  %522 = vst [vmem:[#allocation2 + $0x30] sm:$0xf] %v521
  %v523 = vld [vmem:[#allocation2 + $0x34] sm:$0xf]
  %v524 = vsel %vm483, %v461, %v523
  %525 = vst [vmem:[#allocation2 + $0x34] sm:$0xf] %v524
  %v526 = vld [vmem:[#allocation2 + $0x38] sm:$0xf]
  %v527 = vsel %vm483, %v463, %v526
  %528 = vst [vmem:[#allocation2 + $0x38] sm:$0xf] %v527
  %v529 = vld [vmem:[#allocation2 + $0x3c] sm:$0xf]
  %v530 = vsel %vm483, %v465, %v529
  %531 = vst [vmem:[#allocation2 + $0x3c] sm:$0xf] %v530
  %534 = vrot.lane.b32.xlu0 %v15, 32
  %v535 = vpop.permute.xlu0 %534
  %536 = vrot.lane.b32.xlu0 %v16, 32
  %v537 = vpop.permute.xlu0 %536
  %538 = vrot.lane.b32.xlu0 %v17, 32
  %v539 = vpop.permute.xlu0 %538
  %540 = vrot.lane.b32.xlu0 %v18, 32
  %v541 = vpop.permute.xlu0 %540
  %542 = vrot.lane.b32.xlu0 %v19, 32
  %v543 = vpop.permute.xlu0 %542
  %544 = vrot.lane.b32.xlu0 %v20, 32
  %v545 = vpop.permute.xlu0 %544
  %546 = vrot.lane.b32.xlu0 %v21, 32
  %v547 = vpop.permute.xlu0 %546
  %548 = vrot.lane.b32.xlu0 %v22, 32
  %v549 = vpop.permute.xlu0 %548
  %550 = vrot.lane.b32.xlu0 %v23, 32
  %v551 = vpop.permute.xlu0 %550
  %552 = vrot.lane.b32.xlu0 %v24, 32
  %v553 = vpop.permute.xlu0 %552
  %554 = vrot.lane.b32.xlu0 %v25, 32
  %v555 = vpop.permute.xlu0 %554
  %556 = vrot.lane.b32.xlu0 %v26, 32
  %v557 = vpop.permute.xlu0 %556
  %558 = vrot.lane.b32.xlu0 %v27, 32
  %v559 = vpop.permute.xlu0 %558
  %560 = vrot.lane.b32.xlu0 %v28, 32
  %v561 = vpop.permute.xlu0 %560
  %562 = vrot.lane.b32.xlu0 %v29, 32
  %v563 = vpop.permute.xlu0 %562
  %564 = vrot.lane.b32.xlu0 %v30, 32
  %v565 = vpop.permute.xlu0 %564
  %vm582 = vcmask 322816
  %583 = vst.msk [vmem:[#allocation2] sm:$0xf] %vm582, %v535
  %584 = vst.msk [vmem:[#allocation2 + $0x4] sm:$0xf] %vm582, %v537
  %585 = vst.msk [vmem:[#allocation2 + $0x8] sm:$0xf] %vm582, %v539
  %586 = vst.msk [vmem:[#allocation2 + $0xc] sm:$0xf] %vm582, %v541
  %587 = vst.msk [vmem:[#allocation2 + $0x10] sm:$0xf] %vm582, %v543
  %588 = vst.msk [vmem:[#allocation2 + $0x14] sm:$0xf] %vm582, %v545
  %589 = vst.msk [vmem:[#allocation2 + $0x18] sm:$0xf] %vm582, %v547
  %590 = vst.msk [vmem:[#allocation2 + $0x1c] sm:$0xf] %vm582, %v549
  %591 = vst.msk [vmem:[#allocation2 + $0x20] sm:$0xf] %vm582, %v551
  %592 = vst.msk [vmem:[#allocation2 + $0x24] sm:$0xf] %vm582, %v553
  %593 = vst.msk [vmem:[#allocation2 + $0x28] sm:$0xf] %vm582, %v555
  %594 = vst.msk [vmem:[#allocation2 + $0x2c] sm:$0xf] %vm582, %v557
  %595 = vst.msk [vmem:[#allocation2 + $0x30] sm:$0xf] %vm582, %v559
  %596 = vst.msk [vmem:[#allocation2 + $0x34] sm:$0xf] %vm582, %v561
  %597 = vst.msk [vmem:[#allocation2 + $0x38] sm:$0xf] %vm582, %v563
  %598 = vst.msk [vmem:[#allocation2 + $0x3c] sm:$0xf] %vm582, %v565
  %v599 = vrot.slane %v421, 4
  %v600 = vrot.slane %v424, 5
  %v601 = vor.u32 %v599, %v600
  %v602 = vrot.slane %v601, 4
  %v603 = vrot.slane %v428, 4
  %v604 = vrot.slane %v431, 5
  %v605 = vor.u32 %v603, %v604
  %v606 = vrot.slane %v605, 4
  %607 = vrot.lane.b32.xlu0 %v280, 40
  %v608 = vpop.permute.xlu0 %607
  %609 = vrot.lane.b32.xlu0 %v284, 40
  %v610 = vpop.permute.xlu0 %609
  %611 = vrot.lane.b32.xlu0 %v288, 40
  %v612 = vpop.permute.xlu0 %611
  %613 = vrot.lane.b32.xlu0 %v292, 40
  %v614 = vpop.permute.xlu0 %613
  %615 = vrot.lane.b32.xlu0 %v296, 40
  %v616 = vpop.permute.xlu0 %615
  %617 = vrot.lane.b32.xlu0 %v300, 40
  %v618 = vpop.permute.xlu0 %617
  %619 = vrot.lane.b32.xlu0 %v304, 40
  %v620 = vpop.permute.xlu0 %619
  %621 = vrot.lane.b32.xlu0 %v602, 40
  %v622 = vpop.permute.xlu0 %621
  %623 = vrot.lane.b32.xlu0 %v308, 40
  %v624 = vpop.permute.xlu0 %623
  %625 = vrot.lane.b32.xlu0 %v312, 40
  %v626 = vpop.permute.xlu0 %625
  %627 = vrot.lane.b32.xlu0 %v316, 40
  %v628 = vpop.permute.xlu0 %627
  %629 = vrot.lane.b32.xlu0 %v320, 40
  %v630 = vpop.permute.xlu0 %629
  %631 = vrot.lane.b32.xlu0 %v324, 40
  %v632 = vpop.permute.xlu0 %631
  %633 = vrot.lane.b32.xlu0 %v328, 40
  %v634 = vpop.permute.xlu0 %633
  %635 = vrot.lane.b32.xlu0 %v332, 40
  %v636 = vpop.permute.xlu0 %635
  %637 = vrot.lane.b32.xlu0 %v606, 40
  %v638 = vpop.permute.xlu0 %637
  %vm655 = vcmask 388416
  %vm656 = vmand %vm655, %vm376
  %v657 = vld [vmem:[#allocation2] sm:$0xf]
  %v658 = vsel %vm656, %v608, %v657
  %659 = vst [vmem:[#allocation2] sm:$0xf] %v658
  %v660 = vld [vmem:[#allocation2 + $0x4] sm:$0xf]
  %v661 = vsel %vm656, %v610, %v660
  %662 = vst [vmem:[#allocation2 + $0x4] sm:$0xf] %v661
  %v663 = vld [vmem:[#allocation2 + $0x8] sm:$0xf]
  %v664 = vsel %vm656, %v612, %v663
  %665 = vst [vmem:[#allocation2 + $0x8] sm:$0xf] %v664
  %v666 = vld [vmem:[#allocation2 + $0xc] sm:$0xf]
  %v667 = vsel %vm656, %v614, %v666
  %668 = vst [vmem:[#allocation2 + $0xc] sm:$0xf] %v667
  %v669 = vld [vmem:[#allocation2 + $0x10] sm:$0xf]
  %v670 = vsel %vm656, %v616, %v669
  %671 = vst [vmem:[#allocation2 + $0x10] sm:$0xf] %v670
  %v672 = vld [vmem:[#allocation2 + $0x14] sm:$0xf]
  %v673 = vsel %vm656, %v618, %v672
  %674 = vst [vmem:[#allocation2 + $0x14] sm:$0xf] %v673
  %v675 = vld [vmem:[#allocation2 + $0x18] sm:$0xf]
  %v676 = vsel %vm656, %v620, %v675
  %677 = vst [vmem:[#allocation2 + $0x18] sm:$0xf] %v676
  %v678 = vld [vmem:[#allocation2 + $0x1c] sm:$0xf]
  %v679 = vsel %vm656, %v622, %v678
  %680 = vst [vmem:[#allocation2 + $0x1c] sm:$0xf] %v679
  %v681 = vld [vmem:[#allocation2 + $0x20] sm:$0xf]
  %v682 = vsel %vm656, %v624, %v681
  %683 = vst [vmem:[#allocation2 + $0x20] sm:$0xf] %v682
  %v684 = vld [vmem:[#allocation2 + $0x24] sm:$0xf]
  %v685 = vsel %vm656, %v626, %v684
  %686 = vst [vmem:[#allocation2 + $0x24] sm:$0xf] %v685
  %v687 = vld [vmem:[#allocation2 + $0x28] sm:$0xf]
  %v688 = vsel %vm656, %v628, %v687
  %689 = vst [vmem:[#allocation2 + $0x28] sm:$0xf] %v688
  %v690 = vld [vmem:[#allocation2 + $0x2c] sm:$0xf]
  %v691 = vsel %vm656, %v630, %v690
  %692 = vst [vmem:[#allocation2 + $0x2c] sm:$0xf] %v691
  %v693 = vld [vmem:[#allocation2 + $0x30] sm:$0xf]
  %v694 = vsel %vm656, %v632, %v693
  %695 = vst [vmem:[#allocation2 + $0x30] sm:$0xf] %v694
  %v696 = vld [vmem:[#allocation2 + $0x34] sm:$0xf]
  %v697 = vsel %vm656, %v634, %v696
  %698 = vst [vmem:[#allocation2 + $0x34] sm:$0xf] %v697
  %v699 = vld [vmem:[#allocation2 + $0x38] sm:$0xf]
  %v700 = vsel %vm656, %v636, %v699
  %701 = vst [vmem:[#allocation2 + $0x38] sm:$0xf] %v700
  %v702 = vld [vmem:[#allocation2 + $0x3c] sm:$0xf]
  %v703 = vsel %vm656, %v638, %v702
  %704 = vst [vmem:[#allocation2 + $0x3c] sm:$0xf] %v703
  %705 = vrot.lane.b32.xlu0 %v61, 48
  %v706 = vpop.permute.xlu0 %705
  %707 = vrot.lane.b32.xlu0 %v68, 48
  %v708 = vpop.permute.xlu0 %707
  %709 = vrot.lane.b32.xlu0 %v75, 48
  %v710 = vpop.permute.xlu0 %709
  %711 = vrot.lane.b32.xlu0 %v82, 48
  %v712 = vpop.permute.xlu0 %711
  %713 = vrot.lane.b32.xlu0 %v89, 48
  %v714 = vpop.permute.xlu0 %713
  %715 = vrot.lane.b32.xlu0 %v96, 48
  %v716 = vpop.permute.xlu0 %715
  %717 = vrot.lane.b32.xlu0 %v426, 48
  %v718 = vpop.permute.xlu0 %717
  %719 = vrot.lane.b32.xlu0 %v110, 48
  %v720 = vpop.permute.xlu0 %719
  %721 = vrot.lane.b32.xlu0 %v117, 48
  %v722 = vpop.permute.xlu0 %721
  %723 = vrot.lane.b32.xlu0 %v124, 48
  %v724 = vpop.permute.xlu0 %723
  %725 = vrot.lane.b32.xlu0 %v131, 48
  %v726 = vpop.permute.xlu0 %725
  %727 = vrot.lane.b32.xlu0 %v138, 48
  %v728 = vpop.permute.xlu0 %727
  %729 = vrot.lane.b32.xlu0 %v145, 48
  %v730 = vpop.permute.xlu0 %729
  %731 = vrot.lane.b32.xlu0 %v433, 48
  %v732 = vpop.permute.xlu0 %731
  %vm747 = vcmask 454016
  %vm748 = vmand %vm747, %vm162
  %v749 = vld [vmem:[#allocation2] sm:$0xf]
  %v750 = vsel %vm748, %v706, %v749
  %751 = vst [vmem:[#allocation2] sm:$0xf] %v750
  %v752 = vld [vmem:[#allocation2 + $0x4] sm:$0xf]
  %v753 = vsel %vm748, %v708, %v752
  %754 = vst [vmem:[#allocation2 + $0x4] sm:$0xf] %v753
  %v755 = vld [vmem:[#allocation2 + $0x8] sm:$0xf]
  %v756 = vsel %vm748, %v710, %v755
  %757 = vst [vmem:[#allocation2 + $0x8] sm:$0xf] %v756
  %v758 = vld [vmem:[#allocation2 + $0xc] sm:$0xf]
  %v759 = vsel %vm748, %v712, %v758
  %760 = vst [vmem:[#allocation2 + $0xc] sm:$0xf] %v759
  %v761 = vld [vmem:[#allocation2 + $0x10] sm:$0xf]
  %v762 = vsel %vm748, %v714, %v761
  %763 = vst [vmem:[#allocation2 + $0x10] sm:$0xf] %v762
  %v764 = vld [vmem:[#allocation2 + $0x14] sm:$0xf]
  %v765 = vsel %vm748, %v716, %v764
  %766 = vst [vmem:[#allocation2 + $0x14] sm:$0xf] %v765
  %v767 = vld [vmem:[#allocation2 + $0x18] sm:$0xf]
  %v768 = vsel %vm748, %v718, %v767
  %769 = vst [vmem:[#allocation2 + $0x18] sm:$0xf] %v768
  %v770 = vld [vmem:[#allocation2 + $0x20] sm:$0xf]
  %v771 = vsel %vm748, %v720, %v770
  %772 = vst [vmem:[#allocation2 + $0x20] sm:$0xf] %v771
  %v773 = vld [vmem:[#allocation2 + $0x24] sm:$0xf]
  %v774 = vsel %vm748, %v722, %v773
  %775 = vst [vmem:[#allocation2 + $0x24] sm:$0xf] %v774
  %v776 = vld [vmem:[#allocation2 + $0x28] sm:$0xf]
  %v777 = vsel %vm748, %v724, %v776
  %778 = vst [vmem:[#allocation2 + $0x28] sm:$0xf] %v777
  %v779 = vld [vmem:[#allocation2 + $0x2c] sm:$0xf]
  %v780 = vsel %vm748, %v726, %v779
  %781 = vst [vmem:[#allocation2 + $0x2c] sm:$0xf] %v780
  %v782 = vld [vmem:[#allocation2 + $0x30] sm:$0xf]
  %v783 = vsel %vm748, %v728, %v782
  %784 = vst [vmem:[#allocation2 + $0x30] sm:$0xf] %v783
  %v785 = vld [vmem:[#allocation2 + $0x34] sm:$0xf]
  %v786 = vsel %vm748, %v730, %v785
  %787 = vst [vmem:[#allocation2 + $0x34] sm:$0xf] %v786
  %v788 = vld [vmem:[#allocation2 + $0x38] sm:$0xf]
  %v789 = vsel %vm748, %v732, %v788
  %790 = vst [vmem:[#allocation2 + $0x38] sm:$0xf] %v789
  %791 = vrot.lane.b32.xlu0 %v16, 56
  %v792 = vpop.permute.xlu0 %791
  %793 = vrot.lane.b32.xlu0 %v17, 56
  %v794 = vpop.permute.xlu0 %793
  %795 = vrot.lane.b32.xlu0 %v18, 56
  %v796 = vpop.permute.xlu0 %795
  %797 = vrot.lane.b32.xlu0 %v19, 56
  %v798 = vpop.permute.xlu0 %797
  %799 = vrot.lane.b32.xlu0 %v20, 56
  %v800 = vpop.permute.xlu0 %799
  %801 = vrot.lane.b32.xlu0 %v21, 56
  %v802 = vpop.permute.xlu0 %801
  %803 = vrot.lane.b32.xlu0 %v22, 56
  %v804 = vpop.permute.xlu0 %803
  %805 = vrot.lane.b32.xlu0 %v24, 56
  %v806 = vpop.permute.xlu0 %805
  %807 = vrot.lane.b32.xlu0 %v25, 56
  %v808 = vpop.permute.xlu0 %807
  %809 = vrot.lane.b32.xlu0 %v26, 56
  %v810 = vpop.permute.xlu0 %809
  %811 = vrot.lane.b32.xlu0 %v27, 56
  %v812 = vpop.permute.xlu0 %811
  %813 = vrot.lane.b32.xlu0 %v28, 56
  %v814 = vpop.permute.xlu0 %813
  %815 = vrot.lane.b32.xlu0 %v29, 56
  %v816 = vpop.permute.xlu0 %815
  %817 = vrot.lane.b32.xlu0 %v30, 56
  %v818 = vpop.permute.xlu0 %817
  %vm833 = vcmask 519616
  %834 = vst.msk [vmem:[#allocation2] sm:$0xf] %vm833, %v792
  %835 = vst.msk [vmem:[#allocation2 + $0x4] sm:$0xf] %vm833, %v794
  %836 = vst.msk [vmem:[#allocation2 + $0x8] sm:$0xf] %vm833, %v796
  %837 = vst.msk [vmem:[#allocation2 + $0xc] sm:$0xf] %vm833, %v798
  %838 = vst.msk [vmem:[#allocation2 + $0x10] sm:$0xf] %vm833, %v800
  %839 = vst.msk [vmem:[#allocation2 + $0x14] sm:$0xf] %vm833, %v802
  %840 = vst.msk [vmem:[#allocation2 + $0x18] sm:$0xf] %vm833, %v804
  %841 = vst.msk [vmem:[#allocation2 + $0x20] sm:$0xf] %vm833, %v806
  %842 = vst.msk [vmem:[#allocation2 + $0x24] sm:$0xf] %vm833, %v808
  %843 = vst.msk [vmem:[#allocation2 + $0x28] sm:$0xf] %vm833, %v810
  %844 = vst.msk [vmem:[#allocation2 + $0x2c] sm:$0xf] %vm833, %v812
  %845 = vst.msk [vmem:[#allocation2 + $0x30] sm:$0xf] %vm833, %v814
  %846 = vst.msk [vmem:[#allocation2 + $0x34] sm:$0xf] %vm833, %v816
  %847 = vst.msk [vmem:[#allocation2 + $0x38] sm:$0xf] %vm833, %v818
  %848 = vrot.lane.b32.xlu0 %v284, 64
  %v849 = vpop.permute.xlu0 %848
  %850 = vrot.lane.b32.xlu0 %v288, 64
  %v851 = vpop.permute.xlu0 %850
  %852 = vrot.lane.b32.xlu0 %v292, 64
  %v853 = vpop.permute.xlu0 %852
  %854 = vrot.lane.b32.xlu0 %v296, 64
  %v855 = vpop.permute.xlu0 %854
  %856 = vrot.lane.b32.xlu0 %v300, 64
  %v857 = vpop.permute.xlu0 %856
  %858 = vrot.lane.b32.xlu0 %v304, 64
  %v859 = vpop.permute.xlu0 %858
  %860 = vrot.lane.b32.xlu0 %v602, 64
  %v861 = vpop.permute.xlu0 %860
  %862 = vrot.lane.b32.xlu0 %v312, 64
  %v863 = vpop.permute.xlu0 %862
  %864 = vrot.lane.b32.xlu0 %v316, 64
  %v865 = vpop.permute.xlu0 %864
  %866 = vrot.lane.b32.xlu0 %v320, 64
  %v867 = vpop.permute.xlu0 %866
  %868 = vrot.lane.b32.xlu0 %v324, 64
  %v869 = vpop.permute.xlu0 %868
  %870 = vrot.lane.b32.xlu0 %v328, 64
  %v871 = vpop.permute.xlu0 %870
  %872 = vrot.lane.b32.xlu0 %v332, 64
  %v873 = vpop.permute.xlu0 %872
  %874 = vrot.lane.b32.xlu0 %v606, 64
  %v875 = vpop.permute.xlu0 %874
  %vm890 = vcmask 585216
  %vm891 = vmand %vm890, %vm376
  %v892 = vld [vmem:[#allocation2] sm:$0xf]
  %v893 = vsel %vm891, %v849, %v892
  %894 = vst [vmem:[#allocation2] sm:$0xf] %v893
  %v895 = vld [vmem:[#allocation2 + $0x4] sm:$0xf]
  %v896 = vsel %vm891, %v851, %v895
  %897 = vst [vmem:[#allocation2 + $0x4] sm:$0xf] %v896
  %v898 = vld [vmem:[#allocation2 + $0x8] sm:$0xf]
  %v899 = vsel %vm891, %v853, %v898
  %900 = vst [vmem:[#allocation2 + $0x8] sm:$0xf] %v899
  %v901 = vld [vmem:[#allocation2 + $0xc] sm:$0xf]
  %v902 = vsel %vm891, %v855, %v901
  %903 = vst [vmem:[#allocation2 + $0xc] sm:$0xf] %v902
  %v904 = vld [vmem:[#allocation2 + $0x10] sm:$0xf]
  %v905 = vsel %vm891, %v857, %v904
  %906 = vst [vmem:[#allocation2 + $0x10] sm:$0xf] %v905
  %v907 = vld [vmem:[#allocation2 + $0x14] sm:$0xf]
  %v908 = vsel %vm891, %v859, %v907
  %909 = vst [vmem:[#allocation2 + $0x14] sm:$0xf] %v908
  %v910 = vld [vmem:[#allocation2 + $0x18] sm:$0xf]
  %v911 = vsel %vm891, %v861, %v910
  %912 = vst [vmem:[#allocation2 + $0x18] sm:$0xf] %v911
  %v913 = vld [vmem:[#allocation2 + $0x20] sm:$0xf]
  %v914 = vsel %vm891, %v863, %v913
  %915 = vst [vmem:[#allocation2 + $0x20] sm:$0xf] %v914
  %v916 = vld [vmem:[#allocation2 + $0x24] sm:$0xf]
  %v917 = vsel %vm891, %v865, %v916
  %918 = vst [vmem:[#allocation2 + $0x24] sm:$0xf] %v917
  %v919 = vld [vmem:[#allocation2 + $0x28] sm:$0xf]
  %v920 = vsel %vm891, %v867, %v919
  %921 = vst [vmem:[#allocation2 + $0x28] sm:$0xf] %v920
  %v922 = vld [vmem:[#allocation2 + $0x2c] sm:$0xf]
  %v923 = vsel %vm891, %v869, %v922
  %924 = vst [vmem:[#allocation2 + $0x2c] sm:$0xf] %v923
  %v925 = vld [vmem:[#allocation2 + $0x30] sm:$0xf]
  %v926 = vsel %vm891, %v871, %v925
  %927 = vst [vmem:[#allocation2 + $0x30] sm:$0xf] %v926
  %v928 = vld [vmem:[#allocation2 + $0x34] sm:$0xf]
  %v929 = vsel %vm891, %v873, %v928
  %930 = vst [vmem:[#allocation2 + $0x34] sm:$0xf] %v929
  %v931 = vld [vmem:[#allocation2 + $0x38] sm:$0xf]
  %v932 = vsel %vm891, %v875, %v931
  %933 = vst [vmem:[#allocation2 + $0x38] sm:$0xf] %v932
  %v934 = vld [vmem:[#allocation2] sm:$0xf]
  %v935 = vld [vmem:[#allocation2 + $0x4] sm:$0xf]
  %v936 = vld [vmem:[#allocation2 + $0x8] sm:$0xf]
  %v937 = vld [vmem:[#allocation2 + $0xc] sm:$0xf]
  %v938 = vld [vmem:[#allocation2 + $0x10] sm:$0xf]
  %v939 = vld [vmem:[#allocation2 + $0x14] sm:$0xf]
  %v940 = vld [vmem:[#allocation2 + $0x18] sm:$0xf]
  %v941 = vld [vmem:[#allocation2 + $0x1c] sm:$0xf]
  %v942 = vld [vmem:[#allocation2 + $0x20] sm:$0xf]
  %v943 = vld [vmem:[#allocation2 + $0x24] sm:$0xf]
  %v944 = vld [vmem:[#allocation2 + $0x28] sm:$0xf]
  %v945 = vld [vmem:[#allocation2 + $0x2c] sm:$0xf]
  %v946 = vld [vmem:[#allocation2 + $0x30] sm:$0xf]
  %v947 = vld [vmem:[#allocation2 + $0x34] sm:$0xf]
  %v948 = vld [vmem:[#allocation2 + $0x38] sm:$0xf]
  %v949 = vld [vmem:[#allocation2 + $0x3c] sm:$0xf]
  %v950 = vld [vmem:[%s1] sm:$0xf]
  %v951 = vld [vmem:[%s1 + $0x4] sm:$0xf]
  %v952 = vld [vmem:[%s1 + $0x8] sm:$0xf]
  %v953 = vld [vmem:[%s1 + $0xc] sm:$0xf]
  %v954 = vld [vmem:[%s1 + $0x10] sm:$0xf]
  %v955 = vld [vmem:[%s1 + $0x14] sm:$0xf]
  %v956 = vld [vmem:[%s1 + $0x18] sm:$0xf]
  %v957 = vld [vmem:[%s1 + $0x1c] sm:$0xf]
  %v958 = vld [vmem:[%s1 + $0x20] sm:$0xf]
  %v959 = vld [vmem:[%s2] sm:$0xf]
  %v960 = vld [vmem:[%s2 + $0x4] sm:$0xf]
  %v961 = vld [vmem:[%s2 + $0x8] sm:$0xf]
  %v962 = vld [vmem:[%s2 + $0xc] sm:$0xf]
  %v963 = vld [vmem:[%s2 + $0x10] sm:$0xf]
  %v964 = vld [vmem:[%s2 + $0x14] sm:$0xf]
  %v965 = vld [vmem:[%s2 + $0x18] sm:$0xf]
  %v966 = vld [vmem:[%s2 + $0x1c] sm:$0xf]
  %v967 = vld [vmem:[%s2 + $0x20] sm:$0xf]
  %v968 = vld [vmem:[%s2 + $0x24] sm:$0xf]
  %v969 = vld [vmem:[%s2 + $0x28] sm:$0xf]
  %v970 = vld [vmem:[%s2 + $0x2c] sm:$0xf]
  %v971 = vld [vmem:[%s2 + $0x30] sm:$0xf]
  %v972 = vld [vmem:[%s2 + $0x34] sm:$0xf]
  %v973 = vld [vmem:[%s2 + $0x38] sm:$0xf]
  %v974 = vld [vmem:[%s2 + $0x3c] sm:$0xf]
  %v975 = vunpack.c.l.bf16 %v959
  %v976 = vunpack.c.l.bf16 %v960
  %v977 = vunpack.c.l.bf16 %v961
  %v978 = vunpack.c.l.bf16 %v962
  %v979 = vunpack.c.l.bf16 %v963
  %v980 = vunpack.c.l.bf16 %v964
  %v981 = vunpack.c.l.bf16 %v965
  %v982 = vunpack.c.l.bf16 %v966
  %v983 = vunpack.c.l.bf16 %v967
  %v984 = vunpack.c.l.bf16 %v968
  %v985 = vunpack.c.l.bf16 %v969
  %v986 = vunpack.c.l.bf16 %v970
  %v987 = vunpack.c.l.bf16 %v971
  %v988 = vunpack.c.l.bf16 %v972
  %v989 = vunpack.c.l.bf16 %v973
  %v990 = vunpack.c.l.bf16 %v974
  %v1007 = vunpack.c.l.b16 %v934
  %v1008 = vunpack.c.l.b16 %v935
  %v1009 = vunpack.c.l.b16 %v936
  %v1010 = vunpack.c.l.b16 %v937
  %v1011 = vunpack.c.l.b16 %v938
  %v1012 = vunpack.c.l.b16 %v939
  %v1013 = vunpack.c.l.b16 %v940
  %v1014 = vunpack.c.l.b16 %v941
  %v1015 = vunpack.c.l.b16 %v942
  %v1016 = vunpack.c.l.b16 %v943
  %v1017 = vunpack.c.l.b16 %v944
  %v1018 = vunpack.c.l.b16 %v945
  %v1019 = vunpack.c.l.b16 %v946
  %v1020 = vunpack.c.l.b16 %v947
  %v1021 = vunpack.c.l.b16 %v948
  %v1022 = vunpack.c.l.b16 %v949
  %v1023 = vpack.c.b16 %v1008, %v1007
  %v1024 = vpack.c.b16 %v1010, %v1009
  %v1025 = vpack.c.b16 %v1012, %v1011
  %v1026 = vpack.c.b16 %v1014, %v1013
  %v1027 = vpack.c.b16 %v1016, %v1015
  %v1028 = vpack.c.b16 %v1018, %v1017
  %v1029 = vpack.c.b16 %v1020, %v1019
  %v1030 = vpack.c.b16 %v1022, %v1021
  %v1040 = vunpack.c.l.b16 %v950
  %v1041 = vunpack.c.l.b16 %v951
  %v1042 = vunpack.c.l.b16 %v952
  %v1043 = vunpack.c.l.b16 %v953
  %v1044 = vunpack.c.l.b16 %v954
  %v1045 = vunpack.c.l.b16 %v955
  %v1046 = vunpack.c.l.b16 %v956
  %v1047 = vunpack.c.l.b16 %v957
  %v1048 = vunpack.c.l.b16 %v958
  %v1049 = vpack.c.b16 %v1041, %v1040
  %v1050 = vpack.c.b16 %v1043, %v1042
  %v1051 = vpack.c.b16 %v1045, %v1044
  %v1052 = vpack.c.b16 %v1047, %v1046
  %v1053 = vpack.c.b16 %v1048, %v1048
  %vm1058 = vcmask 588800
  %v1060 = vsel %vm1058, %v1023, 0
  %v1063 = vsel %vm1058, %v1024, 0
  %v1066 = vsel %vm1058, %v1025, 0
  %v1069 = vsel %vm1058, %v1026, 0
  %v1072 = vsel %vm1058, %v1027, 0
  %v1075 = vsel %vm1058, %v1028, 0
  %v1078 = vsel %vm1058, %v1029, 0
  %v1081 = vsel %vm1058, %v1030, 0
  %vm1083 = vcmask 1043456
  %v1085 = vsel %vm1083, %v1053, 0
  %1087 = vmatpush.bf16.msra.mxu0 0
  %1088 = vmatpush.bf16.msra.mxu0 0
  %1089 = vmatpush.bf16.msra.mxu0 0
  %1090 = vmatpush.bf16.msra.mxu0 %v1085
  %1091 = vmatpush.bf16.msra.mxu0 %v1052
  %1092 = vmatpush.bf16.msra.mxu0 %v1051
  %1093 = vmatpush.bf16.msra.mxu0 %v1050
  %1094 = vmatpush.bf16.msra.mxu0 %v1049
  %1095 = vmatmul.bf16.gmra.mxu0 %v1060
  %v1096 = vpop.f32.mrf.mxu0
  %v1097 = vadd.f32 %v975, %v1096
  %v1098 = vpop.f32.mrf.mxu0
  %v1099 = vadd.f32 %v976, %v1098
  %1100 = vmatmul.bf16.gmra.mxu0 %v1063
  %v1101 = vpop.f32.mrf.mxu0
  %v1102 = vadd.f32 %v977, %v1101
  %v1103 = vpop.f32.mrf.mxu0
  %v1104 = vadd.f32 %v978, %v1103
  %1105 = vmatmul.bf16.gmra.mxu0 %v1066
  %v1106 = vpop.f32.mrf.mxu0
  %v1107 = vadd.f32 %v979, %v1106
  %v1108 = vpop.f32.mrf.mxu0
  %v1109 = vadd.f32 %v980, %v1108
  %1110 = vmatmul.bf16.gmra.mxu0 %v1069
  %v1111 = vpop.f32.mrf.mxu0
  %v1112 = vadd.f32 %v981, %v1111
  %v1113 = vpop.f32.mrf.mxu0
  %v1114 = vadd.f32 %v982, %v1113
  %1115 = vmatmul.bf16.gmra.mxu0 %v1072
  %v1116 = vpop.f32.mrf.mxu0
  %v1117 = vadd.f32 %v983, %v1116
  %v1118 = vpop.f32.mrf.mxu0
  %v1119 = vadd.f32 %v984, %v1118
  %1120 = vmatmul.bf16.gmra.mxu0 %v1075
  %v1121 = vpop.f32.mrf.mxu0
  %v1122 = vadd.f32 %v985, %v1121
  %v1123 = vpop.f32.mrf.mxu0
  %v1124 = vadd.f32 %v986, %v1123
  %1125 = vmatmul.bf16.gmra.mxu0 %v1078
  %v1126 = vpop.f32.mrf.mxu0
  %v1127 = vadd.f32 %v987, %v1126
  %v1128 = vpop.f32.mrf.mxu0
  %v1129 = vadd.f32 %v988, %v1128
  %1130 = vmatmul.bf16.gmra.mxu0 %v1081
  %v1131 = vpop.f32.mrf.mxu0
  %v1132 = vadd.f32 %v989, %v1131
  %v1133 = vpop.f32.mrf.mxu0
  %v1134 = vadd.f32 %v990, %v1133
  %1135 = vdwg.mxu0
  %vm1136 = vcmask 64512
  %1137 = vst.msk [vmem:[%s3] sm:$0xff] %vm1136, %v1097
  %1138 = vst.msk [vmem:[%s3 + $0x8] sm:$0xff] %vm1136, %v1099
  %1139 = vst.msk [vmem:[%s3 + $0x10] sm:$0xff] %vm1136, %v1102
  %1140 = vst.msk [vmem:[%s3 + $0x18] sm:$0xff] %vm1136, %v1104
  %1141 = vst.msk [vmem:[%s3 + $0x20] sm:$0xff] %vm1136, %v1107
  %1142 = vst.msk [vmem:[%s3 + $0x28] sm:$0xff] %vm1136, %v1109
  %1143 = vst.msk [vmem:[%s3 + $0x30] sm:$0xff] %vm1136, %v1112
  %1144 = vst.msk [vmem:[%s3 + $0x38] sm:$0xff] %vm1136, %v1114
  %1145 = vst.msk [vmem:[%s3 + $0x40] sm:$0xff] %vm1136, %v1117
  %1146 = vst.msk [vmem:[%s3 + $0x48] sm:$0xff] %vm1136, %v1119
  %1147 = vst.msk [vmem:[%s3 + $0x50] sm:$0xff] %vm1136, %v1122
  %1148 = vst.msk [vmem:[%s3 + $0x58] sm:$0xff] %vm1136, %v1124
  %1149 = vst.msk [vmem:[%s3 + $0x60] sm:$0xff] %vm1136, %v1127
  %1150 = vst.msk [vmem:[%s3 + $0x68] sm:$0xff] %vm1136, %v1129
  %1151 = vst.msk [vmem:[%s3 + $0x70] sm:$0xff] %vm1136, %v1132
  %1152 = vst.msk [vmem:[%s3 + $0x78] sm:$0xff] %vm1136, %v1134
  // Predicated region
  $region14: #{_lambda_.7} parent=0 // pred_check
    _
  $region15: #{_lambda_.7} parent=0 // pred_check_branch
    %1154 = sbr.rel (0) target = $region17
  $region16: #{_lambda_.7} parent=0 // pred_region
    _
  $region17: #{_lambda_.7} parent=0 // pred_fallthru
    _
  // Predicated region
  $region18: #{_lambda_.7} parent=0 // pred_check
    _
  $region19: #{_lambda_.7} parent=0 // pred_check_branch
    %1156 = sbr.rel (0) target = $region21
  $region20: #{_lambda_.7} parent=0 // pred_region
    _
  $region21: #{_lambda_.7} parent=0 // pred_fallthru
    _

</llo_original>
